<compile_context>
chip_gen: v7x
topology: tpu7x:2x2x1
jax: 0.10.0
libtpu: 0.0.40
codegen_flags: <defaults>
</compile_context>

<pallas_src>
import functools

import numpy as np
import jax
import jax.numpy as jnp
from jax.experimental import pallas as pl
from jax.experimental.pallas import tpu as pltpu

IN_SIZE = 32     # spatial size the architecture implies
IN_CH = 3
TN = 8           # batch samples per grid step


# ---------------------------------------------------------------------------
# Pallas kernel: the whole normalize + 5-conv network for one batch tile.
# ---------------------------------------------------------------------------
def convnet_kernel(
    x_ref,                      # (TN*32, 32*3)
    nmat_ref,                   # (TN*32, TN*32)  per-sample sum broadcaster
    r1_ref, m1_ref, b1_ref,     # conv1 folded constants
    r2_ref, m2_ref, b2_ref,     # conv2 (BN scale folded into m2)
    r3_ref, m3_ref, b3_ref,     # conv3
    r4_ref, m4_ref, b4_ref,     # conv4
    r5_ref, m5_ref, b5_ref,     # conv5 (output channels padded to 128 lanes)
    o_ref,                      # (TN, 128)
):
    f32 = jnp.float32
    x = x_ref[...]

    # per-sample L2 normalization: x / sqrt(sum over (C,H,W) of x^2)
    xsq = x * x
    tot = jnp.dot(nmat_ref[...], xsq, preferred_element_type=f32)   # per-sample col sums
    inv_norm = jax.lax.rsqrt(jnp.sum(tot, axis=1, keepdims=True))   # (TN*32, 1)
    h = x * inv_norm

    def conv_layer(h, r_ref, m_ref, b_ref):
        # h: (TN*Hi, Wi*Ci); r: (kh*TN*Ho, TN*Hi); m: (kh, Wi*Ci, Wo*Co); b: (1, Wo*Co)
        kh = m_ref.shape[0]
        rows = r_ref.shape[0] // kh
        g = jnp.dot(r_ref[...], h, preferred_element_type=f32)      # all row taps at once
        acc = jnp.dot(g[0:rows, :], m_ref[0], preferred_element_type=f32)
        for t in range(1, kh):
            acc = acc + jnp.dot(g[t * rows:(t + 1) * rows, :], m_ref[t],
                                preferred_element_type=f32)
        return acc + b_ref[...]

    h = conv_layer(h, r1_ref, m1_ref, b1_ref)                       # conv1 (no BN/ReLU)
    h = conv_layer(jnp.maximum(h, 0.0), r2_ref, m2_ref, b2_ref)     # BN+ReLU+conv2
    h = conv_layer(jnp.maximum(h, 0.0), r3_ref, m3_ref, b3_ref)     # BN+ReLU+conv3
    h = conv_layer(jnp.maximum(h, 0.0), r4_ref, m4_ref, b4_ref)     # BN+ReLU+conv4
    h = conv_layer(h, r5_ref, m5_ref, b5_ref)                       # conv5 (no BN/ReLU)
    o_ref[...] = h


# ---------------------------------------------------------------------------
# One-time constant folding of the conv weights (+ eval-mode BN) into the
# kernel operands (pure layout / constant prep, not per-call compute).
# ---------------------------------------------------------------------------
def _sel(n_out, n_in, stride, offset):
    """0/1 selection matrix: S[o, i] = 1 iff i == stride*o + offset (in range)."""
    s = np.zeros((n_out, n_in), dtype=np.float32)
    for o in range(n_out):
        i = stride * o + offset
        if 0 <= i < n_in:
            s[o, i] = 1.0
    return s


def _fold_conv(w, b, hi, wi, stride, pad, pre_scale, tn, co_pad=None):
    """Fold one conv (+ preceding eval-BN scale) into (Rcat, M, bias_row)."""
    kh, kw, ci, co = w.shape
    ho = (hi + 2 * pad - kh) // stride + 1
    wo = (wi + 2 * pad - kw) // stride + 1
    w = np.asarray(w, np.float32) * pre_scale
    b = np.asarray(b, np.float32)
    if co_pad is not None and co_pad > co:
        w = np.concatenate([w, np.zeros((kh, kw, ci, co_pad - co), np.float32)], axis=-1)
        b = np.concatenate([b, np.zeros((co_pad - co,), np.float32)])
    co_p = w.shape[-1]

    eye_tn = np.eye(tn, dtype=np.float32)
    # Row gather: rows = (dy, sample, oy); picks input row stride*oy + dy - pad (0 if OOB).
    rcat = np.concatenate(
        [np.kron(eye_tn, _sel(ho, hi, stride, dy - pad)) for dy in range(kh)],
        axis=0).astype(np.float32)                                   # (kh*tn*ho, tn*hi)

    # Column gather + channel mix: M[dy][(j,ci),(ox,co)] = sum_dx C_dx[ox,j] * w[dy,dx,ci,co]
    cmat = np.stack([_sel(wo, wi, stride, dx - pad) for dx in range(kw)], axis=0)
    m = np.einsum('doj,ydic->yjioc', cmat, w)                        # (kh, wi, ci, wo, co_p)
    m = np.ascontiguousarray(m.reshape(kh, wi * ci, wo * co_p)).astype(np.float32)

    brow = np.tile(b, wo)[None, :].astype(np.float32)                # (1, wo*co_p)
    return rcat, m, brow, ho


def prepare_constants(params, num_class, tn=TN, in_size=IN_SIZE, eps=1e-5):
    bn_scale = 1.0 / np.sqrt(1.0 + eps)          # eval BN: mean=0, var=1, gamma=1, beta=0
    out_pad = ((num_class + 127) // 128) * 128   # lane-dense output width
    cfg = [
        ('w1', 'b1', 2, 1, 1.0,      None),      # conv1: no BN
        ('w2', 'b2', 2, 1, bn_scale, None),      # conv2: BN folded in
        ('w3', 'b3', 2, 1, bn_scale, None),
        ('w4', 'b4', 2, 1, bn_scale, None),
        ('w5', 'b5', 1, 0, 1.0,      out_pad),   # conv5: no BN, padded out channels
    ]
    consts = [np.kron(np.eye(tn, dtype=np.float32),
                      np.ones((in_size, in_size), np.float32))]      # norm broadcaster
    hi = in_size
    for wname, bname, stride, pad, scale, co_pad in cfg:
        r, m, brow, hi = _fold_conv(np.asarray(params[wname]), np.asarray(params[bname]),
                                    hi, hi, stride, pad, scale, tn, co_pad)
        consts += [r, m, brow]
    return [jnp.asarray(c) for c in consts]


# ---------------------------------------------------------------------------
# Wrapper: batch-tiled pallas_call.
# ---------------------------------------------------------------------------
def net_simple_conv_norm_1x(x_nchw, consts, num_class):
    n = x_nchw.shape[0]
    # layout plumbing: NCHW -> (N*H, W*C)   (rows = (sample, y), cols = (x, channel))
    xl = jnp.transpose(x_nchw.astype(jnp.float32), (0, 2, 3, 1))
    xl = xl.reshape(n, IN_SIZE, IN_SIZE * IN_CH)
    n_pad = pl.cdiv(n, TN) * TN
    if n_pad != n:
        # pad with ones (not zeros) so padded samples have a non-zero L2 norm (no NaNs)
        xl = jnp.concatenate(
            [xl, jnp.ones((n_pad - n, IN_SIZE, IN_SIZE * IN_CH), jnp.float32)], axis=0)
    xl = xl.reshape(n_pad * IN_SIZE, IN_SIZE * IN_CH)

    out_width = consts[-1].shape[-1]             # num_class padded to a multiple of 128

    def const_spec(a):
        nd = a.ndim
        return pl.BlockSpec(a.shape, lambda i: (0,) * nd)     # resident across the grid

    in_specs = [pl.BlockSpec((TN * IN_SIZE, IN_SIZE * IN_CH), lambda i: (i, 0))]
    in_specs += [const_spec(a) for a in consts]

    out = pl.pallas_call(
        convnet_kernel,
        out_shape=jax.ShapeDtypeStruct((n_pad, out_width), jnp.float32),
        grid=(n_pad // TN,),
        in_specs=in_specs,
        out_specs=pl.BlockSpec((TN, out_width), lambda i: (i, 0)),
        compiler_params=pltpu.CompilerParams(
            dimension_semantics=("parallel",)),
    )(xl, *consts)
    return out[:n, :num_class]


# ---------------------------------------------------------------------------
# Deterministic init (mirrors init_convnet 'const_norm') and a plain-JAX reference.
# ---------------------------------------------------------------------------
def init_params(key, hidden_size, num_class, init_scale=1.0):
    h = hidden_size
    dims = [(3, h, 3), (h, 2 * h, 3), (2 * h, 4 * h, 3), (4 * h, 8 * h, 3),
            (8 * h, num_class, 2)]
    params = {}
    keys = jax.random.split(key, 2 * len(dims))
    for idx, (ci, co, k) in enumerate(dims):
        w = 0.05 * jax.random.normal(keys[2 * idx], (k, k, ci, co), dtype=jnp.float32)
        w = init_scale * w / jnp.sqrt(jnp.sum(w * w))        # Frobenius norm == init_scale
        bound = 1.0 / np.sqrt(ci * k * k)                    # PyTorch default conv bias init
        b = jax.random.uniform(keys[2 * idx + 1], (co,), jnp.float32, -bound, bound)
        params[f'w{idx + 1}'] = w
        params[f'b{idx + 1}'] = b
    return params


def reference_forward(x_nchw, params, eps=1e-5):
    x = x_nchw.astype(jnp.float32)
    x = x / jnp.sqrt(jnp.sum(x * x, axis=(1, 2, 3), keepdims=True))
    bn = 1.0 / jnp.sqrt(1.0 + eps)

    def conv(h, w, b, stride, pad):
        y = jax.lax.conv_general_dilated(
            h, w, (stride, stride), [(pad, pad), (pad, pad)],
            dimension_numbers=('NCHW', 'HWIO', 'NCHW'),
            precision=jax.lax.Precision.HIGHEST)
        return y + b[None, :, None, None]

    h = conv(x, params['w1'], params['b1'], 2, 1)
    h = conv(jnp.maximum(h * bn, 0.0), params['w2'], params['b2'], 2, 1)
    h = conv(jnp.maximum(h * bn, 0.0), params['w3'], params['b3'], 2, 1)
    h = conv(jnp.maximum(h * bn, 0.0), params['w4'], params['b4'], 2, 1)
    h = conv(h, params['w5'], params['b5'], 1, 0)
    return h[:, :, 0, 0]


if __name__ == "__main__":
    HIDDEN = 16
    NUM_CLASS = 10
    N = 2

    key = jax.random.PRNGKey(0)
    kx, kp = jax.random.split(key)
    # NCHW, 3 channels, 32x32 spatial (the 4 stride-2 convs + final 2x2 conv imply 32x32)
    x = jax.random.normal(kx, (N, 3, 32, 32), dtype=jnp.float32)
    params = init_params(kp, HIDDEN, NUM_CLASS)

    consts = prepare_constants(params, NUM_CLASS)
    fwd = jax.jit(functools.partial(net_simple_conv_norm_1x,
                                    consts=consts, num_class=NUM_CLASS))
    out = jax.block_until_ready(fwd(x))

    ref = reference_forward(x, params)
    assert out.shape == (N, NUM_CLASS)
    assert jnp.allclose(out, ref, atol=2e-3, rtol=2e-3), "mismatch vs JAX reference"

    print("KERNEL_OK")
</pallas_src>

<mosaic_0001>
module attributes {stable_mosaic.version = 11 : i64} {
  func.func @convnet_kernel(%arg0: i32, %arg1: memref<256x96xf32, #tpu.memory_space<vmem>>, %arg2: memref<256x256xf32, #tpu.memory_space<vmem>>, %arg3: memref<384x256xf32, #tpu.memory_space<vmem>>, %arg4: memref<3x96x256xf32, #tpu.memory_space<vmem>>, %arg5: memref<1x256xf32, #tpu.memory_space<vmem>>, %arg6: memref<192x128xf32, #tpu.memory_space<vmem>>, %arg7: memref<3x256x256xf32, #tpu.memory_space<vmem>>, %arg8: memref<1x256xf32, #tpu.memory_space<vmem>>, %arg9: memref<96x64xf32, #tpu.memory_space<vmem>>, %arg10: memref<3x256x256xf32, #tpu.memory_space<vmem>>, %arg11: memref<1x256xf32, #tpu.memory_space<vmem>>, %arg12: memref<48x32xf32, #tpu.memory_space<vmem>>, %arg13: memref<3x256x256xf32, #tpu.memory_space<vmem>>, %arg14: memref<1x256xf32, #tpu.memory_space<vmem>>, %arg15: memref<16x16xf32, #tpu.memory_space<vmem>>, %arg16: memref<2x256x128xf32, #tpu.memory_space<vmem>>, %arg17: memref<1x128xf32, #tpu.memory_space<vmem>>, %arg18: memref<8x128xf32, #tpu.memory_space<vmem>>) attributes {dimension_semantics = [#tpu.dimension_semantics<parallel>], iteration_bounds = array<i64: 1>, scalar_prefetch = 0 : i64, scratch_operands = 0 : i64, tpu.core_type = #tpu.core_type<tc>, window_params = [{transform_indices = @transform_0, window_bounds = array<i64: 256, 96>}, {pipeline_mode = #tpu.pipeline_mode<synchronous>, transform_indices = @transform_1, window_bounds = array<i64: 256, 256>}, {pipeline_mode = #tpu.pipeline_mode<synchronous>, transform_indices = @transform_2, window_bounds = array<i64: 384, 256>}, {pipeline_mode = #tpu.pipeline_mode<synchronous>, transform_indices = @transform_3, window_bounds = array<i64: 3, 96, 256>}, {pipeline_mode = #tpu.pipeline_mode<synchronous>, transform_indices = @transform_4, window_bounds = array<i64: 1, 256>}, {pipeline_mode = #tpu.pipeline_mode<synchronous>, transform_indices = @transform_5, window_bounds = array<i64: 192, 128>}, {pipeline_mode = #tpu.pipeline_mode<synchronous>, transform_indices = @transform_6, window_bounds = array<i64: 3, 256, 256>}, {pipeline_mode = #tpu.pipeline_mode<synchronous>, transform_indices = @transform_7, window_bounds = array<i64: 1, 256>}, {pipeline_mode = #tpu.pipeline_mode<synchronous>, transform_indices = @transform_8, window_bounds = array<i64: 96, 64>}, {pipeline_mode = #tpu.pipeline_mode<synchronous>, transform_indices = @transform_9, window_bounds = array<i64: 3, 256, 256>}, {pipeline_mode = #tpu.pipeline_mode<synchronous>, transform_indices = @transform_10, window_bounds = array<i64: 1, 256>}, {pipeline_mode = #tpu.pipeline_mode<synchronous>, transform_indices = @transform_11, window_bounds = array<i64: 48, 32>}, {pipeline_mode = #tpu.pipeline_mode<synchronous>, transform_indices = @transform_12, window_bounds = array<i64: 3, 256, 256>}, {pipeline_mode = #tpu.pipeline_mode<synchronous>, transform_indices = @transform_13, window_bounds = array<i64: 1, 256>}, {pipeline_mode = #tpu.pipeline_mode<synchronous>, transform_indices = @transform_14, window_bounds = array<i64: 16, 16>}, {pipeline_mode = #tpu.pipeline_mode<synchronous>, transform_indices = @transform_15, window_bounds = array<i64: 2, 256, 128>}, {pipeline_mode = #tpu.pipeline_mode<synchronous>, transform_indices = @transform_16, window_bounds = array<i64: 1, 128>}, {transform_indices = @transform_17, window_bounds = array<i64: 8, 128>}]} {
    %c0 = arith.constant 0 : index
    %c0_0 = arith.constant 0 : index
    %0 = vector.load %arg1[%c0, %c0_0] : memref<256x96xf32, #tpu.memory_space<vmem>>, vector<256x96xf32>
    %1 = arith.mulf %0, %0 : vector<256x96xf32>
    %c0_1 = arith.constant 0 : index
    %c0_2 = arith.constant 0 : index
    %2 = vector.load %arg2[%c0_1, %c0_2] : memref<256x256xf32, #tpu.memory_space<vmem>>, vector<256x256xf32>
    %cst = arith.constant dense<0.000000e+00> : vector<256x96xf32>
    %3 = tpu.matmul %2, %1, %cst {dimension_numbers = #tpu.dot_dimension_numbers<[1], [0], [0], [1], [0, 0, 1, 1], [], []>} : vector<256x256xf32>, vector<256x96xf32>, vector<256x96xf32> -> vector<256x96xf32>
    %cst_3 = arith.constant dense<0.000000e+00> : vector<256xf32>
    %4 = vector.multi_reduction <add>, %3, %cst_3 [1] : vector<256x96xf32> to vector<256xf32>
    %5 = vector.shape_cast %4 : vector<256xf32> to vector<256x1xf32>
    %6 = math.rsqrt %5 : vector<256x1xf32>
    %7 = vector.broadcast %6 : vector<256x1xf32> to vector<256x96xf32>
    %8 = arith.mulf %0, %7 : vector<256x96xf32>
    %c0_4 = arith.constant 0 : index
    %c0_5 = arith.constant 0 : index
    %9 = vector.load %arg3[%c0_4, %c0_5] : memref<384x256xf32, #tpu.memory_space<vmem>>, vector<384x256xf32>
    %cst_6 = arith.constant dense<0.000000e+00> : vector<384x96xf32>
    %10 = tpu.matmul %9, %8, %cst_6 {dimension_numbers = #tpu.dot_dimension_numbers<[1], [0], [0], [1], [0, 0, 1, 1], [], []>} : vector<384x256xf32>, vector<256x96xf32>, vector<384x96xf32> -> vector<384x96xf32>
    %11 = vector.extract_strided_slice %10 {offsets = [0, 0], sizes = [128, 96], strides = [1, 1]} : vector<384x96xf32> to vector<128x96xf32>
    %c0_7 = arith.constant 0 : index
    %c0_8 = arith.constant 0 : index
    %c0_9 = arith.constant 0 : index
    %12 = vector.load %arg4[%c0_7, %c0_8, %c0_9] : memref<3x96x256xf32, #tpu.memory_space<vmem>>, vector<1x96x256xf32>
    %13 = vector.shape_cast %12 : vector<1x96x256xf32> to vector<96x256xf32>
    %cst_10 = arith.constant dense<0.000000e+00> : vector<128x256xf32>
    %14 = tpu.matmul %11, %13, %cst_10 {dimension_numbers = #tpu.dot_dimension_numbers<[1], [0], [0], [1], [0, 0, 1, 1], [], []>} : vector<128x96xf32>, vector<96x256xf32>, vector<128x256xf32> -> vector<128x256xf32>
    %15 = vector.extract_strided_slice %10 {offsets = [128, 0], sizes = [128, 96], strides = [1, 1]} : vector<384x96xf32> to vector<128x96xf32>
    %c1 = arith.constant 1 : index
    %c0_11 = arith.constant 0 : index
    %c0_12 = arith.constant 0 : index
    %16 = vector.load %arg4[%c1, %c0_11, %c0_12] : memref<3x96x256xf32, #tpu.memory_space<vmem>>, vector<1x96x256xf32>
    %17 = vector.shape_cast %16 : vector<1x96x256xf32> to vector<96x256xf32>
    %cst_13 = arith.constant dense<0.000000e+00> : vector<128x256xf32>
    %18 = tpu.matmul %15, %17, %cst_13 {dimension_numbers = #tpu.dot_dimension_numbers<[1], [0], [0], [1], [0, 0, 1, 1], [], []>} : vector<128x96xf32>, vector<96x256xf32>, vector<128x256xf32> -> vector<128x256xf32>
    %19 = arith.addf %14, %18 : vector<128x256xf32>
    %20 = vector.extract_strided_slice %10 {offsets = [256, 0], sizes = [128, 96], strides = [1, 1]} : vector<384x96xf32> to vector<128x96xf32>
    %c2 = arith.constant 2 : index
    %c0_14 = arith.constant 0 : index
    %c0_15 = arith.constant 0 : index
    %21 = vector.load %arg4[%c2, %c0_14, %c0_15] : memref<3x96x256xf32, #tpu.memory_space<vmem>>, vector<1x96x256xf32>
    %22 = vector.shape_cast %21 : vector<1x96x256xf32> to vector<96x256xf32>
    %cst_16 = arith.constant dense<0.000000e+00> : vector<128x256xf32>
    %23 = tpu.matmul %20, %22, %cst_16 {dimension_numbers = #tpu.dot_dimension_numbers<[1], [0], [0], [1], [0, 0, 1, 1], [], []>} : vector<128x96xf32>, vector<96x256xf32>, vector<128x256xf32> -> vector<128x256xf32>
    %24 = arith.addf %19, %23 : vector<128x256xf32>
    %c0_17 = arith.constant 0 : index
    %c0_18 = arith.constant 0 : index
    %25 = vector.load %arg5[%c0_17, %c0_18] : memref<1x256xf32, #tpu.memory_space<vmem>>, vector<1x256xf32>
    %26 = vector.broadcast %25 : vector<1x256xf32> to vector<128x256xf32>
    %27 = arith.addf %24, %26 : vector<128x256xf32>
    %cst_19 = arith.constant 0.000000e+00 : f32
    %28 = vector.broadcast %cst_19 : f32 to vector<128x256xf32>
    %29 = arith.maximumf %27, %28 : vector<128x256xf32>
    %c0_20 = arith.constant 0 : index
    %c0_21 = arith.constant 0 : index
    %30 = vector.load %arg6[%c0_20, %c0_21] : memref<192x128xf32, #tpu.memory_space<vmem>>, vector<192x128xf32>
    %cst_22 = arith.constant dense<0.000000e+00> : vector<192x256xf32>
    %31 = tpu.matmul %30, %29, %cst_22 {dimension_numbers = #tpu.dot_dimension_numbers<[1], [0], [0], [1], [0, 0, 1, 1], [], []>} : vector<192x128xf32>, vector<128x256xf32>, vector<192x256xf32> -> vector<192x256xf32>
    %32 = vector.extract_strided_slice %31 {offsets = [0, 0], sizes = [64, 256], strides = [1, 1]} : vector<192x256xf32> to vector<64x256xf32>
    %c0_23 = arith.constant 0 : index
    %c0_24 = arith.constant 0 : index
    %c0_25 = arith.constant 0 : index
    %33 = vector.load %arg7[%c0_23, %c0_24, %c0_25] : memref<3x256x256xf32, #tpu.memory_space<vmem>>, vector<1x256x256xf32>
    %34 = vector.shape_cast %33 : vector<1x256x256xf32> to vector<256x256xf32>
    %cst_26 = arith.constant dense<0.000000e+00> : vector<64x256xf32>
    %35 = tpu.matmul %32, %34, %cst_26 {dimension_numbers = #tpu.dot_dimension_numbers<[1], [0], [0], [1], [0, 0, 1, 1], [], []>} : vector<64x256xf32>, vector<256x256xf32>, vector<64x256xf32> -> vector<64x256xf32>
    %36 = vector.extract_strided_slice %31 {offsets = [64, 0], sizes = [64, 256], strides = [1, 1]} : vector<192x256xf32> to vector<64x256xf32>
    %c1_27 = arith.constant 1 : index
    %c0_28 = arith.constant 0 : index
    %c0_29 = arith.constant 0 : index
    %37 = vector.load %arg7[%c1_27, %c0_28, %c0_29] : memref<3x256x256xf32, #tpu.memory_space<vmem>>, vector<1x256x256xf32>
    %38 = vector.shape_cast %37 : vector<1x256x256xf32> to vector<256x256xf32>
    %cst_30 = arith.constant dense<0.000000e+00> : vector<64x256xf32>
    %39 = tpu.matmul %36, %38, %cst_30 {dimension_numbers = #tpu.dot_dimension_numbers<[1], [0], [0], [1], [0, 0, 1, 1], [], []>} : vector<64x256xf32>, vector<256x256xf32>, vector<64x256xf32> -> vector<64x256xf32>
    %40 = arith.addf %35, %39 : vector<64x256xf32>
    %41 = vector.extract_strided_slice %31 {offsets = [128, 0], sizes = [64, 256], strides = [1, 1]} : vector<192x256xf32> to vector<64x256xf32>
    %c2_31 = arith.constant 2 : index
    %c0_32 = arith.constant 0 : index
    %c0_33 = arith.constant 0 : index
    %42 = vector.load %arg7[%c2_31, %c0_32, %c0_33] : memref<3x256x256xf32, #tpu.memory_space<vmem>>, vector<1x256x256xf32>
    %43 = vector.shape_cast %42 : vector<1x256x256xf32> to vector<256x256xf32>
    %cst_34 = arith.constant dense<0.000000e+00> : vector<64x256xf32>
    %44 = tpu.matmul %41, %43, %cst_34 {dimension_numbers = #tpu.dot_dimension_numbers<[1], [0], [0], [1], [0, 0, 1, 1], [], []>} : vector<64x256xf32>, vector<256x256xf32>, vector<64x256xf32> -> vector<64x256xf32>
    %45 = arith.addf %40, %44 : vector<64x256xf32>
    %c0_35 = arith.constant 0 : index
    %c0_36 = arith.constant 0 : index
    %46 = vector.load %arg8[%c0_35, %c0_36] : memref<1x256xf32, #tpu.memory_space<vmem>>, vector<1x256xf32>
    %47 = vector.broadcast %46 : vector<1x256xf32> to vector<64x256xf32>
    %48 = arith.addf %45, %47 : vector<64x256xf32>
    %cst_37 = arith.constant 0.000000e+00 : f32
    %49 = vector.broadcast %cst_37 : f32 to vector<64x256xf32>
    %50 = arith.maximumf %48, %49 : vector<64x256xf32>
    %c0_38 = arith.constant 0 : index
    %c0_39 = arith.constant 0 : index
    %51 = vector.load %arg9[%c0_38, %c0_39] : memref<96x64xf32, #tpu.memory_space<vmem>>, vector<96x64xf32>
    %cst_40 = arith.constant dense<0.000000e+00> : vector<96x256xf32>
    %52 = tpu.matmul %51, %50, %cst_40 {dimension_numbers = #tpu.dot_dimension_numbers<[1], [0], [0], [1], [0, 0, 1, 1], [], []>} : vector<96x64xf32>, vector<64x256xf32>, vector<96x256xf32> -> vector<96x256xf32>
    %53 = vector.extract_strided_slice %52 {offsets = [0, 0], sizes = [32, 256], strides = [1, 1]} : vector<96x256xf32> to vector<32x256xf32>
    %c0_41 = arith.constant 0 : index
    %c0_42 = arith.constant 0 : index
    %c0_43 = arith.constant 0 : index
    %54 = vector.load %arg10[%c0_41, %c0_42, %c0_43] : memref<3x256x256xf32, #tpu.memory_space<vmem>>, vector<1x256x256xf32>
    %55 = vector.shape_cast %54 : vector<1x256x256xf32> to vector<256x256xf32>
    %cst_44 = arith.constant dense<0.000000e+00> : vector<32x256xf32>
    %56 = tpu.matmul %53, %55, %cst_44 {dimension_numbers = #tpu.dot_dimension_numbers<[1], [0], [0], [1], [0, 0, 1, 1], [], []>} : vector<32x256xf32>, vector<256x256xf32>, vector<32x256xf32> -> vector<32x256xf32>
    %57 = vector.extract_strided_slice %52 {offsets = [32, 0], sizes = [32, 256], strides = [1, 1]} : vector<96x256xf32> to vector<32x256xf32>
    %c1_45 = arith.constant 1 : index
    %c0_46 = arith.constant 0 : index
    %c0_47 = arith.constant 0 : index
    %58 = vector.load %arg10[%c1_45, %c0_46, %c0_47] : memref<3x256x256xf32, #tpu.memory_space<vmem>>, vector<1x256x256xf32>
    %59 = vector.shape_cast %58 : vector<1x256x256xf32> to vector<256x256xf32>
    %cst_48 = arith.constant dense<0.000000e+00> : vector<32x256xf32>
    %60 = tpu.matmul %57, %59, %cst_48 {dimension_numbers = #tpu.dot_dimension_numbers<[1], [0], [0], [1], [0, 0, 1, 1], [], []>} : vector<32x256xf32>, vector<256x256xf32>, vector<32x256xf32> -> vector<32x256xf32>
    %61 = arith.addf %56, %60 : vector<32x256xf32>
    %62 = vector.extract_strided_slice %52 {offsets = [64, 0], sizes = [32, 256], strides = [1, 1]} : vector<96x256xf32> to vector<32x256xf32>
    %c2_49 = arith.constant 2 : index
    %c0_50 = arith.constant 0 : index
    %c0_51 = arith.constant 0 : index
    %63 = vector.load %arg10[%c2_49, %c0_50, %c0_51] : memref<3x256x256xf32, #tpu.memory_space<vmem>>, vector<1x256x256xf32>
    %64 = vector.shape_cast %63 : vector<1x256x256xf32> to vector<256x256xf32>
    %cst_52 = arith.constant dense<0.000000e+00> : vector<32x256xf32>
    %65 = tpu.matmul %62, %64, %cst_52 {dimension_numbers = #tpu.dot_dimension_numbers<[1], [0], [0], [1], [0, 0, 1, 1], [], []>} : vector<32x256xf32>, vector<256x256xf32>, vector<32x256xf32> -> vector<32x256xf32>
    %66 = arith.addf %61, %65 : vector<32x256xf32>
    %c0_53 = arith.constant 0 : index
    %c0_54 = arith.constant 0 : index
    %67 = vector.load %arg11[%c0_53, %c0_54] : memref<1x256xf32, #tpu.memory_space<vmem>>, vector<1x256xf32>
    %68 = vector.broadcast %67 : vector<1x256xf32> to vector<32x256xf32>
    %69 = arith.addf %66, %68 : vector<32x256xf32>
    %cst_55 = arith.constant 0.000000e+00 : f32
    %70 = vector.broadcast %cst_55 : f32 to vector<32x256xf32>
    %71 = arith.maximumf %69, %70 : vector<32x256xf32>
    %c0_56 = arith.constant 0 : index
    %c0_57 = arith.constant 0 : index
    %72 = vector.load %arg12[%c0_56, %c0_57] : memref<48x32xf32, #tpu.memory_space<vmem>>, vector<48x32xf32>
    %cst_58 = arith.constant dense<0.000000e+00> : vector<48x256xf32>
    %73 = tpu.matmul %72, %71, %cst_58 {dimension_numbers = #tpu.dot_dimension_numbers<[1], [0], [0], [1], [0, 0, 1, 1], [], []>} : vector<48x32xf32>, vector<32x256xf32>, vector<48x256xf32> -> vector<48x256xf32>
    %74 = vector.extract_strided_slice %73 {offsets = [0, 0], sizes = [16, 256], strides = [1, 1]} : vector<48x256xf32> to vector<16x256xf32>
    %c0_59 = arith.constant 0 : index
    %c0_60 = arith.constant 0 : index
    %c0_61 = arith.constant 0 : index
    %75 = vector.load %arg13[%c0_59, %c0_60, %c0_61] : memref<3x256x256xf32, #tpu.memory_space<vmem>>, vector<1x256x256xf32>
    %76 = vector.shape_cast %75 : vector<1x256x256xf32> to vector<256x256xf32>
    %cst_62 = arith.constant dense<0.000000e+00> : vector<16x256xf32>
    %77 = tpu.matmul %74, %76, %cst_62 {dimension_numbers = #tpu.dot_dimension_numbers<[1], [0], [0], [1], [0, 0, 1, 1], [], []>} : vector<16x256xf32>, vector<256x256xf32>, vector<16x256xf32> -> vector<16x256xf32>
    %78 = vector.extract_strided_slice %73 {offsets = [16, 0], sizes = [16, 256], strides = [1, 1]} : vector<48x256xf32> to vector<16x256xf32>
    %c1_63 = arith.constant 1 : index
    %c0_64 = arith.constant 0 : index
    %c0_65 = arith.constant 0 : index
    %79 = vector.load %arg13[%c1_63, %c0_64, %c0_65] : memref<3x256x256xf32, #tpu.memory_space<vmem>>, vector<1x256x256xf32>
    %80 = vector.shape_cast %79 : vector<1x256x256xf32> to vector<256x256xf32>
    %cst_66 = arith.constant dense<0.000000e+00> : vector<16x256xf32>
    %81 = tpu.matmul %78, %80, %cst_66 {dimension_numbers = #tpu.dot_dimension_numbers<[1], [0], [0], [1], [0, 0, 1, 1], [], []>} : vector<16x256xf32>, vector<256x256xf32>, vector<16x256xf32> -> vector<16x256xf32>
    %82 = arith.addf %77, %81 : vector<16x256xf32>
    %83 = vector.extract_strided_slice %73 {offsets = [32, 0], sizes = [16, 256], strides = [1, 1]} : vector<48x256xf32> to vector<16x256xf32>
    %c2_67 = arith.constant 2 : index
    %c0_68 = arith.constant 0 : index
    %c0_69 = arith.constant 0 : index
    %84 = vector.load %arg13[%c2_67, %c0_68, %c0_69] : memref<3x256x256xf32, #tpu.memory_space<vmem>>, vector<1x256x256xf32>
    %85 = vector.shape_cast %84 : vector<1x256x256xf32> to vector<256x256xf32>
    %cst_70 = arith.constant dense<0.000000e+00> : vector<16x256xf32>
    %86 = tpu.matmul %83, %85, %cst_70 {dimension_numbers = #tpu.dot_dimension_numbers<[1], [0], [0], [1], [0, 0, 1, 1], [], []>} : vector<16x256xf32>, vector<256x256xf32>, vector<16x256xf32> -> vector<16x256xf32>
    %87 = arith.addf %82, %86 : vector<16x256xf32>
    %c0_71 = arith.constant 0 : index
    %c0_72 = arith.constant 0 : index
    %88 = vector.load %arg14[%c0_71, %c0_72] : memref<1x256xf32, #tpu.memory_space<vmem>>, vector<1x256xf32>
    %89 = vector.broadcast %88 : vector<1x256xf32> to vector<16x256xf32>
    %90 = arith.addf %87, %89 : vector<16x256xf32>
    %c0_73 = arith.constant 0 : index
    %c0_74 = arith.constant 0 : index
    %91 = vector.load %arg15[%c0_73, %c0_74] : memref<16x16xf32, #tpu.memory_space<vmem>>, vector<16x16xf32>
    %cst_75 = arith.constant dense<0.000000e+00> : vector<16x256xf32>
    %92 = tpu.matmul %91, %90, %cst_75 {dimension_numbers = #tpu.dot_dimension_numbers<[1], [0], [0], [1], [0, 0, 1, 1], [], []>} : vector<16x16xf32>, vector<16x256xf32>, vector<16x256xf32> -> vector<16x256xf32>
    %93 = vector.extract_strided_slice %92 {offsets = [0, 0], sizes = [8, 256], strides = [1, 1]} : vector<16x256xf32> to vector<8x256xf32>
    %c0_76 = arith.constant 0 : index
    %c0_77 = arith.constant 0 : index
    %c0_78 = arith.constant 0 : index
    %94 = vector.load %arg16[%c0_76, %c0_77, %c0_78] : memref<2x256x128xf32, #tpu.memory_space<vmem>>, vector<1x256x128xf32>
    %95 = vector.shape_cast %94 : vector<1x256x128xf32> to vector<256x128xf32>
    %cst_79 = arith.constant dense<0.000000e+00> : vector<8x128xf32>
    %96 = tpu.matmul %93, %95, %cst_79 {dimension_numbers = #tpu.dot_dimension_numbers<[1], [0], [0], [1], [0, 0, 1, 1], [], []>} : vector<8x256xf32>, vector<256x128xf32>, vector<8x128xf32> -> vector<8x128xf32>
    %97 = vector.extract_strided_slice %92 {offsets = [8, 0], sizes = [8, 256], strides = [1, 1]} : vector<16x256xf32> to vector<8x256xf32>
    %c1_80 = arith.constant 1 : index
    %c0_81 = arith.constant 0 : index
    %c0_82 = arith.constant 0 : index
    %98 = vector.load %arg16[%c1_80, %c0_81, %c0_82] : memref<2x256x128xf32, #tpu.memory_space<vmem>>, vector<1x256x128xf32>
    %99 = vector.shape_cast %98 : vector<1x256x128xf32> to vector<256x128xf32>
    %cst_83 = arith.constant dense<0.000000e+00> : vector<8x128xf32>
    %100 = tpu.matmul %97, %99, %cst_83 {dimension_numbers = #tpu.dot_dimension_numbers<[1], [0], [0], [1], [0, 0, 1, 1], [], []>} : vector<8x256xf32>, vector<256x128xf32>, vector<8x128xf32> -> vector<8x128xf32>
    %101 = arith.addf %96, %100 : vector<8x128xf32>
    %c0_84 = arith.constant 0 : index
    %c0_85 = arith.constant 0 : index
    %102 = vector.load %arg17[%c0_84, %c0_85] : memref<1x128xf32, #tpu.memory_space<vmem>>, vector<1x128xf32>
    %103 = vector.broadcast %102 : vector<1x128xf32> to vector<8x128xf32>
    %104 = arith.addf %101, %103 : vector<8x128xf32>
    %c0_86 = arith.constant 0 : index
    %c0_87 = arith.constant 0 : index
    %105 = vector.load %arg18[%c0_86, %c0_87] : memref<8x128xf32, #tpu.memory_space<vmem>>, vector<8x128xf32>
    tpu.vector_store %arg18[%c0_86, %c0_87], %104 {strides = array<i32>} : memref<8x128xf32, #tpu.memory_space<vmem>>, vector<8x128xf32>,
    return
  }
  func.func @transform_0(%arg0: i32) -> (i32, i32) {
    %c0_i32 = arith.constant 0 : i32
    %c0_i32_0 = arith.constant 0 : i32
    return %arg0, %c0_i32 : i32, i32
  }
  func.func @transform_1(%arg0: i32) -> (i32, i32) {
    %c0_i32 = arith.constant 0 : i32
    %c0_i32_0 = arith.constant 0 : i32
    %c0_i32_1 = arith.constant 0 : i32
    return %c0_i32, %c0_i32_0 : i32, i32
  }
  func.func @transform_2(%arg0: i32) -> (i32, i32) {
    %c0_i32 = arith.constant 0 : i32
    %c0_i32_0 = arith.constant 0 : i32
    %c0_i32_1 = arith.constant 0 : i32
    return %c0_i32, %c0_i32_0 : i32, i32
  }
  func.func @transform_3(%arg0: i32) -> (i32, i32, i32) {
    %c0_i32 = arith.constant 0 : i32
    %c0_i32_0 = arith.constant 0 : i32
    %c0_i32_1 = arith.constant 0 : i32
    %c0_i32_2 = arith.constant 0 : i32
    return %c0_i32, %c0_i32_0, %c0_i32_1 : i32, i32, i32
  }
  func.func @transform_4(%arg0: i32) -> (i32, i32) {
    %c0_i32 = arith.constant 0 : i32
    %c0_i32_0 = arith.constant 0 : i32
    %c0_i32_1 = arith.constant 0 : i32
    return %c0_i32, %c0_i32_0 : i32, i32
  }
  func.func @transform_5(%arg0: i32) -> (i32, i32) {
    %c0_i32 = arith.constant 0 : i32
    %c0_i32_0 = arith.constant 0 : i32
    %c0_i32_1 = arith.constant 0 : i32
    return %c0_i32, %c0_i32_0 : i32, i32
  }
  func.func @transform_6(%arg0: i32) -> (i32, i32, i32) {
    %c0_i32 = arith.constant 0 : i32
    %c0_i32_0 = arith.constant 0 : i32
    %c0_i32_1 = arith.constant 0 : i32
    %c0_i32_2 = arith.constant 0 : i32
    return %c0_i32, %c0_i32_0, %c0_i32_1 : i32, i32, i32
  }
  func.func @transform_7(%arg0: i32) -> (i32, i32) {
    %c0_i32 = arith.constant 0 : i32
    %c0_i32_0 = arith.constant 0 : i32
    %c0_i32_1 = arith.constant 0 : i32
    return %c0_i32, %c0_i32_0 : i32, i32
  }
  func.func @transform_8(%arg0: i32) -> (i32, i32) {
    %c0_i32 = arith.constant 0 : i32
    %c0_i32_0 = arith.constant 0 : i32
    %c0_i32_1 = arith.constant 0 : i32
    return %c0_i32, %c0_i32_0 : i32, i32
  }
  func.func @transform_9(%arg0: i32) -> (i32, i32, i32) {
    %c0_i32 = arith.constant 0 : i32
    %c0_i32_0 = arith.constant 0 : i32
    %c0_i32_1 = arith.constant 0 : i32
    %c0_i32_2 = arith.constant 0 : i32
    return %c0_i32, %c0_i32_0, %c0_i32_1 : i32, i32, i32
  }
  func.func @transform_10(%arg0: i32) -> (i32, i32) {
    %c0_i32 = arith.constant 0 : i32
    %c0_i32_0 = arith.constant 0 : i32
    %c0_i32_1 = arith.constant 0 : i32
    return %c0_i32, %c0_i32_0 : i32, i32
  }
  func.func @transform_11(%arg0: i32) -> (i32, i32) {
    %c0_i32 = arith.constant 0 : i32
    %c0_i32_0 = arith.constant 0 : i32
    %c0_i32_1 = arith.constant 0 : i32
    return %c0_i32, %c0_i32_0 : i32, i32
  }
  func.func @transform_12(%arg0: i32) -> (i32, i32, i32) {
    %c0_i32 = arith.constant 0 : i32
    %c0_i32_0 = arith.constant 0 : i32
    %c0_i32_1 = arith.constant 0 : i32
    %c0_i32_2 = arith.constant 0 : i32
    return %c0_i32, %c0_i32_0, %c0_i32_1 : i32, i32, i32
  }
  func.func @transform_13(%arg0: i32) -> (i32, i32) {
    %c0_i32 = arith.constant 0 : i32
    %c0_i32_0 = arith.constant 0 : i32
    %c0_i32_1 = arith.constant 0 : i32
    return %c0_i32, %c0_i32_0 : i32, i32
  }
  func.func @transform_14(%arg0: i32) -> (i32, i32) {
    %c0_i32 = arith.constant 0 : i32
    %c0_i32_0 = arith.constant 0 : i32
    %c0_i32_1 = arith.constant 0 : i32
    return %c0_i32, %c0_i32_0 : i32, i32
  }
  func.func @transform_15(%arg0: i32) -> (i32, i32, i32) {
    %c0_i32 = arith.constant 0 : i32
    %c0_i32_0 = arith.constant 0 : i32
    %c0_i32_1 = arith.constant 0 : i32
    %c0_i32_2 = arith.constant 0 : i32
    return %c0_i32, %c0_i32_0, %c0_i32_1 : i32, i32, i32
  }
  func.func @transform_16(%arg0: i32) -> (i32, i32) {
    %c0_i32 = arith.constant 0 : i32
    %c0_i32_0 = arith.constant 0 : i32
    %c0_i32_1 = arith.constant 0 : i32
    return %c0_i32, %c0_i32_0 : i32, i32
  }
  func.func @transform_17(%arg0: i32) -> (i32, i32) {
    %c0_i32 = arith.constant 0 : i32
    %c0_i32_0 = arith.constant 0 : i32
    return %arg0, %c0_i32 : i32, i32
  }
}

</mosaic_0001>

<llo_original>
// kernel: net_simple_conv_norm_1x.1
$region0: #{net_simple_conv_norm_1x.1}
  #allocation0 [shape = 'u32[]', space=smem, size = 0x4, offset = 0x4, fixed_abs, tag = 'smem constant byte address 0x4 - core index']
  #allocation1 [shape = 'u32[144,128]{1,0:T(1,128)}', space=vmem, size = 0x12000, scoped, tag = 'internal scratch']
  %s0 = inlined_call_operand.vmem [shape: f32[256,96], index: 0, kind: input, shape index: {}]
  %s1 = inlined_call_operand.hbm [shape: f32[256,256], index: 1, kind: input, shape index: {}]
  %s2 = inlined_call_operand.vmem [shape: f32[384,256], index: 2, kind: input, shape index: {}]
  %s3 = inlined_call_operand.hbm [shape: f32[3,96,256], index: 3, kind: input, shape index: {}]
  %s4 = inlined_call_operand.hbm [shape: f32[1,256], index: 4, kind: input, shape index: {}]
  %s5 = inlined_call_operand.vmem [shape: f32[192,128], index: 5, kind: input, shape index: {}]
  %s6 = inlined_call_operand.hbm [shape: f32[3,256,256], index: 6, kind: input, shape index: {}]
  %s7 = inlined_call_operand.hbm [shape: f32[1,256], index: 7, kind: input, shape index: {}]
  %s8 = inlined_call_operand.hbm [shape: f32[96,64], index: 8, kind: input, shape index: {}]
  %s9 = inlined_call_operand.hbm [shape: f32[3,256,256], index: 9, kind: input, shape index: {}]
  %s10 = inlined_call_operand.hbm [shape: f32[1,256], index: 10, kind: input, shape index: {}]
  %s11 = inlined_call_operand.vmem [shape: f32[48,32], index: 11, kind: input, shape index: {}]
  %s12 = inlined_call_operand.hbm [shape: f32[3,256,256], index: 12, kind: input, shape index: {}]
  %s13 = inlined_call_operand.hbm [shape: f32[1,256], index: 13, kind: input, shape index: {}]
  %s14 = inlined_call_operand.vmem [shape: f32[16,16], index: 14, kind: input, shape index: {}]
  %s15 = inlined_call_operand.hbm [shape: f32[2,256,128], index: 15, kind: input, shape index: {}]
  %s16 = inlined_call_operand.vmem [shape: f32[1,128], index: 16, kind: input, shape index: {}]
  %s17 = inlined_call_operand.vmem [shape: f32[8,128], index: 17, kind: output, shape index: {}]
  %s18 = sld [smem:[#allocation0]]
  $region122: #{net_simple_conv_norm_1x.1} parent=0
    _
  %s20 = ssub.s32 1, %s18
  %s21 = scalar_select 0, %s20, %s18
  $region1: #{net_simple_conv_norm_1x.1} parent=0
    #allocation2 [shape = 'u8[262144]{0}', space=vmem, size = 0x40000, scoped, tag = 'input window, operand 1, single buffered']
    #allocation3 [shape = 's32[1]{0}', space=sflag, size = 0x4, scoped, tag = 'scoped memory for net_simple_conv_norm_1x.1']
    #allocation4 [shape = 'u8[294912]{0}', space=vmem, size = 0x48000, scoped, tag = 'input window, operand 3, single buffered']
    #allocation5 [shape = 's32[1]{0}', space=sflag, size = 0x4, scoped, tag = 'scoped memory for net_simple_conv_norm_1x.1']
    #allocation6 [shape = 'u8[1024]{0}', space=vmem, size = 0x400, scoped, tag = 'input window, operand 4, single buffered']
    #allocation7 [shape = 'u8[786432]{0}', space=vmem, size = 0xc0000, scoped, tag = 'input window, operand 6, single buffered']
    #allocation8 [shape = 's32[1]{0}', space=sflag, size = 0x4, scoped, tag = 'scoped memory for net_simple_conv_norm_1x.1']
    #allocation9 [shape = 'u8[1024]{0}', space=vmem, size = 0x400, scoped, tag = 'input window, operand 7, single buffered']
    #allocation10 [shape = 'u8[49152]{0}', space=vmem, size = 0xc000, scoped, tag = 'input window, operand 8, single buffered']
    #allocation11 [shape = 's32[1]{0}', space=sflag, size = 0x4, scoped, tag = 'scoped memory for net_simple_conv_norm_1x.1']
    #allocation12 [shape = 'u8[786432]{0}', space=vmem, size = 0xc0000, scoped, tag = 'input window, operand 9, single buffered']
    #allocation13 [shape = 'u8[1024]{0}', space=vmem, size = 0x400, scoped, tag = 'input window, operand 10, single buffered']
    #allocation14 [shape = 's32[1]{0}', space=sflag, size = 0x4, scoped, tag = 'scoped memory for net_simple_conv_norm_1x.1']
    #allocation15 [shape = 'u8[786432]{0}', space=vmem, size = 0xc0000, scoped, tag = 'input window, operand 12, single buffered']
    #allocation16 [shape = 'u8[1024]{0}', space=vmem, size = 0x400, scoped, tag = 'input window, operand 13, single buffered']
    #allocation17 [shape = 's32[1]{0}', space=sflag, size = 0x4, scoped, tag = 'scoped memory for net_simple_conv_norm_1x.1']
    #allocation18 [shape = 'u8[262144]{0}', space=vmem, size = 0x40000, scoped, tag = 'input window, operand 15, single buffered']
    %22 = vsyncpa [#allocation3], 0
    %23 = vsyncpa [#allocation5], 0
    %24 = vsyncpa [#allocation8], 0
    %25 = vsyncpa [#allocation11], 0
    %26 = vsyncpa [#allocation14], 0
    %27 = vsyncpa [#allocation17], 0
    // Predicated region
    $region2: #{net_simple_conv_norm_1x.1} parent=1 // pred_check
      _
    $region3: #{net_simple_conv_norm_1x.1} parent=1 // pred_check_branch
      %29 = sbr.rel (0) target = $region5
    $region4: #{net_simple_conv_norm_1x.1} parent=1 // pred_region
      _
    $region5: #{net_simple_conv_norm_1x.1} parent=1 // pred_fallthru
      _
    // Predicated region
    $region6: #{net_simple_conv_norm_1x.1} parent=1 // pred_check
      _
    $region7: #{net_simple_conv_norm_1x.1} parent=1 // pred_check_branch
      %31 = sbr.rel (0) target = $region9
    $region8: #{net_simple_conv_norm_1x.1} parent=1 // pred_region
      %s33 = ssub.s32 8192, 8192
      %34 = vsyncadd [#allocation3], %s33
      %s35 = sshll.u32 [#allocation2], 4
      %s36 = int_to_ptr.vmem [resolvable:$true] %s35
      %41 = dma.hbm_to_vmem [thread:$0]  %s1, 8192, %s36, [#allocation3], 256, 256, 16
    $region9: #{net_simple_conv_norm_1x.1} parent=1 // pred_fallthru
      _
    // Predicated region
    $region10: #{net_simple_conv_norm_1x.1} parent=1 // pred_check
      _
    $region11: #{net_simple_conv_norm_1x.1} parent=1 // pred_check_branch
      %43 = sbr.rel (0) target = $region13
    $region12: #{net_simple_conv_norm_1x.1} parent=1 // pred_region
      _
    $region13: #{net_simple_conv_norm_1x.1} parent=1 // pred_fallthru
      _
    // Predicated region
    $region14: #{net_simple_conv_norm_1x.1} parent=1 // pred_check
      _
    $region15: #{net_simple_conv_norm_1x.1} parent=1 // pred_check_branch
      %45 = sbr.rel (0) target = $region17
    $region16: #{net_simple_conv_norm_1x.1} parent=1 // pred_region
      %s47 = ssub.s32 9216, 9216
      %48 = vsyncadd [#allocation5], %s47
      %s49 = sshll.u32 [#allocation4], 4
      %s50 = int_to_ptr.vmem [resolvable:$true] %s49
      %55 = dma.hbm_to_vmem [thread:$0]  %s3, 9216, %s50, [#allocation5], 256, 256, 16
    $region17: #{net_simple_conv_norm_1x.1} parent=1 // pred_fallthru
      _
    // Predicated region
    $region18: #{net_simple_conv_norm_1x.1} parent=1 // pred_check
      _
    $region19: #{net_simple_conv_norm_1x.1} parent=1 // pred_check_branch
      %57 = sbr.rel (0) target = $region21
    $region20: #{net_simple_conv_norm_1x.1} parent=1 // pred_region
      %s59 = ssub.s32 32, 32
      %60 = vsyncadd [#allocation5], %s59
      %s62 = sshll.u32 [#allocation6], 4
      %s63 = int_to_ptr.vmem [resolvable:$true] %s62
      %65 = dma.hbm_to_vmem [thread:$0]  %s4, 32, %s63, [#allocation5]
    $region21: #{net_simple_conv_norm_1x.1} parent=1 // pred_fallthru
      _
    // Predicated region
    $region22: #{net_simple_conv_norm_1x.1} parent=1 // pred_check
      _
    $region23: #{net_simple_conv_norm_1x.1} parent=1 // pred_check_branch
      %67 = sbr.rel (0) target = $region25
    $region24: #{net_simple_conv_norm_1x.1} parent=1 // pred_region
      _
    $region25: #{net_simple_conv_norm_1x.1} parent=1 // pred_fallthru
      _
    // Predicated region
    $region26: #{net_simple_conv_norm_1x.1} parent=1 // pred_check
      _
    $region27: #{net_simple_conv_norm_1x.1} parent=1 // pred_check_branch
      %69 = sbr.rel (0) target = $region29
    $region28: #{net_simple_conv_norm_1x.1} parent=1 // pred_region
      %s71 = ssub.s32 24576, 24576
      %72 = vsyncadd [#allocation8], %s71
      %s73 = sshll.u32 [#allocation7], 4
      %s74 = int_to_ptr.vmem [resolvable:$true] %s73
      %79 = dma.hbm_to_vmem [thread:$0]  %s6, 24576, %s74, [#allocation8], 256, 256, 16
    $region29: #{net_simple_conv_norm_1x.1} parent=1 // pred_fallthru
      _
    // Predicated region
    $region30: #{net_simple_conv_norm_1x.1} parent=1 // pred_check
      _
    $region31: #{net_simple_conv_norm_1x.1} parent=1 // pred_check_branch
      %81 = sbr.rel (0) target = $region33
    $region32: #{net_simple_conv_norm_1x.1} parent=1 // pred_region
      %s83 = ssub.s32 32, 32
      %84 = vsyncadd [#allocation8], %s83
      %s86 = sshll.u32 [#allocation9], 4
      %s87 = int_to_ptr.vmem [resolvable:$true] %s86
      %89 = dma.hbm_to_vmem [thread:$0]  %s7, 32, %s87, [#allocation8]
    $region33: #{net_simple_conv_norm_1x.1} parent=1 // pred_fallthru
      _
    // Predicated region
    $region34: #{net_simple_conv_norm_1x.1} parent=1 // pred_check
      _
    $region35: #{net_simple_conv_norm_1x.1} parent=1 // pred_check_branch
      %91 = sbr.rel (0) target = $region37
    $region36: #{net_simple_conv_norm_1x.1} parent=1 // pred_region
      %s93 = ssub.s32 1536, 1536
      %94 = vsyncadd [#allocation11], %s93
      %s95 = sshll.u32 [#allocation10], 4
      %s96 = int_to_ptr.vmem [resolvable:$true] %s95
      %101 = dma.hbm_to_vmem [thread:$0]  %s8, 1536, %s96, [#allocation11], 128, 128, 8
    $region37: #{net_simple_conv_norm_1x.1} parent=1 // pred_fallthru
      _
    // Predicated region
    $region38: #{net_simple_conv_norm_1x.1} parent=1 // pred_check
      _
    $region39: #{net_simple_conv_norm_1x.1} parent=1 // pred_check_branch
      %103 = sbr.rel (0) target = $region41
    $region40: #{net_simple_conv_norm_1x.1} parent=1 // pred_region
      %s105 = ssub.s32 24576, 24576
      %106 = vsyncadd [#allocation11], %s105
      %s107 = sshll.u32 [#allocation12], 4
      %s108 = int_to_ptr.vmem [resolvable:$true] %s107
      %113 = dma.hbm_to_vmem [thread:$0]  %s9, 24576, %s108, [#allocation11], 256, 256, 16
    $region41: #{net_simple_conv_norm_1x.1} parent=1 // pred_fallthru
      _
    // Predicated region
    $region42: #{net_simple_conv_norm_1x.1} parent=1 // pred_check
      _
    $region43: #{net_simple_conv_norm_1x.1} parent=1 // pred_check_branch
      %115 = sbr.rel (0) target = $region45
    $region44: #{net_simple_conv_norm_1x.1} parent=1 // pred_region
      %s117 = ssub.s32 32, 32
      %118 = vsyncadd [#allocation14], %s117
      %s120 = sshll.u32 [#allocation13], 4
      %s121 = int_to_ptr.vmem [resolvable:$true] %s120
      %123 = dma.hbm_to_vmem [thread:$0]  %s10, 32, %s121, [#allocation14]
    $region45: #{net_simple_conv_norm_1x.1} parent=1 // pred_fallthru
      _
    // Predicated region
    $region46: #{net_simple_conv_norm_1x.1} parent=1 // pred_check
      _
    $region47: #{net_simple_conv_norm_1x.1} parent=1 // pred_check_branch
      %125 = sbr.rel (0) target = $region49
    $region48: #{net_simple_conv_norm_1x.1} parent=1 // pred_region
      _
    $region49: #{net_simple_conv_norm_1x.1} parent=1 // pred_fallthru
      _
    // Predicated region
    $region50: #{net_simple_conv_norm_1x.1} parent=1 // pred_check
      _
    $region51: #{net_simple_conv_norm_1x.1} parent=1 // pred_check_branch
      %127 = sbr.rel (0) target = $region53
    $region52: #{net_simple_conv_norm_1x.1} parent=1 // pred_region
      %s129 = ssub.s32 24576, 24576
      %130 = vsyncadd [#allocation14], %s129
      %s131 = sshll.u32 [#allocation15], 4
      %s132 = int_to_ptr.vmem [resolvable:$true] %s131
      %137 = dma.hbm_to_vmem [thread:$0]  %s12, 24576, %s132, [#allocation14], 256, 256, 16
    $region53: #{net_simple_conv_norm_1x.1} parent=1 // pred_fallthru
      _
    // Predicated region
    $region54: #{net_simple_conv_norm_1x.1} parent=1 // pred_check
      _
    $region55: #{net_simple_conv_norm_1x.1} parent=1 // pred_check_branch
      %139 = sbr.rel (0) target = $region57
    $region56: #{net_simple_conv_norm_1x.1} parent=1 // pred_region
      %s141 = ssub.s32 32, 32
      %142 = vsyncadd [#allocation17], %s141
      %s144 = sshll.u32 [#allocation16], 4
      %s145 = int_to_ptr.vmem [resolvable:$true] %s144
      %147 = dma.hbm_to_vmem [thread:$0]  %s13, 32, %s145, [#allocation17]
    $region57: #{net_simple_conv_norm_1x.1} parent=1 // pred_fallthru
      _
    // Predicated region
    $region58: #{net_simple_conv_norm_1x.1} parent=1 // pred_check
      _
    $region59: #{net_simple_conv_norm_1x.1} parent=1 // pred_check_branch
      %149 = sbr.rel (0) target = $region61
    $region60: #{net_simple_conv_norm_1x.1} parent=1 // pred_region
      _
    $region61: #{net_simple_conv_norm_1x.1} parent=1 // pred_fallthru
      _
    // Predicated region
    $region62: #{net_simple_conv_norm_1x.1} parent=1 // pred_check
      _
    $region63: #{net_simple_conv_norm_1x.1} parent=1 // pred_check_branch
      %151 = sbr.rel (0) target = $region65
    $region64: #{net_simple_conv_norm_1x.1} parent=1 // pred_region
      %s153 = ssub.s32 8192, 8192
      %154 = vsyncadd [#allocation17], %s153
      %s155 = sshll.u32 [#allocation18], 4
      %s156 = int_to_ptr.vmem [resolvable:$true] %s155
      %161 = dma.hbm_to_vmem [thread:$0]  %s15, 8192, %s156, [#allocation17], 128, 128, 8
    $region65: #{net_simple_conv_norm_1x.1} parent=1 // pred_fallthru
      _
    // Predicated region
    $region66: #{net_simple_conv_norm_1x.1} parent=1 // pred_check
      _
    $region67: #{net_simple_conv_norm_1x.1} parent=1 // pred_check_branch
      %163 = sbr.rel (0) target = $region69
    $region68: #{net_simple_conv_norm_1x.1} parent=1 // pred_region
      _
    $region69: #{net_simple_conv_norm_1x.1} parent=1 // pred_fallthru
      _
    // Predicated region
    $region70: #{net_simple_conv_norm_1x.1} parent=1 // pred_check
      _
    $region71: #{net_simple_conv_norm_1x.1} parent=1 // pred_check_branch
      %165 = sbr.rel (0) target = $region73
    $region72: #{net_simple_conv_norm_1x.1} parent=1 // pred_region
      %166 = dma.done [#allocation3], 8192
    $region73: #{net_simple_conv_norm_1x.1} parent=1 // pred_fallthru
      _
    // Predicated region
    $region74: #{net_simple_conv_norm_1x.1} parent=1 // pred_check
      _
    $region75: #{net_simple_conv_norm_1x.1} parent=1 // pred_check_branch
      %168 = sbr.rel (0) target = $region77
    $region76: #{net_simple_conv_norm_1x.1} parent=1 // pred_region
      %169 = dma.done [#allocation5], 9216
    $region77: #{net_simple_conv_norm_1x.1} parent=1 // pred_fallthru
      _
    // Predicated region
    $region78: #{net_simple_conv_norm_1x.1} parent=1 // pred_check
      _
    $region79: #{net_simple_conv_norm_1x.1} parent=1 // pred_check_branch
      %171 = sbr.rel (0) target = $region81
    $region80: #{net_simple_conv_norm_1x.1} parent=1 // pred_region
      %172 = dma.done [#allocation5], 32
    $region81: #{net_simple_conv_norm_1x.1} parent=1 // pred_fallthru
      _
    // Predicated region
    $region82: #{net_simple_conv_norm_1x.1} parent=1 // pred_check
      _
    $region83: #{net_simple_conv_norm_1x.1} parent=1 // pred_check_branch
      %174 = sbr.rel (0) target = $region85
    $region84: #{net_simple_conv_norm_1x.1} parent=1 // pred_region
      %175 = dma.done [#allocation8], 24576
    $region85: #{net_simple_conv_norm_1x.1} parent=1 // pred_fallthru
      _
    // Predicated region
    $region86: #{net_simple_conv_norm_1x.1} parent=1 // pred_check
      _
    $region87: #{net_simple_conv_norm_1x.1} parent=1 // pred_check_branch
      %177 = sbr.rel (0) target = $region89
    $region88: #{net_simple_conv_norm_1x.1} parent=1 // pred_region
      %178 = dma.done [#allocation8], 32
    $region89: #{net_simple_conv_norm_1x.1} parent=1 // pred_fallthru
      _
    // Predicated region
    $region90: #{net_simple_conv_norm_1x.1} parent=1 // pred_check
      _
    $region91: #{net_simple_conv_norm_1x.1} parent=1 // pred_check_branch
      %180 = sbr.rel (0) target = $region93
    $region92: #{net_simple_conv_norm_1x.1} parent=1 // pred_region
      %181 = dma.done [#allocation11], 1536
    $region93: #{net_simple_conv_norm_1x.1} parent=1 // pred_fallthru
      _
    // Predicated region
    $region94: #{net_simple_conv_norm_1x.1} parent=1 // pred_check
      _
    $region95: #{net_simple_conv_norm_1x.1} parent=1 // pred_check_branch
      %183 = sbr.rel (0) target = $region97
    $region96: #{net_simple_conv_norm_1x.1} parent=1 // pred_region
      %184 = dma.done [#allocation11], 24576
    $region97: #{net_simple_conv_norm_1x.1} parent=1 // pred_fallthru
      _
    // Predicated region
    $region98: #{net_simple_conv_norm_1x.1} parent=1 // pred_check
      _
    $region99: #{net_simple_conv_norm_1x.1} parent=1 // pred_check_branch
      %186 = sbr.rel (0) target = $region101
    $region100: #{net_simple_conv_norm_1x.1} parent=1 // pred_region
      %187 = dma.done [#allocation14], 32
    $region101: #{net_simple_conv_norm_1x.1} parent=1 // pred_fallthru
      _
    // Predicated region
    $region102: #{net_simple_conv_norm_1x.1} parent=1 // pred_check
      _
    $region103: #{net_simple_conv_norm_1x.1} parent=1 // pred_check_branch
      %189 = sbr.rel (0) target = $region105
    $region104: #{net_simple_conv_norm_1x.1} parent=1 // pred_region
      %190 = dma.done [#allocation14], 24576
    $region105: #{net_simple_conv_norm_1x.1} parent=1 // pred_fallthru
      _
    // Predicated region
    $region106: #{net_simple_conv_norm_1x.1} parent=1 // pred_check
      _
    $region107: #{net_simple_conv_norm_1x.1} parent=1 // pred_check_branch
      %192 = sbr.rel (0) target = $region109
    $region108: #{net_simple_conv_norm_1x.1} parent=1 // pred_region
      %193 = dma.done [#allocation17], 32
    $region109: #{net_simple_conv_norm_1x.1} parent=1 // pred_fallthru
      _
    // Predicated region
    $region110: #{net_simple_conv_norm_1x.1} parent=1 // pred_check
      _
    $region111: #{net_simple_conv_norm_1x.1} parent=1 // pred_check_branch
      %195 = sbr.rel (0) target = $region113
    $region112: #{net_simple_conv_norm_1x.1} parent=1 // pred_region
      %196 = dma.done [#allocation17], 8192
    $region113: #{net_simple_conv_norm_1x.1} parent=1 // pred_fallthru
      _
    %v197 = vld [vmem:[%s0] sm:$0xff]
    %v198 = vld [vmem:[%s0 + $0x8] sm:$0xff]
    %v199 = vld [vmem:[%s0 + $0x10] sm:$0xff]
    %v200 = vld [vmem:[%s0 + $0x18] sm:$0xff]
    %v201 = vld [vmem:[%s0 + $0x20] sm:$0xff]
    %v202 = vld [vmem:[%s0 + $0x28] sm:$0xff]
    %v203 = vld [vmem:[%s0 + $0x30] sm:$0xff]
    %v204 = vld [vmem:[%s0 + $0x38] sm:$0xff]
    %v205 = vld [vmem:[%s0 + $0x40] sm:$0xff]
    %v206 = vld [vmem:[%s0 + $0x48] sm:$0xff]
    %v207 = vld [vmem:[%s0 + $0x50] sm:$0xff]
    %v208 = vld [vmem:[%s0 + $0x58] sm:$0xff]
    %v209 = vld [vmem:[%s0 + $0x60] sm:$0xff]
    %v210 = vld [vmem:[%s0 + $0x68] sm:$0xff]
    %v211 = vld [vmem:[%s0 + $0x70] sm:$0xff]
    %v212 = vld [vmem:[%s0 + $0x78] sm:$0xff]
    %v213 = vld [vmem:[%s0 + $0x80] sm:$0xff]
    %v214 = vld [vmem:[%s0 + $0x88] sm:$0xff]
    %v215 = vld [vmem:[%s0 + $0x90] sm:$0xff]
    %v216 = vld [vmem:[%s0 + $0x98] sm:$0xff]
    %v217 = vld [vmem:[%s0 + $0xa0] sm:$0xff]
    %v218 = vld [vmem:[%s0 + $0xa8] sm:$0xff]
    %v219 = vld [vmem:[%s0 + $0xb0] sm:$0xff]
    %v220 = vld [vmem:[%s0 + $0xb8] sm:$0xff]
    %v221 = vld [vmem:[%s0 + $0xc0] sm:$0xff]
    %v222 = vld [vmem:[%s0 + $0xc8] sm:$0xff]
    %v223 = vld [vmem:[%s0 + $0xd0] sm:$0xff]
    %v224 = vld [vmem:[%s0 + $0xd8] sm:$0xff]
    %v225 = vld [vmem:[%s0 + $0xe0] sm:$0xff]
    %v226 = vld [vmem:[%s0 + $0xe8] sm:$0xff]
    %v227 = vld [vmem:[%s0 + $0xf0] sm:$0xff]
    %v228 = vld [vmem:[%s0 + $0xf8] sm:$0xff]
    %v229 = vmul.f32 %v197, %v197
    %v230 = vmul.f32 %v198, %v198
    %v231 = vmul.f32 %v199, %v199
    %v232 = vmul.f32 %v200, %v200
    %v233 = vmul.f32 %v201, %v201
    %v234 = vmul.f32 %v202, %v202
    %v235 = vmul.f32 %v203, %v203
    %v236 = vmul.f32 %v204, %v204
    %v237 = vmul.f32 %v205, %v205
    %v238 = vmul.f32 %v206, %v206
    %v239 = vmul.f32 %v207, %v207
    %v240 = vmul.f32 %v208, %v208
    %v241 = vmul.f32 %v209, %v209
    %v242 = vmul.f32 %v210, %v210
    %v243 = vmul.f32 %v211, %v211
    %v244 = vmul.f32 %v212, %v212
    %v245 = vmul.f32 %v213, %v213
    %v246 = vmul.f32 %v214, %v214
    %v247 = vmul.f32 %v215, %v215
    %v248 = vmul.f32 %v216, %v216
    %v249 = vmul.f32 %v217, %v217
    %v250 = vmul.f32 %v218, %v218
    %v251 = vmul.f32 %v219, %v219
    %v252 = vmul.f32 %v220, %v220
    %v253 = vmul.f32 %v221, %v221
    %v254 = vmul.f32 %v222, %v222
    %v255 = vmul.f32 %v223, %v223
    %v256 = vmul.f32 %v224, %v224
    %v257 = vmul.f32 %v225, %v225
    %v258 = vmul.f32 %v226, %v226
    %v259 = vmul.f32 %v227, %v227
    %v260 = vmul.f32 %v228, %v228
    %v261 = vld [vmem:[#allocation2] sm:$0xff]
    %v262 = vld [vmem:[#allocation2 + $0x8] sm:$0xff]
    %v263 = vld [vmem:[#allocation2 + $0x10] sm:$0xff]
    %v264 = vld [vmem:[#allocation2 + $0x18] sm:$0xff]
    %v265 = vld [vmem:[#allocation2 + $0x20] sm:$0xff]
    %v266 = vld [vmem:[#allocation2 + $0x28] sm:$0xff]
    %v267 = vld [vmem:[#allocation2 + $0x30] sm:$0xff]
    %v268 = vld [vmem:[#allocation2 + $0x38] sm:$0xff]
    %v269 = vld [vmem:[#allocation2 + $0x40] sm:$0xff]
    %v270 = vld [vmem:[#allocation2 + $0x48] sm:$0xff]
    %v271 = vld [vmem:[#allocation2 + $0x50] sm:$0xff]
    %v272 = vld [vmem:[#allocation2 + $0x58] sm:$0xff]
    %v273 = vld [vmem:[#allocation2 + $0x60] sm:$0xff]
    %v274 = vld [vmem:[#allocation2 + $0x68] sm:$0xff]
    %v275 = vld [vmem:[#allocation2 + $0x70] sm:$0xff]
    %v276 = vld [vmem:[#allocation2 + $0x78] sm:$0xff]
    %v277 = vld [vmem:[#allocation2 + $0x80] sm:$0xff]
    %v278 = vld [vmem:[#allocation2 + $0x88] sm:$0xff]
    %v279 = vld [vmem:[#allocation2 + $0x90] sm:$0xff]
    %v280 = vld [vmem:[#allocation2 + $0x98] sm:$0xff]
    %v281 = vld [vmem:[#allocation2 + $0xa0] sm:$0xff]
    %v282 = vld [vmem:[#allocation2 + $0xa8] sm:$0xff]
    %v283 = vld [vmem:[#allocation2 + $0xb0] sm:$0xff]
    %v284 = vld [vmem:[#allocation2 + $0xb8] sm:$0xff]
    %v285 = vld [vmem:[#allocation2 + $0xc0] sm:$0xff]
    %v286 = vld [vmem:[#allocation2 + $0xc8] sm:$0xff]
    %v287 = vld [vmem:[#allocation2 + $0xd0] sm:$0xff]
    %v288 = vld [vmem:[#allocation2 + $0xd8] sm:$0xff]
    %v289 = vld [vmem:[#allocation2 + $0xe0] sm:$0xff]
    %v290 = vld [vmem:[#allocation2 + $0xe8] sm:$0xff]
    %v291 = vld [vmem:[#allocation2 + $0xf0] sm:$0xff]
    %v292 = vld [vmem:[#allocation2 + $0xf8] sm:$0xff]
    %v293 = vld [vmem:[#allocation2 + $0x100] sm:$0xff]
    %v294 = vld [vmem:[#allocation2 + $0x108] sm:$0xff]
    %v295 = vld [vmem:[#allocation2 + $0x110] sm:$0xff]
    %v296 = vld [vmem:[#allocation2 + $0x118] sm:$0xff]
    %v297 = vld [vmem:[#allocation2 + $0x120] sm:$0xff]
    %v298 = vld [vmem:[#allocation2 + $0x128] sm:$0xff]
    %v299 = vld [vmem:[#allocation2 + $0x130] sm:$0xff]
    %v300 = vld [vmem:[#allocation2 + $0x138] sm:$0xff]
    %v301 = vld [vmem:[#allocation2 + $0x140] sm:$0xff]
    %v302 = vld [vmem:[#allocation2 + $0x148] sm:$0xff]
    %v303 = vld [vmem:[#allocation2 + $0x150] sm:$0xff]
    %v304 = vld [vmem:[#allocation2 + $0x158] sm:$0xff]
    %v305 = vld [vmem:[#allocation2 + $0x160] sm:$0xff]
    %v306 = vld [vmem:[#allocation2 + $0x168] sm:$0xff]
    %v307 = vld [vmem:[#allocation2 + $0x170] sm:$0xff]
    %v308 = vld [vmem:[#allocation2 + $0x178] sm:$0xff]
    %v309 = vld [vmem:[#allocation2 + $0x180] sm:$0xff]
    %v310 = vld [vmem:[#allocation2 + $0x188] sm:$0xff]
    %v311 = vld [vmem:[#allocation2 + $0x190] sm:$0xff]
    %v312 = vld [vmem:[#allocation2 + $0x198] sm:$0xff]
    %v313 = vld [vmem:[#allocation2 + $0x1a0] sm:$0xff]
    %v314 = vld [vmem:[#allocation2 + $0x1a8] sm:$0xff]
    %v315 = vld [vmem:[#allocation2 + $0x1b0] sm:$0xff]
    %v316 = vld [vmem:[#allocation2 + $0x1b8] sm:$0xff]
    %v317 = vld [vmem:[#allocation2 + $0x1c0] sm:$0xff]
    %v318 = vld [vmem:[#allocation2 + $0x1c8] sm:$0xff]
    %v319 = vld [vmem:[#allocation2 + $0x1d0] sm:$0xff]
    %v320 = vld [vmem:[#allocation2 + $0x1d8] sm:$0xff]
    %v321 = vld [vmem:[#allocation2 + $0x1e0] sm:$0xff]
    %v322 = vld [vmem:[#allocation2 + $0x1e8] sm:$0xff]
    %v323 = vld [vmem:[#allocation2 + $0x1f0] sm:$0xff]
    %v324 = vld [vmem:[#allocation2 + $0x1f8] sm:$0xff]
    %325 = vmatprep.subr.mxu0 0.0
    %326 = vmatpush1.msra.mxu0 %v229
    %327 = vmatprep.subr.mxu0 0.0
    %328 = vmatpush1.msra.mxu0 %v230
    %329 = vmatprep.subr.mxu0 0.0
    %330 = vmatpush1.msra.mxu0 %v231
    %331 = vmatprep.subr.mxu0 0.0
    %332 = vmatpush1.msra.mxu0 %v232
    %333 = vmatprep.subr.mxu0 0.0
    %334 = vmatpush1.msra.mxu0 %v233
    %335 = vmatprep.subr.mxu0 0.0
    %336 = vmatpush1.msra.mxu0 %v234
    %337 = vmatprep.subr.mxu0 0.0
    %338 = vmatpush1.msra.mxu0 %v235
    %339 = vmatprep.subr.mxu0 0.0
    %340 = vmatpush1.msra.mxu0 %v236
    %341 = vmatprep.subr.mxu0 0.0
    %342 = vmatpush1.msra.mxu0 %v237
    %343 = vmatprep.subr.mxu0 0.0
    %344 = vmatpush1.msra.mxu0 %v238
    %345 = vmatprep.subr.mxu0 0.0
    %346 = vmatpush1.msra.mxu0 %v239
    %347 = vmatprep.subr.mxu0 0.0
    %348 = vmatpush1.msra.mxu0 %v240
    %349 = vmatprep.subr.mxu0 0.0
    %350 = vmatpush1.msra.mxu0 %v241
    %351 = vmatprep.subr.mxu0 0.0
    %352 = vmatpush1.msra.mxu0 %v242
    %353 = vmatprep.subr.mxu0 0.0
    %354 = vmatpush1.msra.mxu0 %v243
    %355 = vmatprep.subr.mxu0 0.0
    %356 = vmatpush1.msra.mxu0 %v244
    %357 = vmatprep.subr.mxu0 0.0
    %358 = vmatpush1.msra.mxu0 %v245
    %359 = vmatprep.subr.mxu0 0.0
    %360 = vmatpush1.msra.mxu0 %v246
    %361 = vmatprep.subr.mxu0 0.0
    %362 = vmatpush1.msra.mxu0 %v247
    %363 = vmatprep.subr.mxu0 0.0
    %364 = vmatpush1.msra.mxu0 %v248
    %365 = vmatprep.subr.mxu0 0.0
    %366 = vmatpush1.msra.mxu0 %v249
    %367 = vmatprep.subr.mxu0 0.0
    %368 = vmatpush1.msra.mxu0 %v250
    %369 = vmatprep.subr.mxu0 0.0
    %370 = vmatpush1.msra.mxu0 %v251
    %371 = vmatprep.subr.mxu0 0.0
    %372 = vmatpush1.msra.mxu0 %v252
    %373 = vmatprep.subr.mxu0 0.0
    %374 = vmatpush1.msra.mxu0 %v253
    %375 = vmatprep.subr.mxu0 0.0
    %376 = vmatpush1.msra.mxu0 %v254
    %377 = vmatprep.subr.mxu0 0.0
    %378 = vmatpush1.msra.mxu0 %v255
    %379 = vmatprep.subr.mxu0 0.0
    %380 = vmatpush1.msra.mxu0 %v256
    %381 = vmatprep.subr.mxu0 0.0
    %382 = vmatpush1.msra.mxu0 %v257
    %383 = vmatprep.subr.mxu0 0.0
    %384 = vmatpush1.msra.mxu0 %v258
    %385 = vmatprep.subr.mxu0 0.0
    %386 = vmatpush1.msra.mxu0 %v259
    %387 = vmatprep.subr.mxu0 0.0
    %388 = vmatpush1.msra.mxu0 %v260
    %389 = vmatprep.mubr.f32.mxu0 %v262
    %390 = vmatmul.mubr.f32.gmra.mrb[0].mxu0 %v261
    %v391 = vpop.f32.mrb[0].mxu0
    %v392 = vadd.f32 0.0, %v391
    %v393 = vpop.f32.mrb[0].mxu0
    %394 = vmatprep.mubr.f32.mxu0 %v264
    %395 = vmatmul.mubr.f32.gmra.mrb[0].mxu0 %v263
    %v396 = vpop.f32.mrb[0].mxu0
    %v397 = vadd.f32 0.0, %v396
    %v398 = vpop.f32.mrb[0].mxu0
    %399 = vmatprep.mubr.f32.mxu0 %v266
    %400 = vmatmul.mubr.f32.gmra.mrb[0].mxu0 %v265
    %v401 = vpop.f32.mrb[0].mxu0
    %v402 = vadd.f32 0.0, %v401
    %v403 = vpop.f32.mrb[0].mxu0
    %404 = vmatprep.mubr.f32.mxu0 %v268
    %405 = vmatmul.mubr.f32.gmra.mrb[0].mxu0 %v267
    %v406 = vpop.f32.mrb[0].mxu0
    %v407 = vadd.f32 0.0, %v406
    %v408 = vpop.f32.mrb[0].mxu0
    %409 = vmatprep.mubr.f32.mxu0 %v270
    %410 = vmatmul.mubr.f32.gmra.mrb[0].mxu0 %v269
    %v411 = vpop.f32.mrb[0].mxu0
    %v412 = vadd.f32 0.0, %v411
    %v413 = vpop.f32.mrb[0].mxu0
    %414 = vmatprep.mubr.f32.mxu0 %v272
    %415 = vmatmul.mubr.f32.gmra.mrb[0].mxu0 %v271
    %v416 = vpop.f32.mrb[0].mxu0
    %v417 = vadd.f32 0.0, %v416
    %v418 = vpop.f32.mrb[0].mxu0
    %419 = vmatprep.mubr.f32.mxu0 %v274
    %420 = vmatmul.mubr.f32.gmra.mrb[0].mxu0 %v273
    %v421 = vpop.f32.mrb[0].mxu0
    %v422 = vadd.f32 0.0, %v421
    %v423 = vpop.f32.mrb[0].mxu0
    %424 = vmatprep.mubr.f32.mxu0 %v276
    %425 = vmatmul.mubr.f32.gmra.mrb[0].mxu0 %v275
    %v426 = vpop.f32.mrb[0].mxu0
    %v427 = vadd.f32 0.0, %v426
    %v428 = vpop.f32.mrb[0].mxu0
    %429 = vmatprep.mubr.f32.mxu0 %v278
    %430 = vmatmul.mubr.f32.gmra.mrb[0].mxu0 %v277
    %v431 = vpop.f32.mrb[0].mxu0
    %v432 = vadd.f32 0.0, %v431
    %v433 = vpop.f32.mrb[0].mxu0
    %434 = vmatprep.mubr.f32.mxu0 %v280
    %435 = vmatmul.mubr.f32.gmra.mrb[0].mxu0 %v279
    %v436 = vpop.f32.mrb[0].mxu0
    %v437 = vadd.f32 0.0, %v436
    %v438 = vpop.f32.mrb[0].mxu0
    %439 = vmatprep.mubr.f32.mxu0 %v282
    %440 = vmatmul.mubr.f32.gmra.mrb[0].mxu0 %v281
    %v441 = vpop.f32.mrb[0].mxu0
    %v442 = vadd.f32 0.0, %v441
    %v443 = vpop.f32.mrb[0].mxu0
    %444 = vmatprep.mubr.f32.mxu0 %v284
    %445 = vmatmul.mubr.f32.gmra.mrb[0].mxu0 %v283
    %v446 = vpop.f32.mrb[0].mxu0
    %v447 = vadd.f32 0.0, %v446
    %v448 = vpop.f32.mrb[0].mxu0
    %449 = vmatprep.mubr.f32.mxu0 %v286
    %450 = vmatmul.mubr.f32.gmra.mrb[0].mxu0 %v285
    %v451 = vpop.f32.mrb[0].mxu0
    %v452 = vadd.f32 0.0, %v451
    %v453 = vpop.f32.mrb[0].mxu0
    %454 = vmatprep.mubr.f32.mxu0 %v288
    %455 = vmatmul.mubr.f32.gmra.mrb[0].mxu0 %v287
    %v456 = vpop.f32.mrb[0].mxu0
    %v457 = vadd.f32 0.0, %v456
    %v458 = vpop.f32.mrb[0].mxu0
    %459 = vmatprep.mubr.f32.mxu0 %v290
    %460 = vmatmul.mubr.f32.gmra.mrb[0].mxu0 %v289
    %v461 = vpop.f32.mrb[0].mxu0
    %v462 = vadd.f32 0.0, %v461
    %v463 = vpop.f32.mrb[0].mxu0
    %464 = vmatprep.mubr.f32.mxu0 %v292
    %465 = vmatmul.mubr.f32.gmra.mrb[0].mxu0 %v291
    %v466 = vpop.f32.mrb[0].mxu0
    %v467 = vadd.f32 0.0, %v466
    %v468 = vpop.f32.mrb[0].mxu0
    %469 = vmatprep.mubr.f32.mxu0 %v294
    %470 = vmatmul.mubr.f32.gmra.mrb[0].mxu0 %v293
    %v471 = vpop.f32.mrb[0].mxu0
    %v472 = vadd.f32 0.0, %v471
    %v473 = vpop.f32.mrb[0].mxu0
    %474 = vmatprep.mubr.f32.mxu0 %v296
    %475 = vmatmul.mubr.f32.gmra.mrb[0].mxu0 %v295
    %v476 = vpop.f32.mrb[0].mxu0
    %v477 = vadd.f32 0.0, %v476
    %v478 = vpop.f32.mrb[0].mxu0
    %479 = vmatprep.mubr.f32.mxu0 %v298
    %480 = vmatmul.mubr.f32.gmra.mrb[0].mxu0 %v297
    %v481 = vpop.f32.mrb[0].mxu0
    %v482 = vadd.f32 0.0, %v481
    %v483 = vpop.f32.mrb[0].mxu0
    %484 = vmatprep.mubr.f32.mxu0 %v300
    %485 = vmatmul.mubr.f32.gmra.mrb[0].mxu0 %v299
    %v486 = vpop.f32.mrb[0].mxu0
    %v487 = vadd.f32 0.0, %v486
    %v488 = vpop.f32.mrb[0].mxu0
    %489 = vmatprep.mubr.f32.mxu0 %v302
    %490 = vmatmul.mubr.f32.gmra.mrb[0].mxu0 %v301
    %v491 = vpop.f32.mrb[0].mxu0
    %v492 = vadd.f32 0.0, %v491
    %v493 = vpop.f32.mrb[0].mxu0
    %494 = vmatprep.mubr.f32.mxu0 %v304
    %495 = vmatmul.mubr.f32.gmra.mrb[0].mxu0 %v303
    %v496 = vpop.f32.mrb[0].mxu0
    %v497 = vadd.f32 0.0, %v496
    %v498 = vpop.f32.mrb[0].mxu0
    %499 = vmatprep.mubr.f32.mxu0 %v306
    %500 = vmatmul.mubr.f32.gmra.mrb[0].mxu0 %v305
    %v501 = vpop.f32.mrb[0].mxu0
    %v502 = vadd.f32 0.0, %v501
    %v503 = vpop.f32.mrb[0].mxu0
    %504 = vmatprep.mubr.f32.mxu0 %v308
    %505 = vmatmul.mubr.f32.gmra.mrb[0].mxu0 %v307
    %v506 = vpop.f32.mrb[0].mxu0
    %v507 = vadd.f32 0.0, %v506
    %v508 = vpop.f32.mrb[0].mxu0
    %509 = vmatprep.mubr.f32.mxu0 %v310
    %510 = vmatmul.mubr.f32.gmra.mrb[0].mxu0 %v309
    %v511 = vpop.f32.mrb[0].mxu0
    %v512 = vadd.f32 0.0, %v511
    %v513 = vpop.f32.mrb[0].mxu0
    %514 = vmatprep.mubr.f32.mxu0 %v312
    %515 = vmatmul.mubr.f32.gmra.mrb[0].mxu0 %v311
    %v516 = vpop.f32.mrb[0].mxu0
    %v517 = vadd.f32 0.0, %v516
    %v518 = vpop.f32.mrb[0].mxu0
    %519 = vmatprep.mubr.f32.mxu0 %v314
    %520 = vmatmul.mubr.f32.gmra.mrb[0].mxu0 %v313
    %v521 = vpop.f32.mrb[0].mxu0
    %v522 = vadd.f32 0.0, %v521
    %v523 = vpop.f32.mrb[0].mxu0
    %524 = vmatprep.mubr.f32.mxu0 %v316
    %525 = vmatmul.mubr.f32.gmra.mrb[0].mxu0 %v315
    %v526 = vpop.f32.mrb[0].mxu0
    %v527 = vadd.f32 0.0, %v526
    %v528 = vpop.f32.mrb[0].mxu0
    %529 = vmatprep.mubr.f32.mxu0 %v318
    %530 = vmatmul.mubr.f32.gmra.mrb[0].mxu0 %v317
    %v531 = vpop.f32.mrb[0].mxu0
    %v532 = vadd.f32 0.0, %v531
    %v533 = vpop.f32.mrb[0].mxu0
    %534 = vmatprep.mubr.f32.mxu0 %v320
    %535 = vmatmul.mubr.f32.gmra.mrb[0].mxu0 %v319
    %v536 = vpop.f32.mrb[0].mxu0
    %v537 = vadd.f32 0.0, %v536
    %v538 = vpop.f32.mrb[0].mxu0
    %539 = vmatprep.mubr.f32.mxu0 %v322
    %540 = vmatmul.mubr.f32.gmra.mrb[0].mxu0 %v321
    %v541 = vpop.f32.mrb[0].mxu0
    %v542 = vadd.f32 0.0, %v541
    %v543 = vpop.f32.mrb[0].mxu0
    %544 = vmatprep.mubr.f32.mxu0 %v324
    %545 = vmatmul.mubr.f32.gmra.mrb[0].mxu0 %v323
    %v546 = vpop.f32.mrb[0].mxu0
    %v547 = vadd.f32 0.0, %v546
    %v548 = vpop.f32.mrb[0].mxu0
    %549 = vdwg.mxu0
    %vm550 = vcmask 785408
    %v551 = vsel %vm550, %v392, 0.0
    %552 = vadd.xlane.f32.xlu0 %v551
    %v553 = vpop.xlane.xlu0 %552
    %v554 = vsel %vm550, %v397, 0.0
    %555 = vadd.xlane.f32.xlu0 %v554
    %v556 = vpop.xlane.xlu0 %555
    %v557 = vsel %vm550, %v402, 0.0
    %558 = vadd.xlane.f32.xlu0 %v557
    %v559 = vpop.xlane.xlu0 %558
    %v560 = vsel %vm550, %v407, 0.0
    %561 = vadd.xlane.f32.xlu0 %v560
    %v562 = vpop.xlane.xlu0 %561
    %v563 = vsel %vm550, %v412, 0.0
    %564 = vadd.xlane.f32.xlu0 %v563
    %v565 = vpop.xlane.xlu0 %564
    %v566 = vsel %vm550, %v417, 0.0
    %567 = vadd.xlane.f32.xlu0 %v566
    %v568 = vpop.xlane.xlu0 %567
    %v569 = vsel %vm550, %v422, 0.0
    %570 = vadd.xlane.f32.xlu0 %v569
    %v571 = vpop.xlane.xlu0 %570
    %v572 = vsel %vm550, %v427, 0.0
    %573 = vadd.xlane.f32.xlu0 %v572
    %v574 = vpop.xlane.xlu0 %573
    %v575 = vsel %vm550, %v432, 0.0
    %576 = vadd.xlane.f32.xlu0 %v575
    %v577 = vpop.xlane.xlu0 %576
    %v578 = vsel %vm550, %v437, 0.0
    %579 = vadd.xlane.f32.xlu0 %v578
    %v580 = vpop.xlane.xlu0 %579
    %v581 = vsel %vm550, %v442, 0.0
    %582 = vadd.xlane.f32.xlu0 %v581
    %v583 = vpop.xlane.xlu0 %582
    %v584 = vsel %vm550, %v447, 0.0
    %585 = vadd.xlane.f32.xlu0 %v584
    %v586 = vpop.xlane.xlu0 %585
    %v587 = vsel %vm550, %v452, 0.0
    %588 = vadd.xlane.f32.xlu0 %v587
    %v589 = vpop.xlane.xlu0 %588
    %v590 = vsel %vm550, %v457, 0.0
    %591 = vadd.xlane.f32.xlu0 %v590
    %v592 = vpop.xlane.xlu0 %591
    %v593 = vsel %vm550, %v462, 0.0
    %594 = vadd.xlane.f32.xlu0 %v593
    %v595 = vpop.xlane.xlu0 %594
    %v596 = vsel %vm550, %v467, 0.0
    %597 = vadd.xlane.f32.xlu0 %v596
    %v598 = vpop.xlane.xlu0 %597
    %v599 = vsel %vm550, %v472, 0.0
    %600 = vadd.xlane.f32.xlu0 %v599
    %v601 = vpop.xlane.xlu0 %600
    %v602 = vsel %vm550, %v477, 0.0
    %603 = vadd.xlane.f32.xlu0 %v602
    %v604 = vpop.xlane.xlu0 %603
    %v605 = vsel %vm550, %v482, 0.0
    %606 = vadd.xlane.f32.xlu0 %v605
    %v607 = vpop.xlane.xlu0 %606
    %v608 = vsel %vm550, %v487, 0.0
    %609 = vadd.xlane.f32.xlu0 %v608
    %v610 = vpop.xlane.xlu0 %609
    %v611 = vsel %vm550, %v492, 0.0
    %612 = vadd.xlane.f32.xlu0 %v611
    %v613 = vpop.xlane.xlu0 %612
    %v614 = vsel %vm550, %v497, 0.0
    %615 = vadd.xlane.f32.xlu0 %v614
    %v616 = vpop.xlane.xlu0 %615
    %v617 = vsel %vm550, %v502, 0.0
    %618 = vadd.xlane.f32.xlu0 %v617
    %v619 = vpop.xlane.xlu0 %618
    %v620 = vsel %vm550, %v507, 0.0
    %621 = vadd.xlane.f32.xlu0 %v620
    %v622 = vpop.xlane.xlu0 %621
    %v623 = vsel %vm550, %v512, 0.0
    %624 = vadd.xlane.f32.xlu0 %v623
    %v625 = vpop.xlane.xlu0 %624
    %v626 = vsel %vm550, %v517, 0.0
    %627 = vadd.xlane.f32.xlu0 %v626
    %v628 = vpop.xlane.xlu0 %627
    %v629 = vsel %vm550, %v522, 0.0
    %630 = vadd.xlane.f32.xlu0 %v629
    %v631 = vpop.xlane.xlu0 %630
    %v632 = vsel %vm550, %v527, 0.0
    %633 = vadd.xlane.f32.xlu0 %v632
    %v634 = vpop.xlane.xlu0 %633
    %v635 = vsel %vm550, %v532, 0.0
    %636 = vadd.xlane.f32.xlu0 %v635
    %v637 = vpop.xlane.xlu0 %636
    %v638 = vsel %vm550, %v537, 0.0
    %639 = vadd.xlane.f32.xlu0 %v638
    %v640 = vpop.xlane.xlu0 %639
    %v641 = vsel %vm550, %v542, 0.0
    %642 = vadd.xlane.f32.xlu0 %v641
    %v643 = vpop.xlane.xlu0 %642
    %v644 = vsel %vm550, %v547, 0.0
    %645 = vadd.xlane.f32.xlu0 %v644
    %v646 = vpop.xlane.xlu0 %645
    %v647 = vrsqrt.pop %v553
    %v648 = vrsqrt.pop %v556
    %v649 = vrsqrt.pop %v559
    %v650 = vrsqrt.pop %v562
    %v651 = vrsqrt.pop %v565
    %v652 = vrsqrt.pop %v568
    %v653 = vrsqrt.pop %v571
    %v654 = vrsqrt.pop %v574
    %v655 = vrsqrt.pop %v577
    %v656 = vrsqrt.pop %v580
    %v657 = vrsqrt.pop %v583
    %v658 = vrsqrt.pop %v586
    %v659 = vrsqrt.pop %v589
    %v660 = vrsqrt.pop %v592
    %v661 = vrsqrt.pop %v595
    %v662 = vrsqrt.pop %v598
    %v663 = vrsqrt.pop %v601
    %v664 = vrsqrt.pop %v604
    %v665 = vrsqrt.pop %v607
    %v666 = vrsqrt.pop %v610
    %v667 = vrsqrt.pop %v613
    %v668 = vrsqrt.pop %v616
    %v669 = vrsqrt.pop %v619
    %v670 = vrsqrt.pop %v622
    %v671 = vrsqrt.pop %v625
    %v672 = vrsqrt.pop %v628
    %v673 = vrsqrt.pop %v631
    %v674 = vrsqrt.pop %v634
    %v675 = vrsqrt.pop %v637
    %v676 = vrsqrt.pop %v640
    %v677 = vrsqrt.pop %v643
    %v678 = vrsqrt.pop %v646
    %v679 = vmul.f32 %v197, %v647
    %v680 = vmul.f32 %v198, %v648
    %v681 = vmul.f32 %v199, %v649
    %v682 = vmul.f32 %v200, %v650
    %v683 = vmul.f32 %v201, %v651
    %v684 = vmul.f32 %v202, %v652
    %v685 = vmul.f32 %v203, %v653
    %v686 = vmul.f32 %v204, %v654
    %v687 = vmul.f32 %v205, %v655
    %v688 = vmul.f32 %v206, %v656
    %v689 = vmul.f32 %v207, %v657
    %v690 = vmul.f32 %v208, %v658
    %v691 = vmul.f32 %v209, %v659
    %v692 = vmul.f32 %v210, %v660
    %v693 = vmul.f32 %v211, %v661
    %v694 = vmul.f32 %v212, %v662
    %v695 = vmul.f32 %v213, %v663
    %v696 = vmul.f32 %v214, %v664
    %v697 = vmul.f32 %v215, %v665
    %v698 = vmul.f32 %v216, %v666
    %v699 = vmul.f32 %v217, %v667
    %v700 = vmul.f32 %v218, %v668
    %v701 = vmul.f32 %v219, %v669
    %v702 = vmul.f32 %v220, %v670
    %v703 = vmul.f32 %v221, %v671
    %v704 = vmul.f32 %v222, %v672
    %v705 = vmul.f32 %v223, %v673
    %v706 = vmul.f32 %v224, %v674
    %v707 = vmul.f32 %v225, %v675
    %v708 = vmul.f32 %v226, %v676
    %v709 = vmul.f32 %v227, %v677
    %v710 = vmul.f32 %v228, %v678
    %v711 = vld [vmem:[%s2] sm:$0xff]
    %v712 = vld [vmem:[%s2 + $0x8] sm:$0xff]
    %v713 = vld [vmem:[%s2 + $0x10] sm:$0xff]
    %v714 = vld [vmem:[%s2 + $0x18] sm:$0xff]
    %v715 = vld [vmem:[%s2 + $0x20] sm:$0xff]
    %v716 = vld [vmem:[%s2 + $0x28] sm:$0xff]
    %v717 = vld [vmem:[%s2 + $0x30] sm:$0xff]
    %v718 = vld [vmem:[%s2 + $0x38] sm:$0xff]
    %v719 = vld [vmem:[%s2 + $0x40] sm:$0xff]
    %v720 = vld [vmem:[%s2 + $0x48] sm:$0xff]
    %v721 = vld [vmem:[%s2 + $0x50] sm:$0xff]
    %v722 = vld [vmem:[%s2 + $0x58] sm:$0xff]
    %v723 = vld [vmem:[%s2 + $0x60] sm:$0xff]
    %v724 = vld [vmem:[%s2 + $0x68] sm:$0xff]
    %v725 = vld [vmem:[%s2 + $0x70] sm:$0xff]
    %v726 = vld [vmem:[%s2 + $0x78] sm:$0xff]
    %v727 = vld [vmem:[%s2 + $0x80] sm:$0xff]
    %v728 = vld [vmem:[%s2 + $0x88] sm:$0xff]
    %v729 = vld [vmem:[%s2 + $0x90] sm:$0xff]
    %v730 = vld [vmem:[%s2 + $0x98] sm:$0xff]
    %v731 = vld [vmem:[%s2 + $0xa0] sm:$0xff]
    %v732 = vld [vmem:[%s2 + $0xa8] sm:$0xff]
    %v733 = vld [vmem:[%s2 + $0xb0] sm:$0xff]
    %v734 = vld [vmem:[%s2 + $0xb8] sm:$0xff]
    %v735 = vld [vmem:[%s2 + $0xc0] sm:$0xff]
    %v736 = vld [vmem:[%s2 + $0xc8] sm:$0xff]
    %v737 = vld [vmem:[%s2 + $0xd0] sm:$0xff]
    %v738 = vld [vmem:[%s2 + $0xd8] sm:$0xff]
    %v739 = vld [vmem:[%s2 + $0xe0] sm:$0xff]
    %v740 = vld [vmem:[%s2 + $0xe8] sm:$0xff]
    %v741 = vld [vmem:[%s2 + $0xf0] sm:$0xff]
    %v742 = vld [vmem:[%s2 + $0xf8] sm:$0xff]
    %v743 = vld [vmem:[%s2 + $0x100] sm:$0xff]
    %v744 = vld [vmem:[%s2 + $0x108] sm:$0xff]
    %v745 = vld [vmem:[%s2 + $0x110] sm:$0xff]
    %v746 = vld [vmem:[%s2 + $0x118] sm:$0xff]
    %v747 = vld [vmem:[%s2 + $0x120] sm:$0xff]
    %v748 = vld [vmem:[%s2 + $0x128] sm:$0xff]
    %v749 = vld [vmem:[%s2 + $0x130] sm:$0xff]
    %v750 = vld [vmem:[%s2 + $0x138] sm:$0xff]
    %v751 = vld [vmem:[%s2 + $0x140] sm:$0xff]
    %v752 = vld [vmem:[%s2 + $0x148] sm:$0xff]
    %v753 = vld [vmem:[%s2 + $0x150] sm:$0xff]
    %v754 = vld [vmem:[%s2 + $0x158] sm:$0xff]
    %v755 = vld [vmem:[%s2 + $0x160] sm:$0xff]
    %v756 = vld [vmem:[%s2 + $0x168] sm:$0xff]
    %v757 = vld [vmem:[%s2 + $0x170] sm:$0xff]
    %v758 = vld [vmem:[%s2 + $0x178] sm:$0xff]
    %v759 = vld [vmem:[%s2 + $0x180] sm:$0xff]
    %v760 = vld [vmem:[%s2 + $0x188] sm:$0xff]
    %v761 = vld [vmem:[%s2 + $0x190] sm:$0xff]
    %v762 = vld [vmem:[%s2 + $0x198] sm:$0xff]
    %v763 = vld [vmem:[%s2 + $0x1a0] sm:$0xff]
    %v764 = vld [vmem:[%s2 + $0x1a8] sm:$0xff]
    %v765 = vld [vmem:[%s2 + $0x1b0] sm:$0xff]
    %v766 = vld [vmem:[%s2 + $0x1b8] sm:$0xff]
    %v767 = vld [vmem:[%s2 + $0x1c0] sm:$0xff]
    %v768 = vld [vmem:[%s2 + $0x1c8] sm:$0xff]
    %v769 = vld [vmem:[%s2 + $0x1d0] sm:$0xff]
    %v770 = vld [vmem:[%s2 + $0x1d8] sm:$0xff]
    %v771 = vld [vmem:[%s2 + $0x1e0] sm:$0xff]
    %v772 = vld [vmem:[%s2 + $0x1e8] sm:$0xff]
    %v773 = vld [vmem:[%s2 + $0x1f0] sm:$0xff]
    %v774 = vld [vmem:[%s2 + $0x1f8] sm:$0xff]
    %v775 = vld [vmem:[%s2 + $0x200] sm:$0xff]
    %v776 = vld [vmem:[%s2 + $0x208] sm:$0xff]
    %v777 = vld [vmem:[%s2 + $0x210] sm:$0xff]
    %v778 = vld [vmem:[%s2 + $0x218] sm:$0xff]
    %v779 = vld [vmem:[%s2 + $0x220] sm:$0xff]
    %v780 = vld [vmem:[%s2 + $0x228] sm:$0xff]
    %v781 = vld [vmem:[%s2 + $0x230] sm:$0xff]
    %v782 = vld [vmem:[%s2 + $0x238] sm:$0xff]
    %v783 = vld [vmem:[%s2 + $0x240] sm:$0xff]
    %v784 = vld [vmem:[%s2 + $0x248] sm:$0xff]
    %v785 = vld [vmem:[%s2 + $0x250] sm:$0xff]
    %v786 = vld [vmem:[%s2 + $0x258] sm:$0xff]
    %v787 = vld [vmem:[%s2 + $0x260] sm:$0xff]
    %v788 = vld [vmem:[%s2 + $0x268] sm:$0xff]
    %v789 = vld [vmem:[%s2 + $0x270] sm:$0xff]
    %v790 = vld [vmem:[%s2 + $0x278] sm:$0xff]
    %v791 = vld [vmem:[%s2 + $0x280] sm:$0xff]
    %v792 = vld [vmem:[%s2 + $0x288] sm:$0xff]
    %v793 = vld [vmem:[%s2 + $0x290] sm:$0xff]
    %v794 = vld [vmem:[%s2 + $0x298] sm:$0xff]
    %v795 = vld [vmem:[%s2 + $0x2a0] sm:$0xff]
    %v796 = vld [vmem:[%s2 + $0x2a8] sm:$0xff]
    %v797 = vld [vmem:[%s2 + $0x2b0] sm:$0xff]
    %v798 = vld [vmem:[%s2 + $0x2b8] sm:$0xff]
    %v799 = vld [vmem:[%s2 + $0x2c0] sm:$0xff]
    %v800 = vld [vmem:[%s2 + $0x2c8] sm:$0xff]
    %v801 = vld [vmem:[%s2 + $0x2d0] sm:$0xff]
    %v802 = vld [vmem:[%s2 + $0x2d8] sm:$0xff]
    %v803 = vld [vmem:[%s2 + $0x2e0] sm:$0xff]
    %v804 = vld [vmem:[%s2 + $0x2e8] sm:$0xff]
    %v805 = vld [vmem:[%s2 + $0x2f0] sm:$0xff]
    %v806 = vld [vmem:[%s2 + $0x2f8] sm:$0xff]
    %807 = vmatprep.subr.mxu0 0.0
    %808 = vmatpush1.msra.mxu0 %v679
    %809 = vmatprep.subr.mxu0 0.0
    %810 = vmatpush1.msra.mxu0 %v680
    %811 = vmatprep.subr.mxu0 0.0
    %812 = vmatpush1.msra.mxu0 %v681
    %813 = vmatprep.subr.mxu0 0.0
    %814 = vmatpush1.msra.mxu0 %v682
    %815 = vmatprep.subr.mxu0 0.0
    %816 = vmatpush1.msra.mxu0 %v683
    %817 = vmatprep.subr.mxu0 0.0
    %818 = vmatpush1.msra.mxu0 %v684
    %819 = vmatprep.subr.mxu0 0.0
    %820 = vmatpush1.msra.mxu0 %v685
    %821 = vmatprep.subr.mxu0 0.0
    %822 = vmatpush1.msra.mxu0 %v686
    %823 = vmatprep.subr.mxu0 0.0
    %824 = vmatpush1.msra.mxu0 %v687
    %825 = vmatprep.subr.mxu0 0.0
    %826 = vmatpush1.msra.mxu0 %v688
    %827 = vmatprep.subr.mxu0 0.0
    %828 = vmatpush1.msra.mxu0 %v689
    %829 = vmatprep.subr.mxu0 0.0
    %830 = vmatpush1.msra.mxu0 %v690
    %831 = vmatprep.subr.mxu0 0.0
    %832 = vmatpush1.msra.mxu0 %v691
    %833 = vmatprep.subr.mxu0 0.0
    %834 = vmatpush1.msra.mxu0 %v692
    %835 = vmatprep.subr.mxu0 0.0
    %836 = vmatpush1.msra.mxu0 %v693
    %837 = vmatprep.subr.mxu0 0.0
    %838 = vmatpush1.msra.mxu0 %v694
    %839 = vmatprep.subr.mxu0 0.0
    %840 = vmatpush1.msra.mxu0 %v695
    %841 = vmatprep.subr.mxu0 0.0
    %842 = vmatpush1.msra.mxu0 %v696
    %843 = vmatprep.subr.mxu0 0.0
    %844 = vmatpush1.msra.mxu0 %v697
    %845 = vmatprep.subr.mxu0 0.0
    %846 = vmatpush1.msra.mxu0 %v698
    %847 = vmatprep.subr.mxu0 0.0
    %848 = vmatpush1.msra.mxu0 %v699
    %849 = vmatprep.subr.mxu0 0.0
    %850 = vmatpush1.msra.mxu0 %v700
    %851 = vmatprep.subr.mxu0 0.0
    %852 = vmatpush1.msra.mxu0 %v701
    %853 = vmatprep.subr.mxu0 0.0
    %854 = vmatpush1.msra.mxu0 %v702
    %855 = vmatprep.subr.mxu0 0.0
    %856 = vmatpush1.msra.mxu0 %v703
    %857 = vmatprep.subr.mxu0 0.0
    %858 = vmatpush1.msra.mxu0 %v704
    %859 = vmatprep.subr.mxu0 0.0
    %860 = vmatpush1.msra.mxu0 %v705
    %861 = vmatprep.subr.mxu0 0.0
    %862 = vmatpush1.msra.mxu0 %v706
    %863 = vmatprep.subr.mxu0 0.0
    %864 = vmatpush1.msra.mxu0 %v707
    %865 = vmatprep.subr.mxu0 0.0
    %866 = vmatpush1.msra.mxu0 %v708
    %867 = vmatprep.subr.mxu0 0.0
    %868 = vmatpush1.msra.mxu0 %v709
    %869 = vmatprep.subr.mxu0 0.0
    %870 = vmatpush1.msra.mxu0 %v710
    %871 = vmatprep.mubr.f32.mxu0 %v712
    %872 = vmatmul.mubr.f32.gmra.mrb[0].mxu0 %v711
    %v873 = vpop.f32.mrb[0].mxu0
    %v874 = vadd.f32 0.0, %v873
    %v875 = vpop.f32.mrb[0].mxu0
    %876 = vmatprep.mubr.f32.mxu0 %v714
    %877 = vmatmul.mubr.f32.gmra.mrb[0].mxu0 %v713
    %v878 = vpop.f32.mrb[0].mxu0
    %v879 = vadd.f32 0.0, %v878
    %v880 = vpop.f32.mrb[0].mxu0
    %881 = vmatprep.mubr.f32.mxu0 %v716
    %882 = vmatmul.mubr.f32.gmra.mrb[0].mxu0 %v715
    %v883 = vpop.f32.mrb[0].mxu0
    %v884 = vadd.f32 0.0, %v883
    %v885 = vpop.f32.mrb[0].mxu0
    %886 = vmatprep.mubr.f32.mxu0 %v718
    %887 = vmatmul.mubr.f32.gmra.mrb[0].mxu0 %v717
    %v888 = vpop.f32.mrb[0].mxu0
    %v889 = vadd.f32 0.0, %v888
    %v890 = vpop.f32.mrb[0].mxu0
    %891 = vmatprep.mubr.f32.mxu0 %v720
    %892 = vmatmul.mubr.f32.gmra.mrb[0].mxu0 %v719
    %v893 = vpop.f32.mrb[0].mxu0
    %v894 = vadd.f32 0.0, %v893
    %v895 = vpop.f32.mrb[0].mxu0
    %896 = vmatprep.mubr.f32.mxu0 %v722
    %897 = vmatmul.mubr.f32.gmra.mrb[0].mxu0 %v721
    %v898 = vpop.f32.mrb[0].mxu0
    %v899 = vadd.f32 0.0, %v898
    %v900 = vpop.f32.mrb[0].mxu0
    %901 = vmatprep.mubr.f32.mxu0 %v724
    %902 = vmatmul.mubr.f32.gmra.mrb[0].mxu0 %v723
    %v903 = vpop.f32.mrb[0].mxu0
    %v904 = vadd.f32 0.0, %v903
    %v905 = vpop.f32.mrb[0].mxu0
    %906 = vmatprep.mubr.f32.mxu0 %v726
    %907 = vmatmul.mubr.f32.gmra.mrb[0].mxu0 %v725
    %v908 = vpop.f32.mrb[0].mxu0
    %v909 = vadd.f32 0.0, %v908
    %v910 = vpop.f32.mrb[0].mxu0
    %911 = vmatprep.mubr.f32.mxu0 %v728
    %912 = vmatmul.mubr.f32.gmra.mrb[0].mxu0 %v727
    %v913 = vpop.f32.mrb[0].mxu0
    %v914 = vadd.f32 0.0, %v913
    %v915 = vpop.f32.mrb[0].mxu0
    %916 = vmatprep.mubr.f32.mxu0 %v730
    %917 = vmatmul.mubr.f32.gmra.mrb[0].mxu0 %v729
    %v918 = vpop.f32.mrb[0].mxu0
    %v919 = vadd.f32 0.0, %v918
    %v920 = vpop.f32.mrb[0].mxu0
    %921 = vmatprep.mubr.f32.mxu0 %v732
    %922 = vmatmul.mubr.f32.gmra.mrb[0].mxu0 %v731
    %v923 = vpop.f32.mrb[0].mxu0
    %v924 = vadd.f32 0.0, %v923
    %v925 = vpop.f32.mrb[0].mxu0
    %926 = vmatprep.mubr.f32.mxu0 %v734
    %927 = vmatmul.mubr.f32.gmra.mrb[0].mxu0 %v733
    %v928 = vpop.f32.mrb[0].mxu0
    %v929 = vadd.f32 0.0, %v928
    %v930 = vpop.f32.mrb[0].mxu0
    %931 = vmatprep.mubr.f32.mxu0 %v736
    %932 = vmatmul.mubr.f32.gmra.mrb[0].mxu0 %v735
    %v933 = vpop.f32.mrb[0].mxu0
    %v934 = vadd.f32 0.0, %v933
    %v935 = vpop.f32.mrb[0].mxu0
    %936 = vmatprep.mubr.f32.mxu0 %v738
    %937 = vmatmul.mubr.f32.gmra.mrb[0].mxu0 %v737
    %v938 = vpop.f32.mrb[0].mxu0
    %v939 = vadd.f32 0.0, %v938
    %v940 = vpop.f32.mrb[0].mxu0
    %941 = vmatprep.mubr.f32.mxu0 %v740
    %942 = vmatmul.mubr.f32.gmra.mrb[0].mxu0 %v739
    %v943 = vpop.f32.mrb[0].mxu0
    %v944 = vadd.f32 0.0, %v943
    %v945 = vpop.f32.mrb[0].mxu0
    %946 = vmatprep.mubr.f32.mxu0 %v742
    %947 = vmatmul.mubr.f32.gmra.mrb[0].mxu0 %v741
    %v948 = vpop.f32.mrb[0].mxu0
    %v949 = vadd.f32 0.0, %v948
    %v950 = vpop.f32.mrb[0].mxu0
    %951 = vmatprep.mubr.f32.mxu0 %v744
    %952 = vmatmul.mubr.f32.gmra.mrb[0].mxu0 %v743
    %v953 = vpop.f32.mrb[0].mxu0
    %v954 = vadd.f32 0.0, %v953
    %v955 = vpop.f32.mrb[0].mxu0
    %956 = vmatprep.mubr.f32.mxu0 %v746
    %957 = vmatmul.mubr.f32.gmra.mrb[0].mxu0 %v745
    %v958 = vpop.f32.mrb[0].mxu0
    %v959 = vadd.f32 0.0, %v958
    %v960 = vpop.f32.mrb[0].mxu0
    %961 = vmatprep.mubr.f32.mxu0 %v748
    %962 = vmatmul.mubr.f32.gmra.mrb[0].mxu0 %v747
    %v963 = vpop.f32.mrb[0].mxu0
    %v964 = vadd.f32 0.0, %v963
    %v965 = vpop.f32.mrb[0].mxu0
    %966 = vmatprep.mubr.f32.mxu0 %v750
    %967 = vmatmul.mubr.f32.gmra.mrb[0].mxu0 %v749
    %v968 = vpop.f32.mrb[0].mxu0
    %v969 = vadd.f32 0.0, %v968
    %v970 = vpop.f32.mrb[0].mxu0
    %971 = vmatprep.mubr.f32.mxu0 %v752
    %972 = vmatmul.mubr.f32.gmra.mrb[0].mxu0 %v751
    %v973 = vpop.f32.mrb[0].mxu0
    %v974 = vadd.f32 0.0, %v973
    %v975 = vpop.f32.mrb[0].mxu0
    %976 = vmatprep.mubr.f32.mxu0 %v754
    %977 = vmatmul.mubr.f32.gmra.mrb[0].mxu0 %v753
    %v978 = vpop.f32.mrb[0].mxu0
    %v979 = vadd.f32 0.0, %v978
    %v980 = vpop.f32.mrb[0].mxu0
    %981 = vmatprep.mubr.f32.mxu0 %v756
    %982 = vmatmul.mubr.f32.gmra.mrb[0].mxu0 %v755
    %v983 = vpop.f32.mrb[0].mxu0
    %v984 = vadd.f32 0.0, %v983
    %v985 = vpop.f32.mrb[0].mxu0
    %986 = vmatprep.mubr.f32.mxu0 %v758
    %987 = vmatmul.mubr.f32.gmra.mrb[0].mxu0 %v757
    %v988 = vpop.f32.mrb[0].mxu0
    %v989 = vadd.f32 0.0, %v988
    %v990 = vpop.f32.mrb[0].mxu0
    %991 = vmatprep.mubr.f32.mxu0 %v760
    %992 = vmatmul.mubr.f32.gmra.mrb[0].mxu0 %v759
    %v993 = vpop.f32.mrb[0].mxu0
    %v994 = vadd.f32 0.0, %v993
    %v995 = vpop.f32.mrb[0].mxu0
    %996 = vmatprep.mubr.f32.mxu0 %v762
    %997 = vmatmul.mubr.f32.gmra.mrb[0].mxu0 %v761
    %v998 = vpop.f32.mrb[0].mxu0
    %v999 = vadd.f32 0.0, %v998
    %v1000 = vpop.f32.mrb[0].mxu0
    %1001 = vmatprep.mubr.f32.mxu0 %v764
    %1002 = vmatmul.mubr.f32.gmra.mrb[0].mxu0 %v763
    %v1003 = vpop.f32.mrb[0].mxu0
    %v1004 = vadd.f32 0.0, %v1003
    %v1005 = vpop.f32.mrb[0].mxu0
    %1006 = vmatprep.mubr.f32.mxu0 %v766
    %1007 = vmatmul.mubr.f32.gmra.mrb[0].mxu0 %v765
    %v1008 = vpop.f32.mrb[0].mxu0
    %v1009 = vadd.f32 0.0, %v1008
    %v1010 = vpop.f32.mrb[0].mxu0
    %1011 = vmatprep.mubr.f32.mxu0 %v768
    %1012 = vmatmul.mubr.f32.gmra.mrb[0].mxu0 %v767
    %v1013 = vpop.f32.mrb[0].mxu0
    %v1014 = vadd.f32 0.0, %v1013
    %v1015 = vpop.f32.mrb[0].mxu0
    %1016 = vmatprep.mubr.f32.mxu0 %v770
    %1017 = vmatmul.mubr.f32.gmra.mrb[0].mxu0 %v769
    %v1018 = vpop.f32.mrb[0].mxu0
    %v1019 = vadd.f32 0.0, %v1018
    %v1020 = vpop.f32.mrb[0].mxu0
    %1021 = vmatprep.mubr.f32.mxu0 %v772
    %1022 = vmatmul.mubr.f32.gmra.mrb[0].mxu0 %v771
    %v1023 = vpop.f32.mrb[0].mxu0
    %v1024 = vadd.f32 0.0, %v1023
    %v1025 = vpop.f32.mrb[0].mxu0
    %1026 = vmatprep.mubr.f32.mxu0 %v774
    %1027 = vmatmul.mubr.f32.gmra.mrb[0].mxu0 %v773
    %v1028 = vpop.f32.mrb[0].mxu0
    %v1029 = vadd.f32 0.0, %v1028
    %v1030 = vpop.f32.mrb[0].mxu0
    %1031 = vmatprep.mubr.f32.mxu0 %v776
    %1032 = vmatmul.mubr.f32.gmra.mrb[0].mxu0 %v775
    %v1033 = vpop.f32.mrb[0].mxu0
    %v1034 = vadd.f32 0.0, %v1033
    %v1035 = vpop.f32.mrb[0].mxu0
    %1036 = vmatprep.mubr.f32.mxu0 %v778
    %1037 = vmatmul.mubr.f32.gmra.mrb[0].mxu0 %v777
    %v1038 = vpop.f32.mrb[0].mxu0
    %v1039 = vadd.f32 0.0, %v1038
    %v1040 = vpop.f32.mrb[0].mxu0
    %1041 = vmatprep.mubr.f32.mxu0 %v780
    %1042 = vmatmul.mubr.f32.gmra.mrb[0].mxu0 %v779
    %v1043 = vpop.f32.mrb[0].mxu0
    %v1044 = vadd.f32 0.0, %v1043
    %v1045 = vpop.f32.mrb[0].mxu0
    %1046 = vmatprep.mubr.f32.mxu0 %v782
    %1047 = vmatmul.mubr.f32.gmra.mrb[0].mxu0 %v781
    %v1048 = vpop.f32.mrb[0].mxu0
    %v1049 = vadd.f32 0.0, %v1048
    %v1050 = vpop.f32.mrb[0].mxu0
    %1051 = vmatprep.mubr.f32.mxu0 %v784
    %1052 = vmatmul.mubr.f32.gmra.mrb[0].mxu0 %v783
    %v1053 = vpop.f32.mrb[0].mxu0
    %v1054 = vadd.f32 0.0, %v1053
    %v1055 = vpop.f32.mrb[0].mxu0
    %1056 = vmatprep.mubr.f32.mxu0 %v786
    %1057 = vmatmul.mubr.f32.gmra.mrb[0].mxu0 %v785
    %v1058 = vpop.f32.mrb[0].mxu0
    %v1059 = vadd.f32 0.0, %v1058
    %v1060 = vpop.f32.mrb[0].mxu0
    %1061 = vmatprep.mubr.f32.mxu0 %v788
    %1062 = vmatmul.mubr.f32.gmra.mrb[0].mxu0 %v787
    %v1063 = vpop.f32.mrb[0].mxu0
    %v1064 = vadd.f32 0.0, %v1063
    %v1065 = vpop.f32.mrb[0].mxu0
    %1066 = vmatprep.mubr.f32.mxu0 %v790
    %1067 = vmatmul.mubr.f32.gmra.mrb[0].mxu0 %v789
    %v1068 = vpop.f32.mrb[0].mxu0
    %v1069 = vadd.f32 0.0, %v1068
    %v1070 = vpop.f32.mrb[0].mxu0
    %1071 = vmatprep.mubr.f32.mxu0 %v792
    %1072 = vmatmul.mubr.f32.gmra.mrb[0].mxu0 %v791
    %v1073 = vpop.f32.mrb[0].mxu0
    %v1074 = vadd.f32 0.0, %v1073
    %v1075 = vpop.f32.mrb[0].mxu0
    %1076 = vmatprep.mubr.f32.mxu0 %v794
    %1077 = vmatmul.mubr.f32.gmra.mrb[0].mxu0 %v793
    %v1078 = vpop.f32.mrb[0].mxu0
    %v1079 = vadd.f32 0.0, %v1078
    %v1080 = vpop.f32.mrb[0].mxu0
    %1081 = vmatprep.mubr.f32.mxu0 %v796
    %1082 = vmatmul.mubr.f32.gmra.mrb[0].mxu0 %v795
    %v1083 = vpop.f32.mrb[0].mxu0
    %v1084 = vadd.f32 0.0, %v1083
    %v1085 = vpop.f32.mrb[0].mxu0
    %1086 = vmatprep.mubr.f32.mxu0 %v798
    %1087 = vmatmul.mubr.f32.gmra.mrb[0].mxu0 %v797
    %v1088 = vpop.f32.mrb[0].mxu0
    %v1089 = vadd.f32 0.0, %v1088
    %v1090 = vpop.f32.mrb[0].mxu0
    %1091 = vmatprep.mubr.f32.mxu0 %v800
    %1092 = vmatmul.mubr.f32.gmra.mrb[0].mxu0 %v799
    %v1093 = vpop.f32.mrb[0].mxu0
    %v1094 = vadd.f32 0.0, %v1093
    %v1095 = vpop.f32.mrb[0].mxu0
    %1096 = vmatprep.mubr.f32.mxu0 %v802
    %1097 = vmatmul.mubr.f32.gmra.mrb[0].mxu0 %v801
    %v1098 = vpop.f32.mrb[0].mxu0
    %v1099 = vadd.f32 0.0, %v1098
    %v1100 = vpop.f32.mrb[0].mxu0
    %1101 = vmatprep.mubr.f32.mxu0 %v804
    %1102 = vmatmul.mubr.f32.gmra.mrb[0].mxu0 %v803
    %v1103 = vpop.f32.mrb[0].mxu0
    %v1104 = vadd.f32 0.0, %v1103
    %v1105 = vpop.f32.mrb[0].mxu0
    %1106 = vmatprep.mubr.f32.mxu0 %v806
    %1107 = vmatmul.mubr.f32.gmra.mrb[0].mxu0 %v805
    %v1108 = vpop.f32.mrb[0].mxu0
    %v1109 = vadd.f32 0.0, %v1108
    %v1110 = vpop.f32.mrb[0].mxu0
    %1111 = vdwg.mxu0
    %v1112 = vld [vmem:[#allocation4] sm:$0xff]
    %v1113 = vld [vmem:[#allocation4 + $0x8] sm:$0xff]
    %v1114 = vld [vmem:[#allocation4 + $0x10] sm:$0xff]
    %v1115 = vld [vmem:[#allocation4 + $0x18] sm:$0xff]
    %v1116 = vld [vmem:[#allocation4 + $0x20] sm:$0xff]
    %v1117 = vld [vmem:[#allocation4 + $0x28] sm:$0xff]
    %v1118 = vld [vmem:[#allocation4 + $0x30] sm:$0xff]
    %v1119 = vld [vmem:[#allocation4 + $0x38] sm:$0xff]
    %v1120 = vld [vmem:[#allocation4 + $0x40] sm:$0xff]
    %v1121 = vld [vmem:[#allocation4 + $0x48] sm:$0xff]
    %v1122 = vld [vmem:[#allocation4 + $0x50] sm:$0xff]
    %v1123 = vld [vmem:[#allocation4 + $0x58] sm:$0xff]
    %v1124 = vld [vmem:[#allocation4 + $0x60] sm:$0xff]
    %v1125 = vld [vmem:[#allocation4 + $0x68] sm:$0xff]
    %v1126 = vld [vmem:[#allocation4 + $0x70] sm:$0xff]
    %v1127 = vld [vmem:[#allocation4 + $0x78] sm:$0xff]
    %v1128 = vld [vmem:[#allocation4 + $0x80] sm:$0xff]
    %v1129 = vld [vmem:[#allocation4 + $0x88] sm:$0xff]
    %v1130 = vld [vmem:[#allocation4 + $0x90] sm:$0xff]
    %v1131 = vld [vmem:[#allocation4 + $0x98] sm:$0xff]
    %v1132 = vld [vmem:[#allocation4 + $0xa0] sm:$0xff]
    %v1133 = vld [vmem:[#allocation4 + $0xa8] sm:$0xff]
    %v1134 = vld [vmem:[#allocation4 + $0xb0] sm:$0xff]
    %v1135 = vld [vmem:[#allocation4 + $0xb8] sm:$0xff]
    %s1136 = scalar_lea.vmem [#allocation4], 192
    %v1137 = vld [vmem:[%s1136] sm:$0xff]
    %v1138 = vld [vmem:[%s1136 + $0x8] sm:$0xff]
    %v1139 = vld [vmem:[%s1136 + $0x10] sm:$0xff]
    %v1140 = vld [vmem:[%s1136 + $0x18] sm:$0xff]
    %v1141 = vld [vmem:[%s1136 + $0x20] sm:$0xff]
    %v1142 = vld [vmem:[%s1136 + $0x28] sm:$0xff]
    %v1143 = vld [vmem:[%s1136 + $0x30] sm:$0xff]
    %v1144 = vld [vmem:[%s1136 + $0x38] sm:$0xff]
    %v1145 = vld [vmem:[%s1136 + $0x40] sm:$0xff]
    %v1146 = vld [vmem:[%s1136 + $0x48] sm:$0xff]
    %v1147 = vld [vmem:[%s1136 + $0x50] sm:$0xff]
    %v1148 = vld [vmem:[%s1136 + $0x58] sm:$0xff]
    %v1149 = vld [vmem:[%s1136 + $0x60] sm:$0xff]
    %v1150 = vld [vmem:[%s1136 + $0x68] sm:$0xff]
    %v1151 = vld [vmem:[%s1136 + $0x70] sm:$0xff]
    %v1152 = vld [vmem:[%s1136 + $0x78] sm:$0xff]
    %v1153 = vld [vmem:[%s1136 + $0x80] sm:$0xff]
    %v1154 = vld [vmem:[%s1136 + $0x88] sm:$0xff]
    %v1155 = vld [vmem:[%s1136 + $0x90] sm:$0xff]
    %v1156 = vld [vmem:[%s1136 + $0x98] sm:$0xff]
    %v1157 = vld [vmem:[%s1136 + $0xa0] sm:$0xff]
    %v1158 = vld [vmem:[%s1136 + $0xa8] sm:$0xff]
    %v1159 = vld [vmem:[%s1136 + $0xb0] sm:$0xff]
    %v1160 = vld [vmem:[%s1136 + $0xb8] sm:$0xff]
    %v1162 = vsel %vm550, %v954, 0
    %v1165 = vsel %vm550, %v959, 0
    %v1168 = vsel %vm550, %v964, 0
    %v1171 = vsel %vm550, %v969, 0
    %v1174 = vsel %vm550, %v974, 0
    %v1177 = vsel %vm550, %v979, 0
    %v1180 = vsel %vm550, %v984, 0
    %v1183 = vsel %vm550, %v989, 0
    %v1186 = vsel %vm550, %v994, 0
    %v1189 = vsel %vm550, %v999, 0
    %v1192 = vsel %vm550, %v1004, 0
    %v1195 = vsel %vm550, %v1009, 0
    %v1198 = vsel %vm550, %v1014, 0
    %v1201 = vsel %vm550, %v1019, 0
    %v1204 = vsel %vm550, %v1024, 0
    %v1207 = vsel %vm550, %v1029, 0
    %1209 = vmatprep.subr.mxu0 %v1138
    %1210 = vmatpush1.msra.mxu0 %v1137
    %1211 = vmatprep.subr.mxu0 %v1140
    %1212 = vmatpush1.msra.mxu0 %v1139
    %1213 = vmatprep.subr.mxu0 %v1142
    %1214 = vmatpush1.msra.mxu0 %v1141
    %1215 = vmatprep.subr.mxu0 %v1144
    %1216 = vmatpush1.msra.mxu0 %v1143
    %1217 = vmatprep.subr.mxu0 %v1146
    %1218 = vmatpush1.msra.mxu0 %v1145
    %1219 = vmatprep.subr.mxu0 %v1148
    %1220 = vmatpush1.msra.mxu0 %v1147
    %1221 = vmatprep.subr.mxu0 %v1150
    %1222 = vmatpush1.msra.mxu0 %v1149
    %1223 = vmatprep.subr.mxu0 %v1152
    %1224 = vmatpush1.msra.mxu0 %v1151
    %1225 = vmatprep.subr.mxu0 %v1154
    %1226 = vmatpush1.msra.mxu0 %v1153
    %1227 = vmatprep.subr.mxu0 %v1156
    %1228 = vmatpush1.msra.mxu0 %v1155
    %1229 = vmatprep.subr.mxu0 %v1158
    %1230 = vmatpush1.msra.mxu0 %v1157
    %1231 = vmatprep.subr.mxu0 %v1160
    %1232 = vmatpush1.msra.mxu0 %v1159
    %1233 = vmatprep.subr.mxu0 0.0
    %1234 = vmatpush1.msra.mxu0 0.0
    %1235 = vmatprep.subr.mxu0 0.0
    %1236 = vmatpush1.msra.mxu0 0.0
    %1237 = vmatprep.subr.mxu0 0.0
    %1238 = vmatpush1.msra.mxu0 0.0
    %1239 = vmatprep.subr.mxu0 0.0
    %1240 = vmatpush1.msra.mxu0 0.0
    %1241 = vmatprep.subr.mxu0 0.0
    %1242 = vmatpush1.msra.mxu0 0.0
    %1243 = vmatprep.subr.mxu0 0.0
    %1244 = vmatpush1.msra.mxu0 0.0
    %1245 = vmatprep.subr.mxu0 0.0
    %1246 = vmatpush1.msra.mxu0 0.0
    %1247 = vmatprep.subr.mxu0 0.0
    %1248 = vmatpush1.msra.mxu0 0.0
    %1249 = vmatprep.subr.mxu0 0.0
    %1250 = vmatpush1.msra.mxu0 0.0
    %1251 = vmatprep.subr.mxu0 0.0
    %1252 = vmatpush1.msra.mxu0 0.0
    %1253 = vmatprep.subr.mxu0 0.0
    %1254 = vmatpush1.msra.mxu0 0.0
    %1255 = vmatprep.subr.mxu0 0.0
    %1256 = vmatpush1.msra.mxu0 0.0
    %1257 = vmatprep.subr.mxu0 0.0
    %1258 = vmatpush1.msra.mxu0 0.0
    %1259 = vmatprep.subr.mxu0 0.0
    %1260 = vmatpush1.msra.mxu0 0.0
    %1261 = vmatprep.subr.mxu0 0.0
    %1262 = vmatpush1.msra.mxu0 0.0
    %1263 = vmatprep.subr.mxu0 0.0
    %1264 = vmatpush1.msra.mxu0 0.0
    %1265 = vmatprep.subr.mxu0 0.0
    %1266 = vmatpush1.msra.mxu0 0.0
    %1267 = vmatprep.subr.mxu0 0.0
    %1268 = vmatpush1.msra.mxu0 0.0
    %1269 = vmatprep.subr.mxu0 0.0
    %1270 = vmatpush1.msra.mxu0 0.0
    %1271 = vmatprep.subr.mxu0 0.0
    %1272 = vmatpush1.msra.mxu0 0.0
    %1273 = vmatprep.mubr.f32.mxu0 0.0
    %1274 = vmatmul.mubr.f32.gmra.mrb[0].mxu0 %v1162
    %v1275 = vpop.f32.mrb[0].mxu0
    %v1276 = vadd.f32 0.0, %v1275
    %v1277 = vpop.f32.mrb[0].mxu0
    %v1278 = vadd.f32 0.0, %v1277
    %1279 = vmatprep.mubr.f32.mxu0 0.0
    %1280 = vmatmul.mubr.f32.gmra.mrb[0].mxu0 %v1165
    %v1281 = vpop.f32.mrb[0].mxu0
    %v1282 = vadd.f32 0.0, %v1281
    %v1283 = vpop.f32.mrb[0].mxu0
    %v1284 = vadd.f32 0.0, %v1283
    %1285 = vmatprep.mubr.f32.mxu0 0.0
    %1286 = vmatmul.mubr.f32.gmra.mrb[0].mxu0 %v1168
    %v1287 = vpop.f32.mrb[0].mxu0
    %v1288 = vadd.f32 0.0, %v1287
    %v1289 = vpop.f32.mrb[0].mxu0
    %v1290 = vadd.f32 0.0, %v1289
    %1291 = vmatprep.mubr.f32.mxu0 0.0
    %1292 = vmatmul.mubr.f32.gmra.mrb[0].mxu0 %v1171
    %v1293 = vpop.f32.mrb[0].mxu0
    %v1294 = vadd.f32 0.0, %v1293
    %v1295 = vpop.f32.mrb[0].mxu0
    %v1296 = vadd.f32 0.0, %v1295
    %1297 = vmatprep.mubr.f32.mxu0 0.0
    %1298 = vmatmul.mubr.f32.gmra.mrb[0].mxu0 %v1174
    %v1299 = vpop.f32.mrb[0].mxu0
    %v1300 = vadd.f32 0.0, %v1299
    %v1301 = vpop.f32.mrb[0].mxu0
    %v1302 = vadd.f32 0.0, %v1301
    %1303 = vmatprep.mubr.f32.mxu0 0.0
    %1304 = vmatmul.mubr.f32.gmra.mrb[0].mxu0 %v1177
    %v1305 = vpop.f32.mrb[0].mxu0
    %v1306 = vadd.f32 0.0, %v1305
    %v1307 = vpop.f32.mrb[0].mxu0
    %v1308 = vadd.f32 0.0, %v1307
    %1309 = vmatprep.mubr.f32.mxu0 0.0
    %1310 = vmatmul.mubr.f32.gmra.mrb[0].mxu0 %v1180
    %v1311 = vpop.f32.mrb[0].mxu0
    %v1312 = vadd.f32 0.0, %v1311
    %v1313 = vpop.f32.mrb[0].mxu0
    %v1314 = vadd.f32 0.0, %v1313
    %1315 = vmatprep.mubr.f32.mxu0 0.0
    %1316 = vmatmul.mubr.f32.gmra.mrb[0].mxu0 %v1183
    %v1317 = vpop.f32.mrb[0].mxu0
    %v1318 = vadd.f32 0.0, %v1317
    %v1319 = vpop.f32.mrb[0].mxu0
    %v1320 = vadd.f32 0.0, %v1319
    %1321 = vmatprep.mubr.f32.mxu0 0.0
    %1322 = vmatmul.mubr.f32.gmra.mrb[0].mxu0 %v1186
    %v1323 = vpop.f32.mrb[0].mxu0
    %v1324 = vadd.f32 0.0, %v1323
    %v1325 = vpop.f32.mrb[0].mxu0
    %v1326 = vadd.f32 0.0, %v1325
    %1327 = vmatprep.mubr.f32.mxu0 0.0
    %1328 = vmatmul.mubr.f32.gmra.mrb[0].mxu0 %v1189
    %v1329 = vpop.f32.mrb[0].mxu0
    %v1330 = vadd.f32 0.0, %v1329
    %v1331 = vpop.f32.mrb[0].mxu0
    %v1332 = vadd.f32 0.0, %v1331
    %1333 = vmatprep.mubr.f32.mxu0 0.0
    %1334 = vmatmul.mubr.f32.gmra.mrb[0].mxu0 %v1192
    %v1335 = vpop.f32.mrb[0].mxu0
    %v1336 = vadd.f32 0.0, %v1335
    %v1337 = vpop.f32.mrb[0].mxu0
    %v1338 = vadd.f32 0.0, %v1337
    %1339 = vmatprep.mubr.f32.mxu0 0.0
    %1340 = vmatmul.mubr.f32.gmra.mrb[0].mxu0 %v1195
    %v1341 = vpop.f32.mrb[0].mxu0
    %v1342 = vadd.f32 0.0, %v1341
    %v1343 = vpop.f32.mrb[0].mxu0
    %v1344 = vadd.f32 0.0, %v1343
    %1345 = vmatprep.mubr.f32.mxu0 0.0
    %1346 = vmatmul.mubr.f32.gmra.mrb[0].mxu0 %v1198
    %v1347 = vpop.f32.mrb[0].mxu0
    %v1348 = vadd.f32 0.0, %v1347
    %v1349 = vpop.f32.mrb[0].mxu0
    %v1350 = vadd.f32 0.0, %v1349
    %1351 = vmatprep.mubr.f32.mxu0 0.0
    %1352 = vmatmul.mubr.f32.gmra.mrb[0].mxu0 %v1201
    %v1353 = vpop.f32.mrb[0].mxu0
    %v1354 = vadd.f32 0.0, %v1353
    %v1355 = vpop.f32.mrb[0].mxu0
    %v1356 = vadd.f32 0.0, %v1355
    %1357 = vmatprep.mubr.f32.mxu0 0.0
    %1358 = vmatmul.mubr.f32.gmra.mrb[0].mxu0 %v1204
    %v1359 = vpop.f32.mrb[0].mxu0
    %v1360 = vadd.f32 0.0, %v1359
    %v1361 = vpop.f32.mrb[0].mxu0
    %v1362 = vadd.f32 0.0, %v1361
    %1363 = vmatprep.mubr.f32.mxu0 0.0
    %1364 = vmatmul.mubr.f32.gmra.mrb[0].mxu0 %v1207
    %v1365 = vpop.f32.mrb[0].mxu0
    %v1366 = vadd.f32 0.0, %v1365
    %v1367 = vpop.f32.mrb[0].mxu0
    %v1368 = vadd.f32 0.0, %v1367
    %1369 = vdwg.mxu0
    %v1371 = vsel %vm550, %v874, 0
    %v1374 = vsel %vm550, %v879, 0
    %v1377 = vsel %vm550, %v884, 0
    %v1380 = vsel %vm550, %v889, 0
    %v1383 = vsel %vm550, %v894, 0
    %v1386 = vsel %vm550, %v899, 0
    %v1389 = vsel %vm550, %v904, 0
    %v1392 = vsel %vm550, %v909, 0
    %v1395 = vsel %vm550, %v914, 0
    %v1398 = vsel %vm550, %v919, 0
    %v1401 = vsel %vm550, %v924, 0
    %v1404 = vsel %vm550, %v929, 0
    %v1407 = vsel %vm550, %v934, 0
    %v1410 = vsel %vm550, %v939, 0
    %v1413 = vsel %vm550, %v944, 0
    %v1416 = vsel %vm550, %v949, 0
    %1418 = vmatprep.subr.mxu0 %v1113
    %1419 = vmatpush1.msra.mxu0 %v1112
    %1420 = vmatprep.subr.mxu0 %v1115
    %1421 = vmatpush1.msra.mxu0 %v1114
    %1422 = vmatprep.subr.mxu0 %v1117
    %1423 = vmatpush1.msra.mxu0 %v1116
    %1424 = vmatprep.subr.mxu0 %v1119
    %1425 = vmatpush1.msra.mxu0 %v1118
    %1426 = vmatprep.subr.mxu0 %v1121
    %1427 = vmatpush1.msra.mxu0 %v1120
    %1428 = vmatprep.subr.mxu0 %v1123
    %1429 = vmatpush1.msra.mxu0 %v1122
    %1430 = vmatprep.subr.mxu0 %v1125
    %1431 = vmatpush1.msra.mxu0 %v1124
    %1432 = vmatprep.subr.mxu0 %v1127
    %1433 = vmatpush1.msra.mxu0 %v1126
    %1434 = vmatprep.subr.mxu0 %v1129
    %1435 = vmatpush1.msra.mxu0 %v1128
    %1436 = vmatprep.subr.mxu0 %v1131
    %1437 = vmatpush1.msra.mxu0 %v1130
    %1438 = vmatprep.subr.mxu0 %v1133
    %1439 = vmatpush1.msra.mxu0 %v1132
    %1440 = vmatprep.subr.mxu0 %v1135
    %1441 = vmatpush1.msra.mxu0 %v1134
    %1442 = vmatprep.subr.mxu0 0.0
    %1443 = vmatpush1.msra.mxu0 0.0
    %1444 = vmatprep.subr.mxu0 0.0
    %1445 = vmatpush1.msra.mxu0 0.0
    %1446 = vmatprep.subr.mxu0 0.0
    %1447 = vmatpush1.msra.mxu0 0.0
    %1448 = vmatprep.subr.mxu0 0.0
    %1449 = vmatpush1.msra.mxu0 0.0
    %1450 = vmatprep.subr.mxu0 0.0
    %1451 = vmatpush1.msra.mxu0 0.0
    %1452 = vmatprep.subr.mxu0 0.0
    %1453 = vmatpush1.msra.mxu0 0.0
    %1454 = vmatprep.subr.mxu0 0.0
    %1455 = vmatpush1.msra.mxu0 0.0
    %1456 = vmatprep.subr.mxu0 0.0
    %1457 = vmatpush1.msra.mxu0 0.0
    %1458 = vmatprep.subr.mxu0 0.0
    %1459 = vmatpush1.msra.mxu0 0.0
    %1460 = vmatprep.subr.mxu0 0.0
    %1461 = vmatpush1.msra.mxu0 0.0
    %1462 = vmatprep.subr.mxu0 0.0
    %1463 = vmatpush1.msra.mxu0 0.0
    %1464 = vmatprep.subr.mxu0 0.0
    %1465 = vmatpush1.msra.mxu0 0.0
    %1466 = vmatprep.subr.mxu0 0.0
    %1467 = vmatpush1.msra.mxu0 0.0
    %1468 = vmatprep.subr.mxu0 0.0
    %1469 = vmatpush1.msra.mxu0 0.0
    %1470 = vmatprep.subr.mxu0 0.0
    %1471 = vmatpush1.msra.mxu0 0.0
    %1472 = vmatprep.subr.mxu0 0.0
    %1473 = vmatpush1.msra.mxu0 0.0
    %1474 = vmatprep.subr.mxu0 0.0
    %1475 = vmatpush1.msra.mxu0 0.0
    %1476 = vmatprep.subr.mxu0 0.0
    %1477 = vmatpush1.msra.mxu0 0.0
    %1478 = vmatprep.subr.mxu0 0.0
    %1479 = vmatpush1.msra.mxu0 0.0
    %1480 = vmatprep.subr.mxu0 0.0
    %1481 = vmatpush1.msra.mxu0 0.0
    %1482 = vmatprep.mubr.f32.mxu0 0.0
    %1483 = vmatmul.mubr.f32.gmra.mrb[0].mxu0 %v1371
    %v1484 = vpop.f32.mrb[0].mxu0
    %v1485 = vadd.f32 %v1276, %v1484
    %v1486 = vpop.f32.mrb[0].mxu0
    %v1487 = vadd.f32 %v1278, %v1486
    %1488 = vmatprep.mubr.f32.mxu0 0.0
    %1489 = vmatmul.mubr.f32.gmra.mrb[0].mxu0 %v1374
    %v1490 = vpop.f32.mrb[0].mxu0
    %v1491 = vadd.f32 %v1282, %v1490
    %v1492 = vpop.f32.mrb[0].mxu0
    %v1493 = vadd.f32 %v1284, %v1492
    %1494 = vmatprep.mubr.f32.mxu0 0.0
    %1495 = vmatmul.mubr.f32.gmra.mrb[0].mxu0 %v1377
    %v1496 = vpop.f32.mrb[0].mxu0
    %v1497 = vadd.f32 %v1288, %v1496
    %v1498 = vpop.f32.mrb[0].mxu0
    %v1499 = vadd.f32 %v1290, %v1498
    %1500 = vmatprep.mubr.f32.mxu0 0.0
    %1501 = vmatmul.mubr.f32.gmra.mrb[0].mxu0 %v1380
    %v1502 = vpop.f32.mrb[0].mxu0
    %v1503 = vadd.f32 %v1294, %v1502
    %v1504 = vpop.f32.mrb[0].mxu0
    %v1505 = vadd.f32 %v1296, %v1504
    %1506 = vmatprep.mubr.f32.mxu0 0.0
    %1507 = vmatmul.mubr.f32.gmra.mrb[0].mxu0 %v1383
    %v1508 = vpop.f32.mrb[0].mxu0
    %v1509 = vadd.f32 %v1300, %v1508
    %v1510 = vpop.f32.mrb[0].mxu0
    %v1511 = vadd.f32 %v1302, %v1510
    %1512 = vmatprep.mubr.f32.mxu0 0.0
    %1513 = vmatmul.mubr.f32.gmra.mrb[0].mxu0 %v1386
    %v1514 = vpop.f32.mrb[0].mxu0
    %v1515 = vadd.f32 %v1306, %v1514
    %v1516 = vpop.f32.mrb[0].mxu0
    %v1517 = vadd.f32 %v1308, %v1516
    %1518 = vmatprep.mubr.f32.mxu0 0.0
    %1519 = vmatmul.mubr.f32.gmra.mrb[0].mxu0 %v1389
    %v1520 = vpop.f32.mrb[0].mxu0
    %v1521 = vadd.f32 %v1312, %v1520
    %v1522 = vpop.f32.mrb[0].mxu0
    %v1523 = vadd.f32 %v1314, %v1522
    %1524 = vmatprep.mubr.f32.mxu0 0.0
    %1525 = vmatmul.mubr.f32.gmra.mrb[0].mxu0 %v1392
    %v1526 = vpop.f32.mrb[0].mxu0
    %v1527 = vadd.f32 %v1318, %v1526
    %v1528 = vpop.f32.mrb[0].mxu0
    %v1529 = vadd.f32 %v1320, %v1528
    %1530 = vmatprep.mubr.f32.mxu0 0.0
    %1531 = vmatmul.mubr.f32.gmra.mrb[0].mxu0 %v1395
    %v1532 = vpop.f32.mrb[0].mxu0
    %v1533 = vadd.f32 %v1324, %v1532
    %v1534 = vpop.f32.mrb[0].mxu0
    %v1535 = vadd.f32 %v1326, %v1534
    %1536 = vmatprep.mubr.f32.mxu0 0.0
    %1537 = vmatmul.mubr.f32.gmra.mrb[0].mxu0 %v1398
    %v1538 = vpop.f32.mrb[0].mxu0
    %v1539 = vadd.f32 %v1330, %v1538
    %v1540 = vpop.f32.mrb[0].mxu0
    %v1541 = vadd.f32 %v1332, %v1540
    %1542 = vmatprep.mubr.f32.mxu0 0.0
    %1543 = vmatmul.mubr.f32.gmra.mrb[0].mxu0 %v1401
    %v1544 = vpop.f32.mrb[0].mxu0
    %v1545 = vadd.f32 %v1336, %v1544
    %v1546 = vpop.f32.mrb[0].mxu0
    %v1547 = vadd.f32 %v1338, %v1546
    %1548 = vmatprep.mubr.f32.mxu0 0.0
    %1549 = vmatmul.mubr.f32.gmra.mrb[0].mxu0 %v1404
    %v1550 = vpop.f32.mrb[0].mxu0
    %v1551 = vadd.f32 %v1342, %v1550
    %v1552 = vpop.f32.mrb[0].mxu0
    %v1553 = vadd.f32 %v1344, %v1552
    %1554 = vmatprep.mubr.f32.mxu0 0.0
    %1555 = vmatmul.mubr.f32.gmra.mrb[0].mxu0 %v1407
    %v1556 = vpop.f32.mrb[0].mxu0
    %v1557 = vadd.f32 %v1348, %v1556
    %v1558 = vpop.f32.mrb[0].mxu0
    %v1559 = vadd.f32 %v1350, %v1558
    %1560 = vmatprep.mubr.f32.mxu0 0.0
    %1561 = vmatmul.mubr.f32.gmra.mrb[0].mxu0 %v1410
    %v1562 = vpop.f32.mrb[0].mxu0
    %v1563 = vadd.f32 %v1354, %v1562
    %v1564 = vpop.f32.mrb[0].mxu0
    %v1565 = vadd.f32 %v1356, %v1564
    %1566 = vmatprep.mubr.f32.mxu0 0.0
    %1567 = vmatmul.mubr.f32.gmra.mrb[0].mxu0 %v1413
    %v1568 = vpop.f32.mrb[0].mxu0
    %v1569 = vadd.f32 %v1360, %v1568
    %v1570 = vpop.f32.mrb[0].mxu0
    %v1571 = vadd.f32 %v1362, %v1570
    %1572 = vmatprep.mubr.f32.mxu0 0.0
    %1573 = vmatmul.mubr.f32.gmra.mrb[0].mxu0 %v1416
    %v1574 = vpop.f32.mrb[0].mxu0
    %v1575 = vadd.f32 %v1366, %v1574
    %v1576 = vpop.f32.mrb[0].mxu0
    %v1577 = vadd.f32 %v1368, %v1576
    %1578 = vdwg.mxu0
    %s1579 = scalar_lea.vmem [#allocation4], 384
    %v1580 = vld [vmem:[%s1579] sm:$0xff]
    %v1581 = vld [vmem:[%s1579 + $0x8] sm:$0xff]
    %v1582 = vld [vmem:[%s1579 + $0x10] sm:$0xff]
    %v1583 = vld [vmem:[%s1579 + $0x18] sm:$0xff]
    %v1584 = vld [vmem:[%s1579 + $0x20] sm:$0xff]
    %v1585 = vld [vmem:[%s1579 + $0x28] sm:$0xff]
    %v1586 = vld [vmem:[%s1579 + $0x30] sm:$0xff]
    %v1587 = vld [vmem:[%s1579 + $0x38] sm:$0xff]
    %v1588 = vld [vmem:[%s1579 + $0x40] sm:$0xff]
    %v1589 = vld [vmem:[%s1579 + $0x48] sm:$0xff]
    %v1590 = vld [vmem:[%s1579 + $0x50] sm:$0xff]
    %v1591 = vld [vmem:[%s1579 + $0x58] sm:$0xff]
    %v1592 = vld [vmem:[%s1579 + $0x60] sm:$0xff]
    %v1593 = vld [vmem:[%s1579 + $0x68] sm:$0xff]
    %v1594 = vld [vmem:[%s1579 + $0x70] sm:$0xff]
    %v1595 = vld [vmem:[%s1579 + $0x78] sm:$0xff]
    %v1596 = vld [vmem:[%s1579 + $0x80] sm:$0xff]
    %v1597 = vld [vmem:[%s1579 + $0x88] sm:$0xff]
    %v1598 = vld [vmem:[%s1579 + $0x90] sm:$0xff]
    %v1599 = vld [vmem:[%s1579 + $0x98] sm:$0xff]
    %v1600 = vld [vmem:[%s1579 + $0xa0] sm:$0xff]
    %v1601 = vld [vmem:[%s1579 + $0xa8] sm:$0xff]
    %v1602 = vld [vmem:[%s1579 + $0xb0] sm:$0xff]
    %v1603 = vld [vmem:[%s1579 + $0xb8] sm:$0xff]
    %v1605 = vsel %vm550, %v1034, 0
    %v1608 = vsel %vm550, %v1039, 0
    %v1611 = vsel %vm550, %v1044, 0
    %v1614 = vsel %vm550, %v1049, 0
    %v1617 = vsel %vm550, %v1054, 0
    %v1620 = vsel %vm550, %v1059, 0
    %v1623 = vsel %vm550, %v1064, 0
    %v1626 = vsel %vm550, %v1069, 0
    %v1629 = vsel %vm550, %v1074, 0
    %v1632 = vsel %vm550, %v1079, 0
    %v1635 = vsel %vm550, %v1084, 0
    %v1638 = vsel %vm550, %v1089, 0
    %v1641 = vsel %vm550, %v1094, 0
    %v1644 = vsel %vm550, %v1099, 0
    %v1647 = vsel %vm550, %v1104, 0
    %v1650 = vsel %vm550, %v1109, 0
    %1652 = vmatprep.subr.mxu0 %v1581
    %1653 = vmatpush1.msra.mxu0 %v1580
    %1654 = vmatprep.subr.mxu0 %v1583
    %1655 = vmatpush1.msra.mxu0 %v1582
    %1656 = vmatprep.subr.mxu0 %v1585
    %1657 = vmatpush1.msra.mxu0 %v1584
    %1658 = vmatprep.subr.mxu0 %v1587
    %1659 = vmatpush1.msra.mxu0 %v1586
    %1660 = vmatprep.subr.mxu0 %v1589
    %1661 = vmatpush1.msra.mxu0 %v1588
    %1662 = vmatprep.subr.mxu0 %v1591
    %1663 = vmatpush1.msra.mxu0 %v1590
    %1664 = vmatprep.subr.mxu0 %v1593
    %1665 = vmatpush1.msra.mxu0 %v1592
    %1666 = vmatprep.subr.mxu0 %v1595
    %1667 = vmatpush1.msra.mxu0 %v1594
    %1668 = vmatprep.subr.mxu0 %v1597
    %1669 = vmatpush1.msra.mxu0 %v1596
    %1670 = vmatprep.subr.mxu0 %v1599
    %1671 = vmatpush1.msra.mxu0 %v1598
    %1672 = vmatprep.subr.mxu0 %v1601
    %1673 = vmatpush1.msra.mxu0 %v1600
    %1674 = vmatprep.subr.mxu0 %v1603
    %1675 = vmatpush1.msra.mxu0 %v1602
    %1676 = vmatprep.subr.mxu0 0.0
    %1677 = vmatpush1.msra.mxu0 0.0
    %1678 = vmatprep.subr.mxu0 0.0
    %1679 = vmatpush1.msra.mxu0 0.0
    %1680 = vmatprep.subr.mxu0 0.0
    %1681 = vmatpush1.msra.mxu0 0.0
    %1682 = vmatprep.subr.mxu0 0.0
    %1683 = vmatpush1.msra.mxu0 0.0
    %1684 = vmatprep.subr.mxu0 0.0
    %1685 = vmatpush1.msra.mxu0 0.0
    %1686 = vmatprep.subr.mxu0 0.0
    %1687 = vmatpush1.msra.mxu0 0.0
    %1688 = vmatprep.subr.mxu0 0.0
    %1689 = vmatpush1.msra.mxu0 0.0
    %1690 = vmatprep.subr.mxu0 0.0
    %1691 = vmatpush1.msra.mxu0 0.0
    %1692 = vmatprep.subr.mxu0 0.0
    %1693 = vmatpush1.msra.mxu0 0.0
    %1694 = vmatprep.subr.mxu0 0.0
    %1695 = vmatpush1.msra.mxu0 0.0
    %1696 = vmatprep.subr.mxu0 0.0
    %1697 = vmatpush1.msra.mxu0 0.0
    %1698 = vmatprep.subr.mxu0 0.0
    %1699 = vmatpush1.msra.mxu0 0.0
    %1700 = vmatprep.subr.mxu0 0.0
    %1701 = vmatpush1.msra.mxu0 0.0
    %1702 = vmatprep.subr.mxu0 0.0
    %1703 = vmatpush1.msra.mxu0 0.0
    %1704 = vmatprep.subr.mxu0 0.0
    %1705 = vmatpush1.msra.mxu0 0.0
    %1706 = vmatprep.subr.mxu0 0.0
    %1707 = vmatpush1.msra.mxu0 0.0
    %1708 = vmatprep.subr.mxu0 0.0
    %1709 = vmatpush1.msra.mxu0 0.0
    %1710 = vmatprep.subr.mxu0 0.0
    %1711 = vmatpush1.msra.mxu0 0.0
    %1712 = vmatprep.subr.mxu0 0.0
    %1713 = vmatpush1.msra.mxu0 0.0
    %1714 = vmatprep.subr.mxu0 0.0
    %1715 = vmatpush1.msra.mxu0 0.0
    %1716 = vmatprep.mubr.f32.mxu0 0.0
    %1717 = vmatmul.mubr.f32.gmra.mrb[0].mxu0 %v1605
    %v1718 = vpop.f32.mrb[0].mxu0
    %v1719 = vadd.f32 0.0, %v1718
    %v1720 = vpop.f32.mrb[0].mxu0
    %v1721 = vadd.f32 0.0, %v1720
    %1722 = vmatprep.mubr.f32.mxu0 0.0
    %1723 = vmatmul.mubr.f32.gmra.mrb[0].mxu0 %v1608
    %v1724 = vpop.f32.mrb[0].mxu0
    %v1725 = vadd.f32 0.0, %v1724
    %v1726 = vpop.f32.mrb[0].mxu0
    %v1727 = vadd.f32 0.0, %v1726
    %1728 = vmatprep.mubr.f32.mxu0 0.0
    %1729 = vmatmul.mubr.f32.gmra.mrb[0].mxu0 %v1611
    %v1730 = vpop.f32.mrb[0].mxu0
    %v1731 = vadd.f32 0.0, %v1730
    %v1732 = vpop.f32.mrb[0].mxu0
    %v1733 = vadd.f32 0.0, %v1732
    %1734 = vmatprep.mubr.f32.mxu0 0.0
    %1735 = vmatmul.mubr.f32.gmra.mrb[0].mxu0 %v1614
    %v1736 = vpop.f32.mrb[0].mxu0
    %v1737 = vadd.f32 0.0, %v1736
    %v1738 = vpop.f32.mrb[0].mxu0
    %v1739 = vadd.f32 0.0, %v1738
    %1740 = vmatprep.mubr.f32.mxu0 0.0
    %1741 = vmatmul.mubr.f32.gmra.mrb[0].mxu0 %v1617
    %v1742 = vpop.f32.mrb[0].mxu0
    %v1743 = vadd.f32 0.0, %v1742
    %v1744 = vpop.f32.mrb[0].mxu0
    %v1745 = vadd.f32 0.0, %v1744
    %1746 = vmatprep.mubr.f32.mxu0 0.0
    %1747 = vmatmul.mubr.f32.gmra.mrb[0].mxu0 %v1620
    %v1748 = vpop.f32.mrb[0].mxu0
    %v1749 = vadd.f32 0.0, %v1748
    %v1750 = vpop.f32.mrb[0].mxu0
    %v1751 = vadd.f32 0.0, %v1750
    %1752 = vmatprep.mubr.f32.mxu0 0.0
    %1753 = vmatmul.mubr.f32.gmra.mrb[0].mxu0 %v1623
    %v1754 = vpop.f32.mrb[0].mxu0
    %v1755 = vadd.f32 0.0, %v1754
    %v1756 = vpop.f32.mrb[0].mxu0
    %v1757 = vadd.f32 0.0, %v1756
    %1758 = vmatprep.mubr.f32.mxu0 0.0
    %1759 = vmatmul.mubr.f32.gmra.mrb[0].mxu0 %v1626
    %v1760 = vpop.f32.mrb[0].mxu0
    %v1761 = vadd.f32 0.0, %v1760
    %v1762 = vpop.f32.mrb[0].mxu0
    %v1763 = vadd.f32 0.0, %v1762
    %1764 = vmatprep.mubr.f32.mxu0 0.0
    %1765 = vmatmul.mubr.f32.gmra.mrb[0].mxu0 %v1629
    %v1766 = vpop.f32.mrb[0].mxu0
    %v1767 = vadd.f32 0.0, %v1766
    %v1768 = vpop.f32.mrb[0].mxu0
    %v1769 = vadd.f32 0.0, %v1768
    %1770 = vmatprep.mubr.f32.mxu0 0.0
    %1771 = vmatmul.mubr.f32.gmra.mrb[0].mxu0 %v1632
    %v1772 = vpop.f32.mrb[0].mxu0
    %v1773 = vadd.f32 0.0, %v1772
    %v1774 = vpop.f32.mrb[0].mxu0
    %v1775 = vadd.f32 0.0, %v1774
    %1776 = vmatprep.mubr.f32.mxu0 0.0
    %1777 = vmatmul.mubr.f32.gmra.mrb[0].mxu0 %v1635
    %v1778 = vpop.f32.mrb[0].mxu0
    %v1779 = vadd.f32 0.0, %v1778
    %v1780 = vpop.f32.mrb[0].mxu0
    %v1781 = vadd.f32 0.0, %v1780
    %1782 = vmatprep.mubr.f32.mxu0 0.0
    %1783 = vmatmul.mubr.f32.gmra.mrb[0].mxu0 %v1638
    %v1784 = vpop.f32.mrb[0].mxu0
    %v1785 = vadd.f32 0.0, %v1784
    %v1786 = vpop.f32.mrb[0].mxu0
    %v1787 = vadd.f32 0.0, %v1786
    %1788 = vmatprep.mubr.f32.mxu0 0.0
    %1789 = vmatmul.mubr.f32.gmra.mrb[0].mxu0 %v1641
    %v1790 = vpop.f32.mrb[0].mxu0
    %v1791 = vadd.f32 0.0, %v1790
    %v1792 = vpop.f32.mrb[0].mxu0
    %v1793 = vadd.f32 0.0, %v1792
    %1794 = vmatprep.mubr.f32.mxu0 0.0
    %1795 = vmatmul.mubr.f32.gmra.mrb[0].mxu0 %v1644
    %v1796 = vpop.f32.mrb[0].mxu0
    %v1797 = vadd.f32 0.0, %v1796
    %v1798 = vpop.f32.mrb[0].mxu0
    %v1799 = vadd.f32 0.0, %v1798
    %1800 = vmatprep.mubr.f32.mxu0 0.0
    %1801 = vmatmul.mubr.f32.gmra.mrb[0].mxu0 %v1647
    %v1802 = vpop.f32.mrb[0].mxu0
    %v1803 = vadd.f32 0.0, %v1802
    %v1804 = vpop.f32.mrb[0].mxu0
    %v1805 = vadd.f32 0.0, %v1804
    %1806 = vmatprep.mubr.f32.mxu0 0.0
    %1807 = vmatmul.mubr.f32.gmra.mrb[0].mxu0 %v1650
    %v1808 = vpop.f32.mrb[0].mxu0
    %v1809 = vadd.f32 0.0, %v1808
    %v1810 = vpop.f32.mrb[0].mxu0
    %v1811 = vadd.f32 0.0, %v1810
    %1812 = vdwg.mxu0
    %v1813 = vadd.f32 %v1485, %v1719
    %v1814 = vadd.f32 %v1487, %v1721
    %v1815 = vadd.f32 %v1491, %v1725
    %v1816 = vadd.f32 %v1493, %v1727
    %v1817 = vadd.f32 %v1497, %v1731
    %v1818 = vadd.f32 %v1499, %v1733
    %v1819 = vadd.f32 %v1503, %v1737
    %v1820 = vadd.f32 %v1505, %v1739
    %v1821 = vadd.f32 %v1509, %v1743
    %v1822 = vadd.f32 %v1511, %v1745
    %v1823 = vadd.f32 %v1515, %v1749
    %v1824 = vadd.f32 %v1517, %v1751
    %v1825 = vadd.f32 %v1521, %v1755
    %v1826 = vadd.f32 %v1523, %v1757
    %v1827 = vadd.f32 %v1527, %v1761
    %v1828 = vadd.f32 %v1529, %v1763
    %v1829 = vadd.f32 %v1533, %v1767
    %v1830 = vadd.f32 %v1535, %v1769
    %v1831 = vadd.f32 %v1539, %v1773
    %v1832 = vadd.f32 %v1541, %v1775
    %v1833 = vadd.f32 %v1545, %v1779
    %v1834 = vadd.f32 %v1547, %v1781
    %v1835 = vadd.f32 %v1551, %v1785
    %v1836 = vadd.f32 %v1553, %v1787
    %v1837 = vadd.f32 %v1557, %v1791
    %v1838 = vadd.f32 %v1559, %v1793
    %v1839 = vadd.f32 %v1563, %v1797
    %v1840 = vadd.f32 %v1565, %v1799
    %v1841 = vadd.f32 %v1569, %v1803
    %v1842 = vadd.f32 %v1571, %v1805
    %v1843 = vadd.f32 %v1575, %v1809
    %v1844 = vadd.f32 %v1577, %v1811
    %v1845 = vld [vmem:[#allocation6] sm:$0x3]
    %v1847 = vlaneseq
    %v1848 = vshrl.u32 %v1847, 7
    %v1849 = vsub.s32 0, %v1848
    %v1850 = vrot.slane %v1845, %v1849
    %v1851 = vlaneseq
    %v1852 = vshrl.u32 %v1851, 7
    %v1853 = vsub.s32 1, %v1852
    %v1854 = vrot.slane %v1845, %v1853
    %v1857 = vadd.f32 %v1813, %v1850
    %v1858 = vadd.f32 %v1814, %v1854
    %v1859 = vadd.f32 %v1815, %v1850
    %v1860 = vadd.f32 %v1816, %v1854
    %v1861 = vadd.f32 %v1817, %v1850
    %v1862 = vadd.f32 %v1818, %v1854
    %v1863 = vadd.f32 %v1819, %v1850
    %v1864 = vadd.f32 %v1820, %v1854
    %v1865 = vadd.f32 %v1821, %v1850
    %v1866 = vadd.f32 %v1822, %v1854
    %v1867 = vadd.f32 %v1823, %v1850
    %v1868 = vadd.f32 %v1824, %v1854
    %v1869 = vadd.f32 %v1825, %v1850
    %v1870 = vadd.f32 %v1826, %v1854
    %v1871 = vadd.f32 %v1827, %v1850
    %v1872 = vadd.f32 %v1828, %v1854
    %v1873 = vadd.f32 %v1829, %v1850
    %v1874 = vadd.f32 %v1830, %v1854
    %v1875 = vadd.f32 %v1831, %v1850
    %v1876 = vadd.f32 %v1832, %v1854
    %v1877 = vadd.f32 %v1833, %v1850
    %v1878 = vadd.f32 %v1834, %v1854
    %v1879 = vadd.f32 %v1835, %v1850
    %v1880 = vadd.f32 %v1836, %v1854
    %v1881 = vadd.f32 %v1837, %v1850
    %v1882 = vadd.f32 %v1838, %v1854
    %v1883 = vadd.f32 %v1839, %v1850
    %v1884 = vadd.f32 %v1840, %v1854
    %v1885 = vadd.f32 %v1841, %v1850
    %v1886 = vadd.f32 %v1842, %v1854
    %v1887 = vadd.f32 %v1843, %v1850
    %v1888 = vadd.f32 %v1844, %v1854
    %v1889 = vmax.f32 %v1857, 0.0
    %v1890 = vmax.f32 %v1858, 0.0
    %v1891 = vmax.f32 %v1859, 0.0
    %v1892 = vmax.f32 %v1860, 0.0
    %v1893 = vmax.f32 %v1861, 0.0
    %v1894 = vmax.f32 %v1862, 0.0
    %v1895 = vmax.f32 %v1863, 0.0
    %v1896 = vmax.f32 %v1864, 0.0
    %v1897 = vmax.f32 %v1865, 0.0
    %v1898 = vmax.f32 %v1866, 0.0
    %v1899 = vmax.f32 %v1867, 0.0
    %v1900 = vmax.f32 %v1868, 0.0
    %v1901 = vmax.f32 %v1869, 0.0
    %v1902 = vmax.f32 %v1870, 0.0
    %v1903 = vmax.f32 %v1871, 0.0
    %v1904 = vmax.f32 %v1872, 0.0
    %v1905 = vmax.f32 %v1873, 0.0
    %v1906 = vmax.f32 %v1874, 0.0
    %v1907 = vmax.f32 %v1875, 0.0
    %v1908 = vmax.f32 %v1876, 0.0
    %v1909 = vmax.f32 %v1877, 0.0
    %v1910 = vmax.f32 %v1878, 0.0
    %v1911 = vmax.f32 %v1879, 0.0
    %v1912 = vmax.f32 %v1880, 0.0
    %v1913 = vmax.f32 %v1881, 0.0
    %v1914 = vmax.f32 %v1882, 0.0
    %v1915 = vmax.f32 %v1883, 0.0
    %v1916 = vmax.f32 %v1884, 0.0
    %v1917 = vmax.f32 %v1885, 0.0
    %v1918 = vmax.f32 %v1886, 0.0
    %v1919 = vmax.f32 %v1887, 0.0
    %v1920 = vmax.f32 %v1888, 0.0
    %v1921 = vld [vmem:[%s5] sm:$0xff]
    %v1922 = vld [vmem:[%s5 + $0x8] sm:$0xff]
    %v1923 = vld [vmem:[%s5 + $0x10] sm:$0xff]
    %v1924 = vld [vmem:[%s5 + $0x18] sm:$0xff]
    %v1925 = vld [vmem:[%s5 + $0x20] sm:$0xff]
    %v1926 = vld [vmem:[%s5 + $0x28] sm:$0xff]
    %v1927 = vld [vmem:[%s5 + $0x30] sm:$0xff]
    %v1928 = vld [vmem:[%s5 + $0x38] sm:$0xff]
    %v1929 = vld [vmem:[%s5 + $0x40] sm:$0xff]
    %v1930 = vld [vmem:[%s5 + $0x48] sm:$0xff]
    %v1931 = vld [vmem:[%s5 + $0x50] sm:$0xff]
    %v1932 = vld [vmem:[%s5 + $0x58] sm:$0xff]
    %v1933 = vld [vmem:[%s5 + $0x60] sm:$0xff]
    %v1934 = vld [vmem:[%s5 + $0x68] sm:$0xff]
    %v1935 = vld [vmem:[%s5 + $0x70] sm:$0xff]
    %v1936 = vld [vmem:[%s5 + $0x78] sm:$0xff]
    %v1937 = vld [vmem:[%s5 + $0x80] sm:$0xff]
    %v1938 = vld [vmem:[%s5 + $0x88] sm:$0xff]
    %v1939 = vld [vmem:[%s5 + $0x90] sm:$0xff]
    %v1940 = vld [vmem:[%s5 + $0x98] sm:$0xff]
    %v1941 = vld [vmem:[%s5 + $0xa0] sm:$0xff]
    %v1942 = vld [vmem:[%s5 + $0xa8] sm:$0xff]
    %v1943 = vld [vmem:[%s5 + $0xb0] sm:$0xff]
    %v1944 = vld [vmem:[%s5 + $0xb8] sm:$0xff]
    %1945 = vmatprep.subr.mxu0 %v1890
    %1946 = vmatpush1.msra.mxu0 %v1889
    %1947 = vmatprep.subr.mxu0 %v1892
    %1948 = vmatpush1.msra.mxu0 %v1891
    %1949 = vmatprep.subr.mxu0 %v1894
    %1950 = vmatpush1.msra.mxu0 %v1893
    %1951 = vmatprep.subr.mxu0 %v1896
    %1952 = vmatpush1.msra.mxu0 %v1895
    %1953 = vmatprep.subr.mxu0 %v1898
    %1954 = vmatpush1.msra.mxu0 %v1897
    %1955 = vmatprep.subr.mxu0 %v1900
    %1956 = vmatpush1.msra.mxu0 %v1899
    %1957 = vmatprep.subr.mxu0 %v1902
    %1958 = vmatpush1.msra.mxu0 %v1901
    %1959 = vmatprep.subr.mxu0 %v1904
    %1960 = vmatpush1.msra.mxu0 %v1903
    %1961 = vmatprep.subr.mxu0 %v1906
    %1962 = vmatpush1.msra.mxu0 %v1905
    %1963 = vmatprep.subr.mxu0 %v1908
    %1964 = vmatpush1.msra.mxu0 %v1907
    %1965 = vmatprep.subr.mxu0 %v1910
    %1966 = vmatpush1.msra.mxu0 %v1909
    %1967 = vmatprep.subr.mxu0 %v1912
    %1968 = vmatpush1.msra.mxu0 %v1911
    %1969 = vmatprep.subr.mxu0 %v1914
    %1970 = vmatpush1.msra.mxu0 %v1913
    %1971 = vmatprep.subr.mxu0 %v1916
    %1972 = vmatpush1.msra.mxu0 %v1915
    %1973 = vmatprep.subr.mxu0 %v1918
    %1974 = vmatpush1.msra.mxu0 %v1917
    %1975 = vmatprep.subr.mxu0 %v1920
    %1976 = vmatpush1.msra.mxu0 %v1919
    %1977 = vmatprep.subr.mxu0 0.0
    %1978 = vmatpush1.msra.mxu0 0.0
    %1979 = vmatprep.subr.mxu0 0.0
    %1980 = vmatpush1.msra.mxu0 0.0
    %1981 = vmatprep.subr.mxu0 0.0
    %1982 = vmatpush1.msra.mxu0 0.0
    %1983 = vmatprep.subr.mxu0 0.0
    %1984 = vmatpush1.msra.mxu0 0.0
    %1985 = vmatprep.subr.mxu0 0.0
    %1986 = vmatpush1.msra.mxu0 0.0
    %1987 = vmatprep.subr.mxu0 0.0
    %1988 = vmatpush1.msra.mxu0 0.0
    %1989 = vmatprep.subr.mxu0 0.0
    %1990 = vmatpush1.msra.mxu0 0.0
    %1991 = vmatprep.subr.mxu0 0.0
    %1992 = vmatpush1.msra.mxu0 0.0
    %1993 = vmatprep.subr.mxu0 0.0
    %1994 = vmatpush1.msra.mxu0 0.0
    %1995 = vmatprep.subr.mxu0 0.0
    %1996 = vmatpush1.msra.mxu0 0.0
    %1997 = vmatprep.subr.mxu0 0.0
    %1998 = vmatpush1.msra.mxu0 0.0
    %1999 = vmatprep.subr.mxu0 0.0
    %2000 = vmatpush1.msra.mxu0 0.0
    %2001 = vmatprep.subr.mxu0 0.0
    %2002 = vmatpush1.msra.mxu0 0.0
    %2003 = vmatprep.subr.mxu0 0.0
    %2004 = vmatpush1.msra.mxu0 0.0
    %2005 = vmatprep.subr.mxu0 0.0
    %2006 = vmatpush1.msra.mxu0 0.0
    %2007 = vmatprep.subr.mxu0 0.0
    %2008 = vmatpush1.msra.mxu0 0.0
    %2009 = vmatprep.mubr.f32.mxu0 0.0
    %2010 = vmatmul.mubr.f32.gmra.mrb[0].mxu0 %v1921
    %v2011 = vpop.f32.mrb[0].mxu0
    %v2012 = vadd.f32 0.0, %v2011
    %v2013 = vpop.f32.mrb[0].mxu0
    %v2014 = vadd.f32 0.0, %v2013
    %2015 = vmatprep.mubr.f32.mxu0 0.0
    %2016 = vmatmul.mubr.f32.gmra.mrb[0].mxu0 %v1922
    %v2017 = vpop.f32.mrb[0].mxu0
    %v2018 = vadd.f32 0.0, %v2017
    %v2019 = vpop.f32.mrb[0].mxu0
    %v2020 = vadd.f32 0.0, %v2019
    %2021 = vmatprep.mubr.f32.mxu0 0.0
    %2022 = vmatmul.mubr.f32.gmra.mrb[0].mxu0 %v1923
    %v2023 = vpop.f32.mrb[0].mxu0
    %v2024 = vadd.f32 0.0, %v2023
    %v2025 = vpop.f32.mrb[0].mxu0
    %v2026 = vadd.f32 0.0, %v2025
    %2027 = vmatprep.mubr.f32.mxu0 0.0
    %2028 = vmatmul.mubr.f32.gmra.mrb[0].mxu0 %v1924
    %v2029 = vpop.f32.mrb[0].mxu0
    %v2030 = vadd.f32 0.0, %v2029
    %v2031 = vpop.f32.mrb[0].mxu0
    %v2032 = vadd.f32 0.0, %v2031
    %2033 = vmatprep.mubr.f32.mxu0 0.0
    %2034 = vmatmul.mubr.f32.gmra.mrb[0].mxu0 %v1925
    %v2035 = vpop.f32.mrb[0].mxu0
    %v2036 = vadd.f32 0.0, %v2035
    %v2037 = vpop.f32.mrb[0].mxu0
    %v2038 = vadd.f32 0.0, %v2037
    %2039 = vmatprep.mubr.f32.mxu0 0.0
    %2040 = vmatmul.mubr.f32.gmra.mrb[0].mxu0 %v1926
    %v2041 = vpop.f32.mrb[0].mxu0
    %v2042 = vadd.f32 0.0, %v2041
    %v2043 = vpop.f32.mrb[0].mxu0
    %v2044 = vadd.f32 0.0, %v2043
    %2045 = vmatprep.mubr.f32.mxu0 0.0
    %2046 = vmatmul.mubr.f32.gmra.mrb[0].mxu0 %v1927
    %v2047 = vpop.f32.mrb[0].mxu0
    %v2048 = vadd.f32 0.0, %v2047
    %v2049 = vpop.f32.mrb[0].mxu0
    %v2050 = vadd.f32 0.0, %v2049
    %2051 = vmatprep.mubr.f32.mxu0 0.0
    %2052 = vmatmul.mubr.f32.gmra.mrb[0].mxu0 %v1928
    %v2053 = vpop.f32.mrb[0].mxu0
    %v2054 = vadd.f32 0.0, %v2053
    %v2055 = vpop.f32.mrb[0].mxu0
    %v2056 = vadd.f32 0.0, %v2055
    %2057 = vmatprep.mubr.f32.mxu0 0.0
    %2058 = vmatmul.mubr.f32.gmra.mrb[0].mxu0 %v1929
    %v2059 = vpop.f32.mrb[0].mxu0
    %v2060 = vadd.f32 0.0, %v2059
    %v2061 = vpop.f32.mrb[0].mxu0
    %v2062 = vadd.f32 0.0, %v2061
    %2063 = vmatprep.mubr.f32.mxu0 0.0
    %2064 = vmatmul.mubr.f32.gmra.mrb[0].mxu0 %v1930
    %v2065 = vpop.f32.mrb[0].mxu0
    %v2066 = vadd.f32 0.0, %v2065
    %v2067 = vpop.f32.mrb[0].mxu0
    %v2068 = vadd.f32 0.0, %v2067
    %2069 = vmatprep.mubr.f32.mxu0 0.0
    %2070 = vmatmul.mubr.f32.gmra.mrb[0].mxu0 %v1931
    %v2071 = vpop.f32.mrb[0].mxu0
    %v2072 = vadd.f32 0.0, %v2071
    %v2073 = vpop.f32.mrb[0].mxu0
    %v2074 = vadd.f32 0.0, %v2073
    %2075 = vmatprep.mubr.f32.mxu0 0.0
    %2076 = vmatmul.mubr.f32.gmra.mrb[0].mxu0 %v1932
    %v2077 = vpop.f32.mrb[0].mxu0
    %v2078 = vadd.f32 0.0, %v2077
    %v2079 = vpop.f32.mrb[0].mxu0
    %v2080 = vadd.f32 0.0, %v2079
    %2081 = vmatprep.mubr.f32.mxu0 0.0
    %2082 = vmatmul.mubr.f32.gmra.mrb[0].mxu0 %v1933
    %v2083 = vpop.f32.mrb[0].mxu0
    %v2084 = vadd.f32 0.0, %v2083
    %v2085 = vpop.f32.mrb[0].mxu0
    %v2086 = vadd.f32 0.0, %v2085
    %2087 = vmatprep.mubr.f32.mxu0 0.0
    %2088 = vmatmul.mubr.f32.gmra.mrb[0].mxu0 %v1934
    %v2089 = vpop.f32.mrb[0].mxu0
    %v2090 = vadd.f32 0.0, %v2089
    %v2091 = vpop.f32.mrb[0].mxu0
    %v2092 = vadd.f32 0.0, %v2091
    %2093 = vmatprep.mubr.f32.mxu0 0.0
    %2094 = vmatmul.mubr.f32.gmra.mrb[0].mxu0 %v1935
    %v2095 = vpop.f32.mrb[0].mxu0
    %v2096 = vadd.f32 0.0, %v2095
    %v2097 = vpop.f32.mrb[0].mxu0
    %v2098 = vadd.f32 0.0, %v2097
    %2099 = vmatprep.mubr.f32.mxu0 0.0
    %2100 = vmatmul.mubr.f32.gmra.mrb[0].mxu0 %v1936
    %v2101 = vpop.f32.mrb[0].mxu0
    %v2102 = vadd.f32 0.0, %v2101
    %v2103 = vpop.f32.mrb[0].mxu0
    %v2104 = vadd.f32 0.0, %v2103
    %2105 = vmatprep.mubr.f32.mxu0 0.0
    %2106 = vmatmul.mubr.f32.gmra.mrb[0].mxu0 %v1937
    %v2107 = vpop.f32.mrb[0].mxu0
    %v2108 = vadd.f32 0.0, %v2107
    %v2109 = vpop.f32.mrb[0].mxu0
    %v2110 = vadd.f32 0.0, %v2109
    %2111 = vmatprep.mubr.f32.mxu0 0.0
    %2112 = vmatmul.mubr.f32.gmra.mrb[0].mxu0 %v1938
    %v2113 = vpop.f32.mrb[0].mxu0
    %v2114 = vadd.f32 0.0, %v2113
    %v2115 = vpop.f32.mrb[0].mxu0
    %v2116 = vadd.f32 0.0, %v2115
    %2117 = vmatprep.mubr.f32.mxu0 0.0
    %2118 = vmatmul.mubr.f32.gmra.mrb[0].mxu0 %v1939
    %v2119 = vpop.f32.mrb[0].mxu0
    %v2120 = vadd.f32 0.0, %v2119
    %v2121 = vpop.f32.mrb[0].mxu0
    %v2122 = vadd.f32 0.0, %v2121
    %2123 = vmatprep.mubr.f32.mxu0 0.0
    %2124 = vmatmul.mubr.f32.gmra.mrb[0].mxu0 %v1940
    %v2125 = vpop.f32.mrb[0].mxu0
    %v2126 = vadd.f32 0.0, %v2125
    %v2127 = vpop.f32.mrb[0].mxu0
    %v2128 = vadd.f32 0.0, %v2127
    %2129 = vmatprep.mubr.f32.mxu0 0.0
    %2130 = vmatmul.mubr.f32.gmra.mrb[0].mxu0 %v1941
    %v2131 = vpop.f32.mrb[0].mxu0
    %v2132 = vadd.f32 0.0, %v2131
    %v2133 = vpop.f32.mrb[0].mxu0
    %v2134 = vadd.f32 0.0, %v2133
    %2135 = vmatprep.mubr.f32.mxu0 0.0
    %2136 = vmatmul.mubr.f32.gmra.mrb[0].mxu0 %v1942
    %v2137 = vpop.f32.mrb[0].mxu0
    %v2138 = vadd.f32 0.0, %v2137
    %v2139 = vpop.f32.mrb[0].mxu0
    %v2140 = vadd.f32 0.0, %v2139
    %2141 = vmatprep.mubr.f32.mxu0 0.0
    %2142 = vmatmul.mubr.f32.gmra.mrb[0].mxu0 %v1943
    %v2143 = vpop.f32.mrb[0].mxu0
    %v2144 = vadd.f32 0.0, %v2143
    %v2145 = vpop.f32.mrb[0].mxu0
    %v2146 = vadd.f32 0.0, %v2145
    %2147 = vmatprep.mubr.f32.mxu0 0.0
    %2148 = vmatmul.mubr.f32.gmra.mrb[0].mxu0 %v1944
    %v2149 = vpop.f32.mrb[0].mxu0
    %v2150 = vadd.f32 0.0, %v2149
    %v2151 = vpop.f32.mrb[0].mxu0
    %v2152 = vadd.f32 0.0, %v2151
    %2153 = vdwg.mxu0
    %v2154 = vld [vmem:[#allocation7] sm:$0xff]
    %v2155 = vld [vmem:[#allocation7 + $0x8] sm:$0xff]
    %v2156 = vld [vmem:[#allocation7 + $0x10] sm:$0xff]
    %v2157 = vld [vmem:[#allocation7 + $0x18] sm:$0xff]
    %v2158 = vld [vmem:[#allocation7 + $0x20] sm:$0xff]
    %v2159 = vld [vmem:[#allocation7 + $0x28] sm:$0xff]
    %v2160 = vld [vmem:[#allocation7 + $0x30] sm:$0xff]
    %v2161 = vld [vmem:[#allocation7 + $0x38] sm:$0xff]
    %v2162 = vld [vmem:[#allocation7 + $0x40] sm:$0xff]
    %v2163 = vld [vmem:[#allocation7 + $0x48] sm:$0xff]
    %v2164 = vld [vmem:[#allocation7 + $0x50] sm:$0xff]
    %v2165 = vld [vmem:[#allocation7 + $0x58] sm:$0xff]
    %v2166 = vld [vmem:[#allocation7 + $0x60] sm:$0xff]
    %v2167 = vld [vmem:[#allocation7 + $0x68] sm:$0xff]
    %v2168 = vld [vmem:[#allocation7 + $0x70] sm:$0xff]
    %v2169 = vld [vmem:[#allocation7 + $0x78] sm:$0xff]
    %v2170 = vld [vmem:[#allocation7 + $0x80] sm:$0xff]
    %v2171 = vld [vmem:[#allocation7 + $0x88] sm:$0xff]
    %v2172 = vld [vmem:[#allocation7 + $0x90] sm:$0xff]
    %v2173 = vld [vmem:[#allocation7 + $0x98] sm:$0xff]
    %v2174 = vld [vmem:[#allocation7 + $0xa0] sm:$0xff]
    %v2175 = vld [vmem:[#allocation7 + $0xa8] sm:$0xff]
    %v2176 = vld [vmem:[#allocation7 + $0xb0] sm:$0xff]
    %v2177 = vld [vmem:[#allocation7 + $0xb8] sm:$0xff]
    %v2178 = vld [vmem:[#allocation7 + $0xc0] sm:$0xff]
    %v2179 = vld [vmem:[#allocation7 + $0xc8] sm:$0xff]
    %v2180 = vld [vmem:[#allocation7 + $0xd0] sm:$0xff]
    %v2181 = vld [vmem:[#allocation7 + $0xd8] sm:$0xff]
    %v2182 = vld [vmem:[#allocation7 + $0xe0] sm:$0xff]
    %v2183 = vld [vmem:[#allocation7 + $0xe8] sm:$0xff]
    %v2184 = vld [vmem:[#allocation7 + $0xf0] sm:$0xff]
    %v2185 = vld [vmem:[#allocation7 + $0xf8] sm:$0xff]
    %v2186 = vld [vmem:[#allocation7 + $0x100] sm:$0xff]
    %v2187 = vld [vmem:[#allocation7 + $0x108] sm:$0xff]
    %v2188 = vld [vmem:[#allocation7 + $0x110] sm:$0xff]
    %v2189 = vld [vmem:[#allocation7 + $0x118] sm:$0xff]
    %v2190 = vld [vmem:[#allocation7 + $0x120] sm:$0xff]
    %v2191 = vld [vmem:[#allocation7 + $0x128] sm:$0xff]
    %v2192 = vld [vmem:[#allocation7 + $0x130] sm:$0xff]
    %v2193 = vld [vmem:[#allocation7 + $0x138] sm:$0xff]
    %v2194 = vld [vmem:[#allocation7 + $0x140] sm:$0xff]
    %v2195 = vld [vmem:[#allocation7 + $0x148] sm:$0xff]
    %v2196 = vld [vmem:[#allocation7 + $0x150] sm:$0xff]
    %v2197 = vld [vmem:[#allocation7 + $0x158] sm:$0xff]
    %v2198 = vld [vmem:[#allocation7 + $0x160] sm:$0xff]
    %v2199 = vld [vmem:[#allocation7 + $0x168] sm:$0xff]
    %v2200 = vld [vmem:[#allocation7 + $0x170] sm:$0xff]
    %v2201 = vld [vmem:[#allocation7 + $0x178] sm:$0xff]
    %v2202 = vld [vmem:[#allocation7 + $0x180] sm:$0xff]
    %v2203 = vld [vmem:[#allocation7 + $0x188] sm:$0xff]
    %v2204 = vld [vmem:[#allocation7 + $0x190] sm:$0xff]
    %v2205 = vld [vmem:[#allocation7 + $0x198] sm:$0xff]
    %v2206 = vld [vmem:[#allocation7 + $0x1a0] sm:$0xff]
    %v2207 = vld [vmem:[#allocation7 + $0x1a8] sm:$0xff]
    %v2208 = vld [vmem:[#allocation7 + $0x1b0] sm:$0xff]
    %v2209 = vld [vmem:[#allocation7 + $0x1b8] sm:$0xff]
    %v2210 = vld [vmem:[#allocation7 + $0x1c0] sm:$0xff]
    %v2211 = vld [vmem:[#allocation7 + $0x1c8] sm:$0xff]
    %v2212 = vld [vmem:[#allocation7 + $0x1d0] sm:$0xff]
    %v2213 = vld [vmem:[#allocation7 + $0x1d8] sm:$0xff]
    %v2214 = vld [vmem:[#allocation7 + $0x1e0] sm:$0xff]
    %v2215 = vld [vmem:[#allocation7 + $0x1e8] sm:$0xff]
    %v2216 = vld [vmem:[#allocation7 + $0x1f0] sm:$0xff]
    %v2217 = vld [vmem:[#allocation7 + $0x1f8] sm:$0xff]
    %s2218 = scalar_lea.vmem [#allocation7], 512
    %v2219 = vld [vmem:[%s2218] sm:$0xff]
    %v2220 = vld [vmem:[%s2218 + $0x8] sm:$0xff]
    %v2221 = vld [vmem:[%s2218 + $0x10] sm:$0xff]
    %v2222 = vld [vmem:[%s2218 + $0x18] sm:$0xff]
    %v2223 = vld [vmem:[%s2218 + $0x20] sm:$0xff]
    %v2224 = vld [vmem:[%s2218 + $0x28] sm:$0xff]
    %v2225 = vld [vmem:[%s2218 + $0x30] sm:$0xff]
    %v2226 = vld [vmem:[%s2218 + $0x38] sm:$0xff]
    %v2227 = vld [vmem:[%s2218 + $0x40] sm:$0xff]
    %v2228 = vld [vmem:[%s2218 + $0x48] sm:$0xff]
    %v2229 = vld [vmem:[%s2218 + $0x50] sm:$0xff]
    %v2230 = vld [vmem:[%s2218 + $0x58] sm:$0xff]
    %v2231 = vld [vmem:[%s2218 + $0x60] sm:$0xff]
    %v2232 = vld [vmem:[%s2218 + $0x68] sm:$0xff]
    %v2233 = vld [vmem:[%s2218 + $0x70] sm:$0xff]
    %v2234 = vld [vmem:[%s2218 + $0x78] sm:$0xff]
    %v2235 = vld [vmem:[%s2218 + $0x80] sm:$0xff]
    %v2236 = vld [vmem:[%s2218 + $0x88] sm:$0xff]
    %v2237 = vld [vmem:[%s2218 + $0x90] sm:$0xff]
    %v2238 = vld [vmem:[%s2218 + $0x98] sm:$0xff]
    %v2239 = vld [vmem:[%s2218 + $0xa0] sm:$0xff]
    %v2240 = vld [vmem:[%s2218 + $0xa8] sm:$0xff]
    %v2241 = vld [vmem:[%s2218 + $0xb0] sm:$0xff]
    %v2242 = vld [vmem:[%s2218 + $0xb8] sm:$0xff]
    %v2243 = vld [vmem:[%s2218 + $0xc0] sm:$0xff]
    %v2244 = vld [vmem:[%s2218 + $0xc8] sm:$0xff]
    %v2245 = vld [vmem:[%s2218 + $0xd0] sm:$0xff]
    %v2246 = vld [vmem:[%s2218 + $0xd8] sm:$0xff]
    %v2247 = vld [vmem:[%s2218 + $0xe0] sm:$0xff]
    %v2248 = vld [vmem:[%s2218 + $0xe8] sm:$0xff]
    %v2249 = vld [vmem:[%s2218 + $0xf0] sm:$0xff]
    %v2250 = vld [vmem:[%s2218 + $0xf8] sm:$0xff]
    %v2251 = vld [vmem:[%s2218 + $0x100] sm:$0xff]
    %v2252 = vld [vmem:[%s2218 + $0x108] sm:$0xff]
    %v2253 = vld [vmem:[%s2218 + $0x110] sm:$0xff]
    %v2254 = vld [vmem:[%s2218 + $0x118] sm:$0xff]
    %v2255 = vld [vmem:[%s2218 + $0x120] sm:$0xff]
    %v2256 = vld [vmem:[%s2218 + $0x128] sm:$0xff]
    %v2257 = vld [vmem:[%s2218 + $0x130] sm:$0xff]
    %v2258 = vld [vmem:[%s2218 + $0x138] sm:$0xff]
    %v2259 = vld [vmem:[%s2218 + $0x140] sm:$0xff]
    %v2260 = vld [vmem:[%s2218 + $0x148] sm:$0xff]
    %v2261 = vld [vmem:[%s2218 + $0x150] sm:$0xff]
    %v2262 = vld [vmem:[%s2218 + $0x158] sm:$0xff]
    %v2263 = vld [vmem:[%s2218 + $0x160] sm:$0xff]
    %v2264 = vld [vmem:[%s2218 + $0x168] sm:$0xff]
    %v2265 = vld [vmem:[%s2218 + $0x170] sm:$0xff]
    %v2266 = vld [vmem:[%s2218 + $0x178] sm:$0xff]
    %v2267 = vld [vmem:[%s2218 + $0x180] sm:$0xff]
    %v2268 = vld [vmem:[%s2218 + $0x188] sm:$0xff]
    %v2269 = vld [vmem:[%s2218 + $0x190] sm:$0xff]
    %v2270 = vld [vmem:[%s2218 + $0x198] sm:$0xff]
    %v2271 = vld [vmem:[%s2218 + $0x1a0] sm:$0xff]
    %v2272 = vld [vmem:[%s2218 + $0x1a8] sm:$0xff]
    %v2273 = vld [vmem:[%s2218 + $0x1b0] sm:$0xff]
    %v2274 = vld [vmem:[%s2218 + $0x1b8] sm:$0xff]
    %v2275 = vld [vmem:[%s2218 + $0x1c0] sm:$0xff]
    %v2276 = vld [vmem:[%s2218 + $0x1c8] sm:$0xff]
    %v2277 = vld [vmem:[%s2218 + $0x1d0] sm:$0xff]
    %v2278 = vld [vmem:[%s2218 + $0x1d8] sm:$0xff]
    %v2279 = vld [vmem:[%s2218 + $0x1e0] sm:$0xff]
    %v2280 = vld [vmem:[%s2218 + $0x1e8] sm:$0xff]
    %v2281 = vld [vmem:[%s2218 + $0x1f0] sm:$0xff]
    %v2282 = vld [vmem:[%s2218 + $0x1f8] sm:$0xff]
    %2283 = vmatprep.subr.mxu0 %v2220
    %2284 = vmatpush1.msra.mxu0 %v2219
    %2285 = vmatprep.subr.mxu0 %v2222
    %2286 = vmatpush1.msra.mxu0 %v2221
    %2287 = vmatprep.subr.mxu0 %v2224
    %2288 = vmatpush1.msra.mxu0 %v2223
    %2289 = vmatprep.subr.mxu0 %v2226
    %2290 = vmatpush1.msra.mxu0 %v2225
    %2291 = vmatprep.subr.mxu0 %v2228
    %2292 = vmatpush1.msra.mxu0 %v2227
    %2293 = vmatprep.subr.mxu0 %v2230
    %2294 = vmatpush1.msra.mxu0 %v2229
    %2295 = vmatprep.subr.mxu0 %v2232
    %2296 = vmatpush1.msra.mxu0 %v2231
    %2297 = vmatprep.subr.mxu0 %v2234
    %2298 = vmatpush1.msra.mxu0 %v2233
    %2299 = vmatprep.subr.mxu0 %v2236
    %2300 = vmatpush1.msra.mxu0 %v2235
    %2301 = vmatprep.subr.mxu0 %v2238
    %2302 = vmatpush1.msra.mxu0 %v2237
    %2303 = vmatprep.subr.mxu0 %v2240
    %2304 = vmatpush1.msra.mxu0 %v2239
    %2305 = vmatprep.subr.mxu0 %v2242
    %2306 = vmatpush1.msra.mxu0 %v2241
    %2307 = vmatprep.subr.mxu0 %v2244
    %2308 = vmatpush1.msra.mxu0 %v2243
    %2309 = vmatprep.subr.mxu0 %v2246
    %2310 = vmatpush1.msra.mxu0 %v2245
    %2311 = vmatprep.subr.mxu0 %v2248
    %2312 = vmatpush1.msra.mxu0 %v2247
    %2313 = vmatprep.subr.mxu0 %v2250
    %2314 = vmatpush1.msra.mxu0 %v2249
    %2315 = vmatprep.subr.mxu0 %v2252
    %2316 = vmatpush1.msra.mxu0 %v2251
    %2317 = vmatprep.subr.mxu0 %v2254
    %2318 = vmatpush1.msra.mxu0 %v2253
    %2319 = vmatprep.subr.mxu0 %v2256
    %2320 = vmatpush1.msra.mxu0 %v2255
    %2321 = vmatprep.subr.mxu0 %v2258
    %2322 = vmatpush1.msra.mxu0 %v2257
    %2323 = vmatprep.subr.mxu0 %v2260
    %2324 = vmatpush1.msra.mxu0 %v2259
    %2325 = vmatprep.subr.mxu0 %v2262
    %2326 = vmatpush1.msra.mxu0 %v2261
    %2327 = vmatprep.subr.mxu0 %v2264
    %2328 = vmatpush1.msra.mxu0 %v2263
    %2329 = vmatprep.subr.mxu0 %v2266
    %2330 = vmatpush1.msra.mxu0 %v2265
    %2331 = vmatprep.subr.mxu0 %v2268
    %2332 = vmatpush1.msra.mxu0 %v2267
    %2333 = vmatprep.subr.mxu0 %v2270
    %2334 = vmatpush1.msra.mxu0 %v2269
    %2335 = vmatprep.subr.mxu0 %v2272
    %2336 = vmatpush1.msra.mxu0 %v2271
    %2337 = vmatprep.subr.mxu0 %v2274
    %2338 = vmatpush1.msra.mxu0 %v2273
    %2339 = vmatprep.subr.mxu0 %v2276
    %2340 = vmatpush1.msra.mxu0 %v2275
    %2341 = vmatprep.subr.mxu0 %v2278
    %2342 = vmatpush1.msra.mxu0 %v2277
    %2343 = vmatprep.subr.mxu0 %v2280
    %2344 = vmatpush1.msra.mxu0 %v2279
    %2345 = vmatprep.subr.mxu0 %v2282
    %2346 = vmatpush1.msra.mxu0 %v2281
    %2347 = vmatprep.mubr.f32.mxu0 %v2062
    %2348 = vmatmul.mubr.f32.gmra.mrb[0].mxu0 %v2060
    %v2349 = vpop.f32.mrb[0].mxu0
    %v2350 = vadd.f32 0.0, %v2349
    %v2351 = vpop.f32.mrb[0].mxu0
    %v2352 = vadd.f32 0.0, %v2351
    %2353 = vmatprep.mubr.f32.mxu0 %v2068
    %2354 = vmatmul.mubr.f32.gmra.mrb[0].mxu0 %v2066
    %v2355 = vpop.f32.mrb[0].mxu0
    %v2356 = vadd.f32 0.0, %v2355
    %v2357 = vpop.f32.mrb[0].mxu0
    %v2358 = vadd.f32 0.0, %v2357
    %2359 = vmatprep.mubr.f32.mxu0 %v2074
    %2360 = vmatmul.mubr.f32.gmra.mrb[0].mxu0 %v2072
    %v2361 = vpop.f32.mrb[0].mxu0
    %v2362 = vadd.f32 0.0, %v2361
    %v2363 = vpop.f32.mrb[0].mxu0
    %v2364 = vadd.f32 0.0, %v2363
    %2365 = vmatprep.mubr.f32.mxu0 %v2080
    %2366 = vmatmul.mubr.f32.gmra.mrb[0].mxu0 %v2078
    %v2367 = vpop.f32.mrb[0].mxu0
    %v2368 = vadd.f32 0.0, %v2367
    %v2369 = vpop.f32.mrb[0].mxu0
    %v2370 = vadd.f32 0.0, %v2369
    %2371 = vmatprep.mubr.f32.mxu0 %v2086
    %2372 = vmatmul.mubr.f32.gmra.mrb[0].mxu0 %v2084
    %v2373 = vpop.f32.mrb[0].mxu0
    %v2374 = vadd.f32 0.0, %v2373
    %v2375 = vpop.f32.mrb[0].mxu0
    %v2376 = vadd.f32 0.0, %v2375
    %2377 = vmatprep.mubr.f32.mxu0 %v2092
    %2378 = vmatmul.mubr.f32.gmra.mrb[0].mxu0 %v2090
    %v2379 = vpop.f32.mrb[0].mxu0
    %v2380 = vadd.f32 0.0, %v2379
    %v2381 = vpop.f32.mrb[0].mxu0
    %v2382 = vadd.f32 0.0, %v2381
    %2383 = vmatprep.mubr.f32.mxu0 %v2098
    %2384 = vmatmul.mubr.f32.gmra.mrb[0].mxu0 %v2096
    %v2385 = vpop.f32.mrb[0].mxu0
    %v2386 = vadd.f32 0.0, %v2385
    %v2387 = vpop.f32.mrb[0].mxu0
    %v2388 = vadd.f32 0.0, %v2387
    %2389 = vmatprep.mubr.f32.mxu0 %v2104
    %2390 = vmatmul.mubr.f32.gmra.mrb[0].mxu0 %v2102
    %v2391 = vpop.f32.mrb[0].mxu0
    %v2392 = vadd.f32 0.0, %v2391
    %v2393 = vpop.f32.mrb[0].mxu0
    %v2394 = vadd.f32 0.0, %v2393
    %2395 = vdwg.mxu0
    %2396 = vmatprep.subr.mxu0 %v2155
    %2397 = vmatpush1.msra.mxu0 %v2154
    %2398 = vmatprep.subr.mxu0 %v2157
    %2399 = vmatpush1.msra.mxu0 %v2156
    %2400 = vmatprep.subr.mxu0 %v2159
    %2401 = vmatpush1.msra.mxu0 %v2158
    %2402 = vmatprep.subr.mxu0 %v2161
    %2403 = vmatpush1.msra.mxu0 %v2160
    %2404 = vmatprep.subr.mxu0 %v2163
    %2405 = vmatpush1.msra.mxu0 %v2162
    %2406 = vmatprep.subr.mxu0 %v2165
    %2407 = vmatpush1.msra.mxu0 %v2164
    %2408 = vmatprep.subr.mxu0 %v2167
    %2409 = vmatpush1.msra.mxu0 %v2166
    %2410 = vmatprep.subr.mxu0 %v2169
    %2411 = vmatpush1.msra.mxu0 %v2168
    %2412 = vmatprep.subr.mxu0 %v2171
    %2413 = vmatpush1.msra.mxu0 %v2170
    %2414 = vmatprep.subr.mxu0 %v2173
    %2415 = vmatpush1.msra.mxu0 %v2172
    %2416 = vmatprep.subr.mxu0 %v2175
    %2417 = vmatpush1.msra.mxu0 %v2174
    %2418 = vmatprep.subr.mxu0 %v2177
    %2419 = vmatpush1.msra.mxu0 %v2176
    %2420 = vmatprep.subr.mxu0 %v2179
    %2421 = vmatpush1.msra.mxu0 %v2178
    %2422 = vmatprep.subr.mxu0 %v2181
    %2423 = vmatpush1.msra.mxu0 %v2180
    %2424 = vmatprep.subr.mxu0 %v2183
    %2425 = vmatpush1.msra.mxu0 %v2182
    %2426 = vmatprep.subr.mxu0 %v2185
    %2427 = vmatpush1.msra.mxu0 %v2184
    %2428 = vmatprep.subr.mxu0 %v2187
    %2429 = vmatpush1.msra.mxu0 %v2186
    %2430 = vmatprep.subr.mxu0 %v2189
    %2431 = vmatpush1.msra.mxu0 %v2188
    %2432 = vmatprep.subr.mxu0 %v2191
    %2433 = vmatpush1.msra.mxu0 %v2190
    %2434 = vmatprep.subr.mxu0 %v2193
    %2435 = vmatpush1.msra.mxu0 %v2192
    %2436 = vmatprep.subr.mxu0 %v2195
    %2437 = vmatpush1.msra.mxu0 %v2194
    %2438 = vmatprep.subr.mxu0 %v2197
    %2439 = vmatpush1.msra.mxu0 %v2196
    %2440 = vmatprep.subr.mxu0 %v2199
    %2441 = vmatpush1.msra.mxu0 %v2198
    %2442 = vmatprep.subr.mxu0 %v2201
    %2443 = vmatpush1.msra.mxu0 %v2200
    %2444 = vmatprep.subr.mxu0 %v2203
    %2445 = vmatpush1.msra.mxu0 %v2202
    %2446 = vmatprep.subr.mxu0 %v2205
    %2447 = vmatpush1.msra.mxu0 %v2204
    %2448 = vmatprep.subr.mxu0 %v2207
    %2449 = vmatpush1.msra.mxu0 %v2206
    %2450 = vmatprep.subr.mxu0 %v2209
    %2451 = vmatpush1.msra.mxu0 %v2208
    %2452 = vmatprep.subr.mxu0 %v2211
    %2453 = vmatpush1.msra.mxu0 %v2210
    %2454 = vmatprep.subr.mxu0 %v2213
    %2455 = vmatpush1.msra.mxu0 %v2212
    %2456 = vmatprep.subr.mxu0 %v2215
    %2457 = vmatpush1.msra.mxu0 %v2214
    %2458 = vmatprep.subr.mxu0 %v2217
    %2459 = vmatpush1.msra.mxu0 %v2216
    %2460 = vmatprep.mubr.f32.mxu0 %v2014
    %2461 = vmatmul.mubr.f32.gmra.mrb[0].mxu0 %v2012
    %v2462 = vpop.f32.mrb[0].mxu0
    %v2463 = vadd.f32 %v2350, %v2462
    %v2464 = vpop.f32.mrb[0].mxu0
    %v2465 = vadd.f32 %v2352, %v2464
    %2466 = vmatprep.mubr.f32.mxu0 %v2020
    %2467 = vmatmul.mubr.f32.gmra.mrb[0].mxu0 %v2018
    %v2468 = vpop.f32.mrb[0].mxu0
    %v2469 = vadd.f32 %v2356, %v2468
    %v2470 = vpop.f32.mrb[0].mxu0
    %v2471 = vadd.f32 %v2358, %v2470
    %2472 = vmatprep.mubr.f32.mxu0 %v2026
    %2473 = vmatmul.mubr.f32.gmra.mrb[0].mxu0 %v2024
    %v2474 = vpop.f32.mrb[0].mxu0
    %v2475 = vadd.f32 %v2362, %v2474
    %v2476 = vpop.f32.mrb[0].mxu0
    %v2477 = vadd.f32 %v2364, %v2476
    %2478 = vmatprep.mubr.f32.mxu0 %v2032
    %2479 = vmatmul.mubr.f32.gmra.mrb[0].mxu0 %v2030
    %v2480 = vpop.f32.mrb[0].mxu0
    %v2481 = vadd.f32 %v2368, %v2480
    %v2482 = vpop.f32.mrb[0].mxu0
    %v2483 = vadd.f32 %v2370, %v2482
    %2484 = vmatprep.mubr.f32.mxu0 %v2038
    %2485 = vmatmul.mubr.f32.gmra.mrb[0].mxu0 %v2036
    %v2486 = vpop.f32.mrb[0].mxu0
    %v2487 = vadd.f32 %v2374, %v2486
    %v2488 = vpop.f32.mrb[0].mxu0
    %v2489 = vadd.f32 %v2376, %v2488
    %2490 = vmatprep.mubr.f32.mxu0 %v2044
    %2491 = vmatmul.mubr.f32.gmra.mrb[0].mxu0 %v2042
    %v2492 = vpop.f32.mrb[0].mxu0
    %v2493 = vadd.f32 %v2380, %v2492
    %v2494 = vpop.f32.mrb[0].mxu0
    %v2495 = vadd.f32 %v2382, %v2494
    %2496 = vmatprep.mubr.f32.mxu0 %v2050
    %2497 = vmatmul.mubr.f32.gmra.mrb[0].mxu0 %v2048
    %v2498 = vpop.f32.mrb[0].mxu0
    %v2499 = vadd.f32 %v2386, %v2498
    %v2500 = vpop.f32.mrb[0].mxu0
    %v2501 = vadd.f32 %v2388, %v2500
    %2502 = vmatprep.mubr.f32.mxu0 %v2056
    %2503 = vmatmul.mubr.f32.gmra.mrb[0].mxu0 %v2054
    %v2504 = vpop.f32.mrb[0].mxu0
    %v2505 = vadd.f32 %v2392, %v2504
    %v2506 = vpop.f32.mrb[0].mxu0
    %v2507 = vadd.f32 %v2394, %v2506
    %2508 = vdwg.mxu0
    %s2509 = scalar_lea.vmem [#allocation7], 1024
    %v2510 = vld [vmem:[%s2509] sm:$0xff]
    %v2511 = vld [vmem:[%s2509 + $0x8] sm:$0xff]
    %v2512 = vld [vmem:[%s2509 + $0x10] sm:$0xff]
    %v2513 = vld [vmem:[%s2509 + $0x18] sm:$0xff]
    %v2514 = vld [vmem:[%s2509 + $0x20] sm:$0xff]
    %v2515 = vld [vmem:[%s2509 + $0x28] sm:$0xff]
    %v2516 = vld [vmem:[%s2509 + $0x30] sm:$0xff]
    %v2517 = vld [vmem:[%s2509 + $0x38] sm:$0xff]
    %v2518 = vld [vmem:[%s2509 + $0x40] sm:$0xff]
    %v2519 = vld [vmem:[%s2509 + $0x48] sm:$0xff]
    %v2520 = vld [vmem:[%s2509 + $0x50] sm:$0xff]
    %v2521 = vld [vmem:[%s2509 + $0x58] sm:$0xff]
    %v2522 = vld [vmem:[%s2509 + $0x60] sm:$0xff]
    %v2523 = vld [vmem:[%s2509 + $0x68] sm:$0xff]
    %v2524 = vld [vmem:[%s2509 + $0x70] sm:$0xff]
    %v2525 = vld [vmem:[%s2509 + $0x78] sm:$0xff]
    %v2526 = vld [vmem:[%s2509 + $0x80] sm:$0xff]
    %v2527 = vld [vmem:[%s2509 + $0x88] sm:$0xff]
    %v2528 = vld [vmem:[%s2509 + $0x90] sm:$0xff]
    %v2529 = vld [vmem:[%s2509 + $0x98] sm:$0xff]
    %v2530 = vld [vmem:[%s2509 + $0xa0] sm:$0xff]
    %v2531 = vld [vmem:[%s2509 + $0xa8] sm:$0xff]
    %v2532 = vld [vmem:[%s2509 + $0xb0] sm:$0xff]
    %v2533 = vld [vmem:[%s2509 + $0xb8] sm:$0xff]
    %v2534 = vld [vmem:[%s2509 + $0xc0] sm:$0xff]
    %v2535 = vld [vmem:[%s2509 + $0xc8] sm:$0xff]
    %v2536 = vld [vmem:[%s2509 + $0xd0] sm:$0xff]
    %v2537 = vld [vmem:[%s2509 + $0xd8] sm:$0xff]
    %v2538 = vld [vmem:[%s2509 + $0xe0] sm:$0xff]
    %v2539 = vld [vmem:[%s2509 + $0xe8] sm:$0xff]
    %v2540 = vld [vmem:[%s2509 + $0xf0] sm:$0xff]
    %v2541 = vld [vmem:[%s2509 + $0xf8] sm:$0xff]
    %v2542 = vld [vmem:[%s2509 + $0x100] sm:$0xff]
    %v2543 = vld [vmem:[%s2509 + $0x108] sm:$0xff]
    %v2544 = vld [vmem:[%s2509 + $0x110] sm:$0xff]
    %v2545 = vld [vmem:[%s2509 + $0x118] sm:$0xff]
    %v2546 = vld [vmem:[%s2509 + $0x120] sm:$0xff]
    %v2547 = vld [vmem:[%s2509 + $0x128] sm:$0xff]
    %v2548 = vld [vmem:[%s2509 + $0x130] sm:$0xff]
    %v2549 = vld [vmem:[%s2509 + $0x138] sm:$0xff]
    %v2550 = vld [vmem:[%s2509 + $0x140] sm:$0xff]
    %v2551 = vld [vmem:[%s2509 + $0x148] sm:$0xff]
    %v2552 = vld [vmem:[%s2509 + $0x150] sm:$0xff]
    %v2553 = vld [vmem:[%s2509 + $0x158] sm:$0xff]
    %v2554 = vld [vmem:[%s2509 + $0x160] sm:$0xff]
    %v2555 = vld [vmem:[%s2509 + $0x168] sm:$0xff]
    %v2556 = vld [vmem:[%s2509 + $0x170] sm:$0xff]
    %v2557 = vld [vmem:[%s2509 + $0x178] sm:$0xff]
    %v2558 = vld [vmem:[%s2509 + $0x180] sm:$0xff]
    %v2559 = vld [vmem:[%s2509 + $0x188] sm:$0xff]
    %v2560 = vld [vmem:[%s2509 + $0x190] sm:$0xff]
    %v2561 = vld [vmem:[%s2509 + $0x198] sm:$0xff]
    %v2562 = vld [vmem:[%s2509 + $0x1a0] sm:$0xff]
    %v2563 = vld [vmem:[%s2509 + $0x1a8] sm:$0xff]
    %v2564 = vld [vmem:[%s2509 + $0x1b0] sm:$0xff]
    %v2565 = vld [vmem:[%s2509 + $0x1b8] sm:$0xff]
    %v2566 = vld [vmem:[%s2509 + $0x1c0] sm:$0xff]
    %v2567 = vld [vmem:[%s2509 + $0x1c8] sm:$0xff]
    %v2568 = vld [vmem:[%s2509 + $0x1d0] sm:$0xff]
    %v2569 = vld [vmem:[%s2509 + $0x1d8] sm:$0xff]
    %v2570 = vld [vmem:[%s2509 + $0x1e0] sm:$0xff]
    %v2571 = vld [vmem:[%s2509 + $0x1e8] sm:$0xff]
    %v2572 = vld [vmem:[%s2509 + $0x1f0] sm:$0xff]
    %v2573 = vld [vmem:[%s2509 + $0x1f8] sm:$0xff]
    %2574 = vmatprep.subr.mxu0 %v2511
    %2575 = vmatpush1.msra.mxu0 %v2510
    %2576 = vmatprep.subr.mxu0 %v2513
    %2577 = vmatpush1.msra.mxu0 %v2512
    %2578 = vmatprep.subr.mxu0 %v2515
    %2579 = vmatpush1.msra.mxu0 %v2514
    %2580 = vmatprep.subr.mxu0 %v2517
    %2581 = vmatpush1.msra.mxu0 %v2516
    %2582 = vmatprep.subr.mxu0 %v2519
    %2583 = vmatpush1.msra.mxu0 %v2518
    %2584 = vmatprep.subr.mxu0 %v2521
    %2585 = vmatpush1.msra.mxu0 %v2520
    %2586 = vmatprep.subr.mxu0 %v2523
    %2587 = vmatpush1.msra.mxu0 %v2522
    %2588 = vmatprep.subr.mxu0 %v2525
    %2589 = vmatpush1.msra.mxu0 %v2524
    %2590 = vmatprep.subr.mxu0 %v2527
    %2591 = vmatpush1.msra.mxu0 %v2526
    %2592 = vmatprep.subr.mxu0 %v2529
    %2593 = vmatpush1.msra.mxu0 %v2528
    %2594 = vmatprep.subr.mxu0 %v2531
    %2595 = vmatpush1.msra.mxu0 %v2530
    %2596 = vmatprep.subr.mxu0 %v2533
    %2597 = vmatpush1.msra.mxu0 %v2532
    %2598 = vmatprep.subr.mxu0 %v2535
    %2599 = vmatpush1.msra.mxu0 %v2534
    %2600 = vmatprep.subr.mxu0 %v2537
    %2601 = vmatpush1.msra.mxu0 %v2536
    %2602 = vmatprep.subr.mxu0 %v2539
    %2603 = vmatpush1.msra.mxu0 %v2538
    %2604 = vmatprep.subr.mxu0 %v2541
    %2605 = vmatpush1.msra.mxu0 %v2540
    %2606 = vmatprep.subr.mxu0 %v2543
    %2607 = vmatpush1.msra.mxu0 %v2542
    %2608 = vmatprep.subr.mxu0 %v2545
    %2609 = vmatpush1.msra.mxu0 %v2544
    %2610 = vmatprep.subr.mxu0 %v2547
    %2611 = vmatpush1.msra.mxu0 %v2546
    %2612 = vmatprep.subr.mxu0 %v2549
    %2613 = vmatpush1.msra.mxu0 %v2548
    %2614 = vmatprep.subr.mxu0 %v2551
    %2615 = vmatpush1.msra.mxu0 %v2550
    %2616 = vmatprep.subr.mxu0 %v2553
    %2617 = vmatpush1.msra.mxu0 %v2552
    %2618 = vmatprep.subr.mxu0 %v2555
    %2619 = vmatpush1.msra.mxu0 %v2554
    %2620 = vmatprep.subr.mxu0 %v2557
    %2621 = vmatpush1.msra.mxu0 %v2556
    %2622 = vmatprep.subr.mxu0 %v2559
    %2623 = vmatpush1.msra.mxu0 %v2558
    %2624 = vmatprep.subr.mxu0 %v2561
    %2625 = vmatpush1.msra.mxu0 %v2560
    %2626 = vmatprep.subr.mxu0 %v2563
    %2627 = vmatpush1.msra.mxu0 %v2562
    %2628 = vmatprep.subr.mxu0 %v2565
    %2629 = vmatpush1.msra.mxu0 %v2564
    %2630 = vmatprep.subr.mxu0 %v2567
    %2631 = vmatpush1.msra.mxu0 %v2566
    %2632 = vmatprep.subr.mxu0 %v2569
    %2633 = vmatpush1.msra.mxu0 %v2568
    %2634 = vmatprep.subr.mxu0 %v2571
    %2635 = vmatpush1.msra.mxu0 %v2570
    %2636 = vmatprep.subr.mxu0 %v2573
    %2637 = vmatpush1.msra.mxu0 %v2572
    %2638 = vmatprep.mubr.f32.mxu0 %v2110
    %2639 = vmatmul.mubr.f32.gmra.mrb[0].mxu0 %v2108
    %v2640 = vpop.f32.mrb[0].mxu0
    %v2641 = vadd.f32 0.0, %v2640
    %v2642 = vpop.f32.mrb[0].mxu0
    %v2643 = vadd.f32 0.0, %v2642
    %2644 = vmatprep.mubr.f32.mxu0 %v2116
    %2645 = vmatmul.mubr.f32.gmra.mrb[0].mxu0 %v2114
    %v2646 = vpop.f32.mrb[0].mxu0
    %v2647 = vadd.f32 0.0, %v2646
    %v2648 = vpop.f32.mrb[0].mxu0
    %v2649 = vadd.f32 0.0, %v2648
    %2650 = vmatprep.mubr.f32.mxu0 %v2122
    %2651 = vmatmul.mubr.f32.gmra.mrb[0].mxu0 %v2120
    %v2652 = vpop.f32.mrb[0].mxu0
    %v2653 = vadd.f32 0.0, %v2652
    %v2654 = vpop.f32.mrb[0].mxu0
    %v2655 = vadd.f32 0.0, %v2654
    %2656 = vmatprep.mubr.f32.mxu0 %v2128
    %2657 = vmatmul.mubr.f32.gmra.mrb[0].mxu0 %v2126
    %v2658 = vpop.f32.mrb[0].mxu0
    %v2659 = vadd.f32 0.0, %v2658
    %v2660 = vpop.f32.mrb[0].mxu0
    %v2661 = vadd.f32 0.0, %v2660
    %2662 = vmatprep.mubr.f32.mxu0 %v2134
    %2663 = vmatmul.mubr.f32.gmra.mrb[0].mxu0 %v2132
    %v2664 = vpop.f32.mrb[0].mxu0
    %v2665 = vadd.f32 0.0, %v2664
    %v2666 = vpop.f32.mrb[0].mxu0
    %v2667 = vadd.f32 0.0, %v2666
    %2668 = vmatprep.mubr.f32.mxu0 %v2140
    %2669 = vmatmul.mubr.f32.gmra.mrb[0].mxu0 %v2138
    %v2670 = vpop.f32.mrb[0].mxu0
    %v2671 = vadd.f32 0.0, %v2670
    %v2672 = vpop.f32.mrb[0].mxu0
    %v2673 = vadd.f32 0.0, %v2672
    %2674 = vmatprep.mubr.f32.mxu0 %v2146
    %2675 = vmatmul.mubr.f32.gmra.mrb[0].mxu0 %v2144
    %v2676 = vpop.f32.mrb[0].mxu0
    %v2677 = vadd.f32 0.0, %v2676
    %v2678 = vpop.f32.mrb[0].mxu0
    %v2679 = vadd.f32 0.0, %v2678
    %2680 = vmatprep.mubr.f32.mxu0 %v2152
    %2681 = vmatmul.mubr.f32.gmra.mrb[0].mxu0 %v2150
    %v2682 = vpop.f32.mrb[0].mxu0
    %v2683 = vadd.f32 0.0, %v2682
    %v2684 = vpop.f32.mrb[0].mxu0
    %v2685 = vadd.f32 0.0, %v2684
    %2686 = vdwg.mxu0
    %v2687 = vadd.f32 %v2463, %v2641
    %v2688 = vadd.f32 %v2465, %v2643
    %v2689 = vadd.f32 %v2469, %v2647
    %v2690 = vadd.f32 %v2471, %v2649
    %v2691 = vadd.f32 %v2475, %v2653
    %v2692 = vadd.f32 %v2477, %v2655
    %v2693 = vadd.f32 %v2481, %v2659
    %v2694 = vadd.f32 %v2483, %v2661
    %v2695 = vadd.f32 %v2487, %v2665
    %v2696 = vadd.f32 %v2489, %v2667
    %v2697 = vadd.f32 %v2493, %v2671
    %v2698 = vadd.f32 %v2495, %v2673
    %v2699 = vadd.f32 %v2499, %v2677
    %v2700 = vadd.f32 %v2501, %v2679
    %v2701 = vadd.f32 %v2505, %v2683
    %v2702 = vadd.f32 %v2507, %v2685
    %v2703 = vld [vmem:[#allocation9] sm:$0x3]
    %v2705 = vlaneseq
    %v2706 = vshrl.u32 %v2705, 7
    %v2707 = vsub.s32 0, %v2706
    %v2708 = vrot.slane %v2703, %v2707
    %v2709 = vlaneseq
    %v2710 = vshrl.u32 %v2709, 7
    %v2711 = vsub.s32 1, %v2710
    %v2712 = vrot.slane %v2703, %v2711
    %v2715 = vadd.f32 %v2687, %v2708
    %v2716 = vadd.f32 %v2688, %v2712
    %v2717 = vadd.f32 %v2689, %v2708
    %v2718 = vadd.f32 %v2690, %v2712
    %v2719 = vadd.f32 %v2691, %v2708
    %v2720 = vadd.f32 %v2692, %v2712
    %v2721 = vadd.f32 %v2693, %v2708
    %v2722 = vadd.f32 %v2694, %v2712
    %v2723 = vadd.f32 %v2695, %v2708
    %v2724 = vadd.f32 %v2696, %v2712
    %v2725 = vadd.f32 %v2697, %v2708
    %v2726 = vadd.f32 %v2698, %v2712
    %v2727 = vadd.f32 %v2699, %v2708
    %v2728 = vadd.f32 %v2700, %v2712
    %v2729 = vadd.f32 %v2701, %v2708
    %v2730 = vadd.f32 %v2702, %v2712
    %v2731 = vmax.f32 %v2715, 0.0
    %v2732 = vmax.f32 %v2716, 0.0
    %v2733 = vmax.f32 %v2717, 0.0
    %v2734 = vmax.f32 %v2718, 0.0
    %v2735 = vmax.f32 %v2719, 0.0
    %v2736 = vmax.f32 %v2720, 0.0
    %v2737 = vmax.f32 %v2721, 0.0
    %v2738 = vmax.f32 %v2722, 0.0
    %v2739 = vmax.f32 %v2723, 0.0
    %v2740 = vmax.f32 %v2724, 0.0
    %v2741 = vmax.f32 %v2725, 0.0
    %v2742 = vmax.f32 %v2726, 0.0
    %v2743 = vmax.f32 %v2727, 0.0
    %v2744 = vmax.f32 %v2728, 0.0
    %v2745 = vmax.f32 %v2729, 0.0
    %v2746 = vmax.f32 %v2730, 0.0
    %v2747 = vld [vmem:[#allocation10] sm:$0xff]
    %v2748 = vld [vmem:[#allocation10 + $0x8] sm:$0xff]
    %v2749 = vld [vmem:[#allocation10 + $0x10] sm:$0xff]
    %v2750 = vld [vmem:[#allocation10 + $0x18] sm:$0xff]
    %v2751 = vld [vmem:[#allocation10 + $0x20] sm:$0xff]
    %v2752 = vld [vmem:[#allocation10 + $0x28] sm:$0xff]
    %v2753 = vld [vmem:[#allocation10 + $0x30] sm:$0xff]
    %v2754 = vld [vmem:[#allocation10 + $0x38] sm:$0xff]
    %v2755 = vld [vmem:[#allocation10 + $0x40] sm:$0xff]
    %v2756 = vld [vmem:[#allocation10 + $0x48] sm:$0xff]
    %v2757 = vld [vmem:[#allocation10 + $0x50] sm:$0xff]
    %v2758 = vld [vmem:[#allocation10 + $0x58] sm:$0xff]
    %vm2759 = vcmask 523264
    %v2761 = vsel %vm2759, %v2747, 0
    %v2764 = vsel %vm2759, %v2748, 0
    %v2767 = vsel %vm2759, %v2749, 0
    %v2770 = vsel %vm2759, %v2750, 0
    %v2773 = vsel %vm2759, %v2751, 0
    %v2776 = vsel %vm2759, %v2752, 0
    %v2779 = vsel %vm2759, %v2753, 0
    %v2782 = vsel %vm2759, %v2754, 0
    %v2785 = vsel %vm2759, %v2755, 0
    %v2788 = vsel %vm2759, %v2756, 0
    %v2791 = vsel %vm2759, %v2757, 0
    %v2794 = vsel %vm2759, %v2758, 0
    %2796 = vmatprep.subr.mxu0 %v2732
    %2797 = vmatpush1.msra.mxu0 %v2731
    %2798 = vmatprep.subr.mxu0 %v2734
    %2799 = vmatpush1.msra.mxu0 %v2733
    %2800 = vmatprep.subr.mxu0 %v2736
    %2801 = vmatpush1.msra.mxu0 %v2735
    %2802 = vmatprep.subr.mxu0 %v2738
    %2803 = vmatpush1.msra.mxu0 %v2737
    %2804 = vmatprep.subr.mxu0 %v2740
    %2805 = vmatpush1.msra.mxu0 %v2739
    %2806 = vmatprep.subr.mxu0 %v2742
    %2807 = vmatpush1.msra.mxu0 %v2741
    %2808 = vmatprep.subr.mxu0 %v2744
    %2809 = vmatpush1.msra.mxu0 %v2743
    %2810 = vmatprep.subr.mxu0 %v2746
    %2811 = vmatpush1.msra.mxu0 %v2745
    %2812 = vmatprep.subr.mxu0 0.0
    %2813 = vmatpush1.msra.mxu0 0.0
    %2814 = vmatprep.subr.mxu0 0.0
    %2815 = vmatpush1.msra.mxu0 0.0
    %2816 = vmatprep.subr.mxu0 0.0
    %2817 = vmatpush1.msra.mxu0 0.0
    %2818 = vmatprep.subr.mxu0 0.0
    %2819 = vmatpush1.msra.mxu0 0.0
    %2820 = vmatprep.subr.mxu0 0.0
    %2821 = vmatpush1.msra.mxu0 0.0
    %2822 = vmatprep.subr.mxu0 0.0
    %2823 = vmatpush1.msra.mxu0 0.0
    %2824 = vmatprep.subr.mxu0 0.0
    %2825 = vmatpush1.msra.mxu0 0.0
    %2826 = vmatprep.subr.mxu0 0.0
    %2827 = vmatpush1.msra.mxu0 0.0
    %2828 = vmatprep.subr.mxu0 0.0
    %2829 = vmatpush1.msra.mxu0 0.0
    %2830 = vmatprep.subr.mxu0 0.0
    %2831 = vmatpush1.msra.mxu0 0.0
    %2832 = vmatprep.subr.mxu0 0.0
    %2833 = vmatpush1.msra.mxu0 0.0
    %2834 = vmatprep.subr.mxu0 0.0
    %2835 = vmatpush1.msra.mxu0 0.0
    %2836 = vmatprep.subr.mxu0 0.0
    %2837 = vmatpush1.msra.mxu0 0.0
    %2838 = vmatprep.subr.mxu0 0.0
    %2839 = vmatpush1.msra.mxu0 0.0
    %2840 = vmatprep.subr.mxu0 0.0
    %2841 = vmatpush1.msra.mxu0 0.0
    %2842 = vmatprep.subr.mxu0 0.0
    %2843 = vmatpush1.msra.mxu0 0.0
    %2844 = vmatprep.subr.mxu0 0.0
    %2845 = vmatpush1.msra.mxu0 0.0
    %2846 = vmatprep.subr.mxu0 0.0
    %2847 = vmatpush1.msra.mxu0 0.0
    %2848 = vmatprep.subr.mxu0 0.0
    %2849 = vmatpush1.msra.mxu0 0.0
    %2850 = vmatprep.subr.mxu0 0.0
    %2851 = vmatpush1.msra.mxu0 0.0
    %2852 = vmatprep.subr.mxu0 0.0
    %2853 = vmatpush1.msra.mxu0 0.0
    %2854 = vmatprep.subr.mxu0 0.0
    %2855 = vmatpush1.msra.mxu0 0.0
    %2856 = vmatprep.subr.mxu0 0.0
    %2857 = vmatpush1.msra.mxu0 0.0
    %2858 = vmatprep.subr.mxu0 0.0
    %2859 = vmatpush1.msra.mxu0 0.0
    %2860 = vmatprep.mubr.f32.mxu0 0.0
    %2861 = vmatmul.mubr.f32.gmra.mrb[0].mxu0 %v2761
    %v2862 = vpop.f32.mrb[0].mxu0
    %v2863 = vadd.f32 0.0, %v2862
    %v2864 = vpop.f32.mrb[0].mxu0
    %v2865 = vadd.f32 0.0, %v2864
    %2866 = vmatprep.mubr.f32.mxu0 0.0
    %2867 = vmatmul.mubr.f32.gmra.mrb[0].mxu0 %v2764
    %v2868 = vpop.f32.mrb[0].mxu0
    %v2869 = vadd.f32 0.0, %v2868
    %v2870 = vpop.f32.mrb[0].mxu0
    %v2871 = vadd.f32 0.0, %v2870
    %2872 = vmatprep.mubr.f32.mxu0 0.0
    %2873 = vmatmul.mubr.f32.gmra.mrb[0].mxu0 %v2767
    %v2874 = vpop.f32.mrb[0].mxu0
    %v2875 = vadd.f32 0.0, %v2874
    %v2876 = vpop.f32.mrb[0].mxu0
    %v2877 = vadd.f32 0.0, %v2876
    %2878 = vmatprep.mubr.f32.mxu0 0.0
    %2879 = vmatmul.mubr.f32.gmra.mrb[0].mxu0 %v2770
    %v2880 = vpop.f32.mrb[0].mxu0
    %v2881 = vadd.f32 0.0, %v2880
    %v2882 = vpop.f32.mrb[0].mxu0
    %v2883 = vadd.f32 0.0, %v2882
    %2884 = vmatprep.mubr.f32.mxu0 0.0
    %2885 = vmatmul.mubr.f32.gmra.mrb[0].mxu0 %v2773
    %v2886 = vpop.f32.mrb[0].mxu0
    %v2887 = vadd.f32 0.0, %v2886
    %v2888 = vpop.f32.mrb[0].mxu0
    %v2889 = vadd.f32 0.0, %v2888
    %2890 = vmatprep.mubr.f32.mxu0 0.0
    %2891 = vmatmul.mubr.f32.gmra.mrb[0].mxu0 %v2776
    %v2892 = vpop.f32.mrb[0].mxu0
    %v2893 = vadd.f32 0.0, %v2892
    %v2894 = vpop.f32.mrb[0].mxu0
    %v2895 = vadd.f32 0.0, %v2894
    %2896 = vmatprep.mubr.f32.mxu0 0.0
    %2897 = vmatmul.mubr.f32.gmra.mrb[0].mxu0 %v2779
    %v2898 = vpop.f32.mrb[0].mxu0
    %v2899 = vadd.f32 0.0, %v2898
    %v2900 = vpop.f32.mrb[0].mxu0
    %v2901 = vadd.f32 0.0, %v2900
    %2902 = vmatprep.mubr.f32.mxu0 0.0
    %2903 = vmatmul.mubr.f32.gmra.mrb[0].mxu0 %v2782
    %v2904 = vpop.f32.mrb[0].mxu0
    %v2905 = vadd.f32 0.0, %v2904
    %v2906 = vpop.f32.mrb[0].mxu0
    %v2907 = vadd.f32 0.0, %v2906
    %2908 = vmatprep.mubr.f32.mxu0 0.0
    %2909 = vmatmul.mubr.f32.gmra.mrb[0].mxu0 %v2785
    %v2910 = vpop.f32.mrb[0].mxu0
    %v2911 = vadd.f32 0.0, %v2910
    %v2912 = vpop.f32.mrb[0].mxu0
    %v2913 = vadd.f32 0.0, %v2912
    %2914 = vmatprep.mubr.f32.mxu0 0.0
    %2915 = vmatmul.mubr.f32.gmra.mrb[0].mxu0 %v2788
    %v2916 = vpop.f32.mrb[0].mxu0
    %v2917 = vadd.f32 0.0, %v2916
    %v2918 = vpop.f32.mrb[0].mxu0
    %v2919 = vadd.f32 0.0, %v2918
    %2920 = vmatprep.mubr.f32.mxu0 0.0
    %2921 = vmatmul.mubr.f32.gmra.mrb[0].mxu0 %v2791
    %v2922 = vpop.f32.mrb[0].mxu0
    %v2923 = vadd.f32 0.0, %v2922
    %v2924 = vpop.f32.mrb[0].mxu0
    %v2925 = vadd.f32 0.0, %v2924
    %2926 = vmatprep.mubr.f32.mxu0 0.0
    %2927 = vmatmul.mubr.f32.gmra.mrb[0].mxu0 %v2794
    %v2928 = vpop.f32.mrb[0].mxu0
    %v2929 = vadd.f32 0.0, %v2928
    %v2930 = vpop.f32.mrb[0].mxu0
    %v2931 = vadd.f32 0.0, %v2930
    %2932 = vdwg.mxu0
    %v2933 = vld [vmem:[#allocation12] sm:$0xff]
    %v2934 = vld [vmem:[#allocation12 + $0x8] sm:$0xff]
    %v2935 = vld [vmem:[#allocation12 + $0x10] sm:$0xff]
    %v2936 = vld [vmem:[#allocation12 + $0x18] sm:$0xff]
    %v2937 = vld [vmem:[#allocation12 + $0x20] sm:$0xff]
    %v2938 = vld [vmem:[#allocation12 + $0x28] sm:$0xff]
    %v2939 = vld [vmem:[#allocation12 + $0x30] sm:$0xff]
    %v2940 = vld [vmem:[#allocation12 + $0x38] sm:$0xff]
    %v2941 = vld [vmem:[#allocation12 + $0x40] sm:$0xff]
    %v2942 = vld [vmem:[#allocation12 + $0x48] sm:$0xff]
    %v2943 = vld [vmem:[#allocation12 + $0x50] sm:$0xff]
    %v2944 = vld [vmem:[#allocation12 + $0x58] sm:$0xff]
    %v2945 = vld [vmem:[#allocation12 + $0x60] sm:$0xff]
    %v2946 = vld [vmem:[#allocation12 + $0x68] sm:$0xff]
    %v2947 = vld [vmem:[#allocation12 + $0x70] sm:$0xff]
    %v2948 = vld [vmem:[#allocation12 + $0x78] sm:$0xff]
    %v2949 = vld [vmem:[#allocation12 + $0x80] sm:$0xff]
    %v2950 = vld [vmem:[#allocation12 + $0x88] sm:$0xff]
    %v2951 = vld [vmem:[#allocation12 + $0x90] sm:$0xff]
    %v2952 = vld [vmem:[#allocation12 + $0x98] sm:$0xff]
    %v2953 = vld [vmem:[#allocation12 + $0xa0] sm:$0xff]
    %v2954 = vld [vmem:[#allocation12 + $0xa8] sm:$0xff]
    %v2955 = vld [vmem:[#allocation12 + $0xb0] sm:$0xff]
    %v2956 = vld [vmem:[#allocation12 + $0xb8] sm:$0xff]
    %v2957 = vld [vmem:[#allocation12 + $0xc0] sm:$0xff]
    %v2958 = vld [vmem:[#allocation12 + $0xc8] sm:$0xff]
    %v2959 = vld [vmem:[#allocation12 + $0xd0] sm:$0xff]
    %v2960 = vld [vmem:[#allocation12 + $0xd8] sm:$0xff]
    %v2961 = vld [vmem:[#allocation12 + $0xe0] sm:$0xff]
    %v2962 = vld [vmem:[#allocation12 + $0xe8] sm:$0xff]
    %v2963 = vld [vmem:[#allocation12 + $0xf0] sm:$0xff]
    %v2964 = vld [vmem:[#allocation12 + $0xf8] sm:$0xff]
    %v2965 = vld [vmem:[#allocation12 + $0x100] sm:$0xff]
    %v2966 = vld [vmem:[#allocation12 + $0x108] sm:$0xff]
    %v2967 = vld [vmem:[#allocation12 + $0x110] sm:$0xff]
    %v2968 = vld [vmem:[#allocation12 + $0x118] sm:$0xff]
    %v2969 = vld [vmem:[#allocation12 + $0x120] sm:$0xff]
    %v2970 = vld [vmem:[#allocation12 + $0x128] sm:$0xff]
    %v2971 = vld [vmem:[#allocation12 + $0x130] sm:$0xff]
    %v2972 = vld [vmem:[#allocation12 + $0x138] sm:$0xff]
    %v2973 = vld [vmem:[#allocation12 + $0x140] sm:$0xff]
    %v2974 = vld [vmem:[#allocation12 + $0x148] sm:$0xff]
    %v2975 = vld [vmem:[#allocation12 + $0x150] sm:$0xff]
    %v2976 = vld [vmem:[#allocation12 + $0x158] sm:$0xff]
    %v2977 = vld [vmem:[#allocation12 + $0x160] sm:$0xff]
    %v2978 = vld [vmem:[#allocation12 + $0x168] sm:$0xff]
    %v2979 = vld [vmem:[#allocation12 + $0x170] sm:$0xff]
    %v2980 = vld [vmem:[#allocation12 + $0x178] sm:$0xff]
    %v2981 = vld [vmem:[#allocation12 + $0x180] sm:$0xff]
    %v2982 = vld [vmem:[#allocation12 + $0x188] sm:$0xff]
    %v2983 = vld [vmem:[#allocation12 + $0x190] sm:$0xff]
    %v2984 = vld [vmem:[#allocation12 + $0x198] sm:$0xff]
    %v2985 = vld [vmem:[#allocation12 + $0x1a0] sm:$0xff]
    %v2986 = vld [vmem:[#allocation12 + $0x1a8] sm:$0xff]
    %v2987 = vld [vmem:[#allocation12 + $0x1b0] sm:$0xff]
    %v2988 = vld [vmem:[#allocation12 + $0x1b8] sm:$0xff]
    %v2989 = vld [vmem:[#allocation12 + $0x1c0] sm:$0xff]
    %v2990 = vld [vmem:[#allocation12 + $0x1c8] sm:$0xff]
    %v2991 = vld [vmem:[#allocation12 + $0x1d0] sm:$0xff]
    %v2992 = vld [vmem:[#allocation12 + $0x1d8] sm:$0xff]
    %v2993 = vld [vmem:[#allocation12 + $0x1e0] sm:$0xff]
    %v2994 = vld [vmem:[#allocation12 + $0x1e8] sm:$0xff]
    %v2995 = vld [vmem:[#allocation12 + $0x1f0] sm:$0xff]
    %v2996 = vld [vmem:[#allocation12 + $0x1f8] sm:$0xff]
    %s2997 = scalar_lea.vmem [#allocation12], 512
    %v2998 = vld [vmem:[%s2997] sm:$0xff]
    %v2999 = vld [vmem:[%s2997 + $0x8] sm:$0xff]
    %v3000 = vld [vmem:[%s2997 + $0x10] sm:$0xff]
    %v3001 = vld [vmem:[%s2997 + $0x18] sm:$0xff]
    %v3002 = vld [vmem:[%s2997 + $0x20] sm:$0xff]
    %v3003 = vld [vmem:[%s2997 + $0x28] sm:$0xff]
    %v3004 = vld [vmem:[%s2997 + $0x30] sm:$0xff]
    %v3005 = vld [vmem:[%s2997 + $0x38] sm:$0xff]
    %v3006 = vld [vmem:[%s2997 + $0x40] sm:$0xff]
    %v3007 = vld [vmem:[%s2997 + $0x48] sm:$0xff]
    %v3008 = vld [vmem:[%s2997 + $0x50] sm:$0xff]
    %v3009 = vld [vmem:[%s2997 + $0x58] sm:$0xff]
    %v3010 = vld [vmem:[%s2997 + $0x60] sm:$0xff]
    %v3011 = vld [vmem:[%s2997 + $0x68] sm:$0xff]
    %v3012 = vld [vmem:[%s2997 + $0x70] sm:$0xff]
    %v3013 = vld [vmem:[%s2997 + $0x78] sm:$0xff]
    %v3014 = vld [vmem:[%s2997 + $0x80] sm:$0xff]
    %v3015 = vld [vmem:[%s2997 + $0x88] sm:$0xff]
    %v3016 = vld [vmem:[%s2997 + $0x90] sm:$0xff]
    %v3017 = vld [vmem:[%s2997 + $0x98] sm:$0xff]
    %v3018 = vld [vmem:[%s2997 + $0xa0] sm:$0xff]
    %v3019 = vld [vmem:[%s2997 + $0xa8] sm:$0xff]
    %v3020 = vld [vmem:[%s2997 + $0xb0] sm:$0xff]
    %v3021 = vld [vmem:[%s2997 + $0xb8] sm:$0xff]
    %v3022 = vld [vmem:[%s2997 + $0xc0] sm:$0xff]
    %v3023 = vld [vmem:[%s2997 + $0xc8] sm:$0xff]
    %v3024 = vld [vmem:[%s2997 + $0xd0] sm:$0xff]
    %v3025 = vld [vmem:[%s2997 + $0xd8] sm:$0xff]
    %v3026 = vld [vmem:[%s2997 + $0xe0] sm:$0xff]
    %v3027 = vld [vmem:[%s2997 + $0xe8] sm:$0xff]
    %v3028 = vld [vmem:[%s2997 + $0xf0] sm:$0xff]
    %v3029 = vld [vmem:[%s2997 + $0xf8] sm:$0xff]
    %v3030 = vld [vmem:[%s2997 + $0x100] sm:$0xff]
    %v3031 = vld [vmem:[%s2997 + $0x108] sm:$0xff]
    %v3032 = vld [vmem:[%s2997 + $0x110] sm:$0xff]
    %v3033 = vld [vmem:[%s2997 + $0x118] sm:$0xff]
    %v3034 = vld [vmem:[%s2997 + $0x120] sm:$0xff]
    %v3035 = vld [vmem:[%s2997 + $0x128] sm:$0xff]
    %v3036 = vld [vmem:[%s2997 + $0x130] sm:$0xff]
    %v3037 = vld [vmem:[%s2997 + $0x138] sm:$0xff]
    %v3038 = vld [vmem:[%s2997 + $0x140] sm:$0xff]
    %v3039 = vld [vmem:[%s2997 + $0x148] sm:$0xff]
    %v3040 = vld [vmem:[%s2997 + $0x150] sm:$0xff]
    %v3041 = vld [vmem:[%s2997 + $0x158] sm:$0xff]
    %v3042 = vld [vmem:[%s2997 + $0x160] sm:$0xff]
    %v3043 = vld [vmem:[%s2997 + $0x168] sm:$0xff]
    %v3044 = vld [vmem:[%s2997 + $0x170] sm:$0xff]
    %v3045 = vld [vmem:[%s2997 + $0x178] sm:$0xff]
    %v3046 = vld [vmem:[%s2997 + $0x180] sm:$0xff]
    %v3047 = vld [vmem:[%s2997 + $0x188] sm:$0xff]
    %v3048 = vld [vmem:[%s2997 + $0x190] sm:$0xff]
    %v3049 = vld [vmem:[%s2997 + $0x198] sm:$0xff]
    %v3050 = vld [vmem:[%s2997 + $0x1a0] sm:$0xff]
    %v3051 = vld [vmem:[%s2997 + $0x1a8] sm:$0xff]
    %v3052 = vld [vmem:[%s2997 + $0x1b0] sm:$0xff]
    %v3053 = vld [vmem:[%s2997 + $0x1b8] sm:$0xff]
    %v3054 = vld [vmem:[%s2997 + $0x1c0] sm:$0xff]
    %v3055 = vld [vmem:[%s2997 + $0x1c8] sm:$0xff]
    %v3056 = vld [vmem:[%s2997 + $0x1d0] sm:$0xff]
    %v3057 = vld [vmem:[%s2997 + $0x1d8] sm:$0xff]
    %v3058 = vld [vmem:[%s2997 + $0x1e0] sm:$0xff]
    %v3059 = vld [vmem:[%s2997 + $0x1e8] sm:$0xff]
    %v3060 = vld [vmem:[%s2997 + $0x1f0] sm:$0xff]
    %v3061 = vld [vmem:[%s2997 + $0x1f8] sm:$0xff]
    %3062 = vmatprep.subr.mxu0 %v2999
    %3063 = vmatpush1.msra.mxu0 %v2998
    %3064 = vmatprep.subr.mxu0 %v3001
    %3065 = vmatpush1.msra.mxu0 %v3000
    %3066 = vmatprep.subr.mxu0 %v3003
    %3067 = vmatpush1.msra.mxu0 %v3002
    %3068 = vmatprep.subr.mxu0 %v3005
    %3069 = vmatpush1.msra.mxu0 %v3004
    %3070 = vmatprep.subr.mxu0 %v3007
    %3071 = vmatpush1.msra.mxu0 %v3006
    %3072 = vmatprep.subr.mxu0 %v3009
    %3073 = vmatpush1.msra.mxu0 %v3008
    %3074 = vmatprep.subr.mxu0 %v3011
    %3075 = vmatpush1.msra.mxu0 %v3010
    %3076 = vmatprep.subr.mxu0 %v3013
    %3077 = vmatpush1.msra.mxu0 %v3012
    %3078 = vmatprep.subr.mxu0 %v3015
    %3079 = vmatpush1.msra.mxu0 %v3014
    %3080 = vmatprep.subr.mxu0 %v3017
    %3081 = vmatpush1.msra.mxu0 %v3016
    %3082 = vmatprep.subr.mxu0 %v3019
    %3083 = vmatpush1.msra.mxu0 %v3018
    %3084 = vmatprep.subr.mxu0 %v3021
    %3085 = vmatpush1.msra.mxu0 %v3020
    %3086 = vmatprep.subr.mxu0 %v3023
    %3087 = vmatpush1.msra.mxu0 %v3022
    %3088 = vmatprep.subr.mxu0 %v3025
    %3089 = vmatpush1.msra.mxu0 %v3024
    %3090 = vmatprep.subr.mxu0 %v3027
    %3091 = vmatpush1.msra.mxu0 %v3026
    %3092 = vmatprep.subr.mxu0 %v3029
    %3093 = vmatpush1.msra.mxu0 %v3028
    %3094 = vmatprep.subr.mxu0 %v3031
    %3095 = vmatpush1.msra.mxu0 %v3030
    %3096 = vmatprep.subr.mxu0 %v3033
    %3097 = vmatpush1.msra.mxu0 %v3032
    %3098 = vmatprep.subr.mxu0 %v3035
    %3099 = vmatpush1.msra.mxu0 %v3034
    %3100 = vmatprep.subr.mxu0 %v3037
    %3101 = vmatpush1.msra.mxu0 %v3036
    %3102 = vmatprep.subr.mxu0 %v3039
    %3103 = vmatpush1.msra.mxu0 %v3038
    %3104 = vmatprep.subr.mxu0 %v3041
    %3105 = vmatpush1.msra.mxu0 %v3040
    %3106 = vmatprep.subr.mxu0 %v3043
    %3107 = vmatpush1.msra.mxu0 %v3042
    %3108 = vmatprep.subr.mxu0 %v3045
    %3109 = vmatpush1.msra.mxu0 %v3044
    %3110 = vmatprep.subr.mxu0 %v3047
    %3111 = vmatpush1.msra.mxu0 %v3046
    %3112 = vmatprep.subr.mxu0 %v3049
    %3113 = vmatpush1.msra.mxu0 %v3048
    %3114 = vmatprep.subr.mxu0 %v3051
    %3115 = vmatpush1.msra.mxu0 %v3050
    %3116 = vmatprep.subr.mxu0 %v3053
    %3117 = vmatpush1.msra.mxu0 %v3052
    %3118 = vmatprep.subr.mxu0 %v3055
    %3119 = vmatpush1.msra.mxu0 %v3054
    %3120 = vmatprep.subr.mxu0 %v3057
    %3121 = vmatpush1.msra.mxu0 %v3056
    %3122 = vmatprep.subr.mxu0 %v3059
    %3123 = vmatpush1.msra.mxu0 %v3058
    %3124 = vmatprep.subr.mxu0 %v3061
    %3125 = vmatpush1.msra.mxu0 %v3060
    %3126 = vmatprep.mubr.f32.mxu0 %v2889
    %3127 = vmatmul.mubr.f32.gmra.mrb[0].mxu0 %v2887
    %v3128 = vpop.f32.mrb[0].mxu0
    %v3129 = vadd.f32 0.0, %v3128
    %v3130 = vpop.f32.mrb[0].mxu0
    %v3131 = vadd.f32 0.0, %v3130
    %3132 = vmatprep.mubr.f32.mxu0 %v2895
    %3133 = vmatmul.mubr.f32.gmra.mrb[0].mxu0 %v2893
    %v3134 = vpop.f32.mrb[0].mxu0
    %v3135 = vadd.f32 0.0, %v3134
    %v3136 = vpop.f32.mrb[0].mxu0
    %v3137 = vadd.f32 0.0, %v3136
    %3138 = vmatprep.mubr.f32.mxu0 %v2901
    %3139 = vmatmul.mubr.f32.gmra.mrb[0].mxu0 %v2899
    %v3140 = vpop.f32.mrb[0].mxu0
    %v3141 = vadd.f32 0.0, %v3140
    %v3142 = vpop.f32.mrb[0].mxu0
    %v3143 = vadd.f32 0.0, %v3142
    %3144 = vmatprep.mubr.f32.mxu0 %v2907
    %3145 = vmatmul.mubr.f32.gmra.mrb[0].mxu0 %v2905
    %v3146 = vpop.f32.mrb[0].mxu0
    %v3147 = vadd.f32 0.0, %v3146
    %v3148 = vpop.f32.mrb[0].mxu0
    %v3149 = vadd.f32 0.0, %v3148
    %3150 = vdwg.mxu0
    %3151 = vmatprep.subr.mxu0 %v2934
    %3152 = vmatpush1.msra.mxu0 %v2933
    %3153 = vmatprep.subr.mxu0 %v2936
    %3154 = vmatpush1.msra.mxu0 %v2935
    %3155 = vmatprep.subr.mxu0 %v2938
    %3156 = vmatpush1.msra.mxu0 %v2937
    %3157 = vmatprep.subr.mxu0 %v2940
    %3158 = vmatpush1.msra.mxu0 %v2939
    %3159 = vmatprep.subr.mxu0 %v2942
    %3160 = vmatpush1.msra.mxu0 %v2941
    %3161 = vmatprep.subr.mxu0 %v2944
    %3162 = vmatpush1.msra.mxu0 %v2943
    %3163 = vmatprep.subr.mxu0 %v2946
    %3164 = vmatpush1.msra.mxu0 %v2945
    %3165 = vmatprep.subr.mxu0 %v2948
    %3166 = vmatpush1.msra.mxu0 %v2947
    %3167 = vmatprep.subr.mxu0 %v2950
    %3168 = vmatpush1.msra.mxu0 %v2949
    %3169 = vmatprep.subr.mxu0 %v2952
    %3170 = vmatpush1.msra.mxu0 %v2951
    %3171 = vmatprep.subr.mxu0 %v2954
    %3172 = vmatpush1.msra.mxu0 %v2953
    %3173 = vmatprep.subr.mxu0 %v2956
    %3174 = vmatpush1.msra.mxu0 %v2955
    %3175 = vmatprep.subr.mxu0 %v2958
    %3176 = vmatpush1.msra.mxu0 %v2957
    %3177 = vmatprep.subr.mxu0 %v2960
    %3178 = vmatpush1.msra.mxu0 %v2959
    %3179 = vmatprep.subr.mxu0 %v2962
    %3180 = vmatpush1.msra.mxu0 %v2961
    %3181 = vmatprep.subr.mxu0 %v2964
    %3182 = vmatpush1.msra.mxu0 %v2963
    %3183 = vmatprep.subr.mxu0 %v2966
    %3184 = vmatpush1.msra.mxu0 %v2965
    %3185 = vmatprep.subr.mxu0 %v2968
    %3186 = vmatpush1.msra.mxu0 %v2967
    %3187 = vmatprep.subr.mxu0 %v2970
    %3188 = vmatpush1.msra.mxu0 %v2969
    %3189 = vmatprep.subr.mxu0 %v2972
    %3190 = vmatpush1.msra.mxu0 %v2971
    %3191 = vmatprep.subr.mxu0 %v2974
    %3192 = vmatpush1.msra.mxu0 %v2973
    %3193 = vmatprep.subr.mxu0 %v2976
    %3194 = vmatpush1.msra.mxu0 %v2975
    %3195 = vmatprep.subr.mxu0 %v2978
    %3196 = vmatpush1.msra.mxu0 %v2977
    %3197 = vmatprep.subr.mxu0 %v2980
    %3198 = vmatpush1.msra.mxu0 %v2979
    %3199 = vmatprep.subr.mxu0 %v2982
    %3200 = vmatpush1.msra.mxu0 %v2981
    %3201 = vmatprep.subr.mxu0 %v2984
    %3202 = vmatpush1.msra.mxu0 %v2983
    %3203 = vmatprep.subr.mxu0 %v2986
    %3204 = vmatpush1.msra.mxu0 %v2985
    %3205 = vmatprep.subr.mxu0 %v2988
    %3206 = vmatpush1.msra.mxu0 %v2987
    %3207 = vmatprep.subr.mxu0 %v2990
    %3208 = vmatpush1.msra.mxu0 %v2989
    %3209 = vmatprep.subr.mxu0 %v2992
    %3210 = vmatpush1.msra.mxu0 %v2991
    %3211 = vmatprep.subr.mxu0 %v2994
    %3212 = vmatpush1.msra.mxu0 %v2993
    %3213 = vmatprep.subr.mxu0 %v2996
    %3214 = vmatpush1.msra.mxu0 %v2995
    %3215 = vmatprep.mubr.f32.mxu0 %v2865
    %3216 = vmatmul.mubr.f32.gmra.mrb[0].mxu0 %v2863
    %v3217 = vpop.f32.mrb[0].mxu0
    %v3218 = vadd.f32 %v3129, %v3217
    %v3219 = vpop.f32.mrb[0].mxu0
    %v3220 = vadd.f32 %v3131, %v3219
    %3221 = vmatprep.mubr.f32.mxu0 %v2871
    %3222 = vmatmul.mubr.f32.gmra.mrb[0].mxu0 %v2869
    %v3223 = vpop.f32.mrb[0].mxu0
    %v3224 = vadd.f32 %v3135, %v3223
    %v3225 = vpop.f32.mrb[0].mxu0
    %v3226 = vadd.f32 %v3137, %v3225
    %3227 = vmatprep.mubr.f32.mxu0 %v2877
    %3228 = vmatmul.mubr.f32.gmra.mrb[0].mxu0 %v2875
    %v3229 = vpop.f32.mrb[0].mxu0
    %v3230 = vadd.f32 %v3141, %v3229
    %v3231 = vpop.f32.mrb[0].mxu0
    %v3232 = vadd.f32 %v3143, %v3231
    %3233 = vmatprep.mubr.f32.mxu0 %v2883
    %3234 = vmatmul.mubr.f32.gmra.mrb[0].mxu0 %v2881
    %v3235 = vpop.f32.mrb[0].mxu0
    %v3236 = vadd.f32 %v3147, %v3235
    %v3237 = vpop.f32.mrb[0].mxu0
    %v3238 = vadd.f32 %v3149, %v3237
    %3239 = vdwg.mxu0
    %s3240 = scalar_lea.vmem [#allocation12], 1024
    %v3241 = vld [vmem:[%s3240] sm:$0xff]
    %v3242 = vld [vmem:[%s3240 + $0x8] sm:$0xff]
    %v3243 = vld [vmem:[%s3240 + $0x10] sm:$0xff]
    %v3244 = vld [vmem:[%s3240 + $0x18] sm:$0xff]
    %v3245 = vld [vmem:[%s3240 + $0x20] sm:$0xff]
    %v3246 = vld [vmem:[%s3240 + $0x28] sm:$0xff]
    %v3247 = vld [vmem:[%s3240 + $0x30] sm:$0xff]
    %v3248 = vld [vmem:[%s3240 + $0x38] sm:$0xff]
    %v3249 = vld [vmem:[%s3240 + $0x40] sm:$0xff]
    %v3250 = vld [vmem:[%s3240 + $0x48] sm:$0xff]
    %v3251 = vld [vmem:[%s3240 + $0x50] sm:$0xff]
    %v3252 = vld [vmem:[%s3240 + $0x58] sm:$0xff]
    %v3253 = vld [vmem:[%s3240 + $0x60] sm:$0xff]
    %v3254 = vld [vmem:[%s3240 + $0x68] sm:$0xff]
    %v3255 = vld [vmem:[%s3240 + $0x70] sm:$0xff]
    %v3256 = vld [vmem:[%s3240 + $0x78] sm:$0xff]
    %v3257 = vld [vmem:[%s3240 + $0x80] sm:$0xff]
    %v3258 = vld [vmem:[%s3240 + $0x88] sm:$0xff]
    %v3259 = vld [vmem:[%s3240 + $0x90] sm:$0xff]
    %v3260 = vld [vmem:[%s3240 + $0x98] sm:$0xff]
    %v3261 = vld [vmem:[%s3240 + $0xa0] sm:$0xff]
    %v3262 = vld [vmem:[%s3240 + $0xa8] sm:$0xff]
    %v3263 = vld [vmem:[%s3240 + $0xb0] sm:$0xff]
    %v3264 = vld [vmem:[%s3240 + $0xb8] sm:$0xff]
    %v3265 = vld [vmem:[%s3240 + $0xc0] sm:$0xff]
    %v3266 = vld [vmem:[%s3240 + $0xc8] sm:$0xff]
    %v3267 = vld [vmem:[%s3240 + $0xd0] sm:$0xff]
    %v3268 = vld [vmem:[%s3240 + $0xd8] sm:$0xff]
    %v3269 = vld [vmem:[%s3240 + $0xe0] sm:$0xff]
    %v3270 = vld [vmem:[%s3240 + $0xe8] sm:$0xff]
    %v3271 = vld [vmem:[%s3240 + $0xf0] sm:$0xff]
    %v3272 = vld [vmem:[%s3240 + $0xf8] sm:$0xff]
    %v3273 = vld [vmem:[%s3240 + $0x100] sm:$0xff]
    %v3274 = vld [vmem:[%s3240 + $0x108] sm:$0xff]
    %v3275 = vld [vmem:[%s3240 + $0x110] sm:$0xff]
    %v3276 = vld [vmem:[%s3240 + $0x118] sm:$0xff]
    %v3277 = vld [vmem:[%s3240 + $0x120] sm:$0xff]
    %v3278 = vld [vmem:[%s3240 + $0x128] sm:$0xff]
    %v3279 = vld [vmem:[%s3240 + $0x130] sm:$0xff]
    %v3280 = vld [vmem:[%s3240 + $0x138] sm:$0xff]
    %v3281 = vld [vmem:[%s3240 + $0x140] sm:$0xff]
    %v3282 = vld [vmem:[%s3240 + $0x148] sm:$0xff]
    %v3283 = vld [vmem:[%s3240 + $0x150] sm:$0xff]
    %v3284 = vld [vmem:[%s3240 + $0x158] sm:$0xff]
    %v3285 = vld [vmem:[%s3240 + $0x160] sm:$0xff]
    %v3286 = vld [vmem:[%s3240 + $0x168] sm:$0xff]
    %v3287 = vld [vmem:[%s3240 + $0x170] sm:$0xff]
    %v3288 = vld [vmem:[%s3240 + $0x178] sm:$0xff]
    %v3289 = vld [vmem:[%s3240 + $0x180] sm:$0xff]
    %v3290 = vld [vmem:[%s3240 + $0x188] sm:$0xff]
    %v3291 = vld [vmem:[%s3240 + $0x190] sm:$0xff]
    %v3292 = vld [vmem:[%s3240 + $0x198] sm:$0xff]
    %v3293 = vld [vmem:[%s3240 + $0x1a0] sm:$0xff]
    %v3294 = vld [vmem:[%s3240 + $0x1a8] sm:$0xff]
    %v3295 = vld [vmem:[%s3240 + $0x1b0] sm:$0xff]
    %v3296 = vld [vmem:[%s3240 + $0x1b8] sm:$0xff]
    %v3297 = vld [vmem:[%s3240 + $0x1c0] sm:$0xff]
    %v3298 = vld [vmem:[%s3240 + $0x1c8] sm:$0xff]
    %v3299 = vld [vmem:[%s3240 + $0x1d0] sm:$0xff]
    %v3300 = vld [vmem:[%s3240 + $0x1d8] sm:$0xff]
    %v3301 = vld [vmem:[%s3240 + $0x1e0] sm:$0xff]
    %v3302 = vld [vmem:[%s3240 + $0x1e8] sm:$0xff]
    %v3303 = vld [vmem:[%s3240 + $0x1f0] sm:$0xff]
    %v3304 = vld [vmem:[%s3240 + $0x1f8] sm:$0xff]
    %3305 = vmatprep.subr.mxu0 %v3242
    %3306 = vmatpush1.msra.mxu0 %v3241
    %3307 = vmatprep.subr.mxu0 %v3244
    %3308 = vmatpush1.msra.mxu0 %v3243
    %3309 = vmatprep.subr.mxu0 %v3246
    %3310 = vmatpush1.msra.mxu0 %v3245
    %3311 = vmatprep.subr.mxu0 %v3248
    %3312 = vmatpush1.msra.mxu0 %v3247
    %3313 = vmatprep.subr.mxu0 %v3250
    %3314 = vmatpush1.msra.mxu0 %v3249
    %3315 = vmatprep.subr.mxu0 %v3252
    %3316 = vmatpush1.msra.mxu0 %v3251
    %3317 = vmatprep.subr.mxu0 %v3254
    %3318 = vmatpush1.msra.mxu0 %v3253
    %3319 = vmatprep.subr.mxu0 %v3256
    %3320 = vmatpush1.msra.mxu0 %v3255
    %3321 = vmatprep.subr.mxu0 %v3258
    %3322 = vmatpush1.msra.mxu0 %v3257
    %3323 = vmatprep.subr.mxu0 %v3260
    %3324 = vmatpush1.msra.mxu0 %v3259
    %3325 = vmatprep.subr.mxu0 %v3262
    %3326 = vmatpush1.msra.mxu0 %v3261
    %3327 = vmatprep.subr.mxu0 %v3264
    %3328 = vmatpush1.msra.mxu0 %v3263
    %3329 = vmatprep.subr.mxu0 %v3266
    %3330 = vmatpush1.msra.mxu0 %v3265
    %3331 = vmatprep.subr.mxu0 %v3268
    %3332 = vmatpush1.msra.mxu0 %v3267
    %3333 = vmatprep.subr.mxu0 %v3270
    %3334 = vmatpush1.msra.mxu0 %v3269
    %3335 = vmatprep.subr.mxu0 %v3272
    %3336 = vmatpush1.msra.mxu0 %v3271
    %3337 = vmatprep.subr.mxu0 %v3274
    %3338 = vmatpush1.msra.mxu0 %v3273
    %3339 = vmatprep.subr.mxu0 %v3276
    %3340 = vmatpush1.msra.mxu0 %v3275
    %3341 = vmatprep.subr.mxu0 %v3278
    %3342 = vmatpush1.msra.mxu0 %v3277
    %3343 = vmatprep.subr.mxu0 %v3280
    %3344 = vmatpush1.msra.mxu0 %v3279
    %3345 = vmatprep.subr.mxu0 %v3282
    %3346 = vmatpush1.msra.mxu0 %v3281
    %3347 = vmatprep.subr.mxu0 %v3284
    %3348 = vmatpush1.msra.mxu0 %v3283
    %3349 = vmatprep.subr.mxu0 %v3286
    %3350 = vmatpush1.msra.mxu0 %v3285
    %3351 = vmatprep.subr.mxu0 %v3288
    %3352 = vmatpush1.msra.mxu0 %v3287
    %3353 = vmatprep.subr.mxu0 %v3290
    %3354 = vmatpush1.msra.mxu0 %v3289
    %3355 = vmatprep.subr.mxu0 %v3292
    %3356 = vmatpush1.msra.mxu0 %v3291
    %3357 = vmatprep.subr.mxu0 %v3294
    %3358 = vmatpush1.msra.mxu0 %v3293
    %3359 = vmatprep.subr.mxu0 %v3296
    %3360 = vmatpush1.msra.mxu0 %v3295
    %3361 = vmatprep.subr.mxu0 %v3298
    %3362 = vmatpush1.msra.mxu0 %v3297
    %3363 = vmatprep.subr.mxu0 %v3300
    %3364 = vmatpush1.msra.mxu0 %v3299
    %3365 = vmatprep.subr.mxu0 %v3302
    %3366 = vmatpush1.msra.mxu0 %v3301
    %3367 = vmatprep.subr.mxu0 %v3304
    %3368 = vmatpush1.msra.mxu0 %v3303
    %3369 = vmatprep.mubr.f32.mxu0 %v2913
    %3370 = vmatmul.mubr.f32.gmra.mrb[0].mxu0 %v2911
    %v3371 = vpop.f32.mrb[0].mxu0
    %v3372 = vadd.f32 0.0, %v3371
    %v3373 = vpop.f32.mrb[0].mxu0
    %v3374 = vadd.f32 0.0, %v3373
    %3375 = vmatprep.mubr.f32.mxu0 %v2919
    %3376 = vmatmul.mubr.f32.gmra.mrb[0].mxu0 %v2917
    %v3377 = vpop.f32.mrb[0].mxu0
    %v3378 = vadd.f32 0.0, %v3377
    %v3379 = vpop.f32.mrb[0].mxu0
    %v3380 = vadd.f32 0.0, %v3379
    %3381 = vmatprep.mubr.f32.mxu0 %v2925
    %3382 = vmatmul.mubr.f32.gmra.mrb[0].mxu0 %v2923
    %v3383 = vpop.f32.mrb[0].mxu0
    %v3384 = vadd.f32 0.0, %v3383
    %v3385 = vpop.f32.mrb[0].mxu0
    %v3386 = vadd.f32 0.0, %v3385
    %3387 = vmatprep.mubr.f32.mxu0 %v2931
    %3388 = vmatmul.mubr.f32.gmra.mrb[0].mxu0 %v2929
    %v3389 = vpop.f32.mrb[0].mxu0
    %v3390 = vadd.f32 0.0, %v3389
    %v3391 = vpop.f32.mrb[0].mxu0
    %v3392 = vadd.f32 0.0, %v3391
    %3393 = vdwg.mxu0
    %v3394 = vadd.f32 %v3218, %v3372
    %v3395 = vadd.f32 %v3220, %v3374
    %v3396 = vadd.f32 %v3224, %v3378
    %v3397 = vadd.f32 %v3226, %v3380
    %v3398 = vadd.f32 %v3230, %v3384
    %v3399 = vadd.f32 %v3232, %v3386
    %v3400 = vadd.f32 %v3236, %v3390
    %v3401 = vadd.f32 %v3238, %v3392
    %v3402 = vld [vmem:[#allocation13] sm:$0x3]
    %v3404 = vlaneseq
    %v3405 = vshrl.u32 %v3404, 7
    %v3406 = vsub.s32 0, %v3405
    %v3407 = vrot.slane %v3402, %v3406
    %v3408 = vlaneseq
    %v3409 = vshrl.u32 %v3408, 7
    %v3410 = vsub.s32 1, %v3409
    %v3411 = vrot.slane %v3402, %v3410
    %v3414 = vadd.f32 %v3394, %v3407
    %v3415 = vadd.f32 %v3395, %v3411
    %v3416 = vadd.f32 %v3396, %v3407
    %v3417 = vadd.f32 %v3397, %v3411
    %v3418 = vadd.f32 %v3398, %v3407
    %v3419 = vadd.f32 %v3399, %v3411
    %v3420 = vadd.f32 %v3400, %v3407
    %v3421 = vadd.f32 %v3401, %v3411
    %v3422 = vmax.f32 %v3414, 0.0
    %v3423 = vmax.f32 %v3415, 0.0
    %v3424 = vmax.f32 %v3416, 0.0
    %v3425 = vmax.f32 %v3417, 0.0
    %v3426 = vmax.f32 %v3418, 0.0
    %v3427 = vmax.f32 %v3419, 0.0
    %v3428 = vmax.f32 %v3420, 0.0
    %v3429 = vmax.f32 %v3421, 0.0
    %v3430 = vld [vmem:[%s11] sm:$0xff]
    %v3431 = vld [vmem:[%s11 + $0x8] sm:$0xff]
    %v3432 = vld [vmem:[%s11 + $0x10] sm:$0xff]
    %v3433 = vld [vmem:[%s11 + $0x18] sm:$0xff]
    %v3434 = vld [vmem:[%s11 + $0x20] sm:$0xff]
    %v3435 = vld [vmem:[%s11 + $0x28] sm:$0xff]
    %vm3436 = vcmask 261120
    %v3438 = vsel %vm3436, %v3430, 0
    %v3441 = vsel %vm3436, %v3431, 0
    %v3444 = vsel %vm3436, %v3432, 0
    %v3447 = vsel %vm3436, %v3433, 0
    %v3450 = vsel %vm3436, %v3434, 0
    %v3453 = vsel %vm3436, %v3435, 0
    %3455 = vmatprep.subr.mxu0 %v3423
    %3456 = vmatpush1.msra.mxu0 %v3422
    %3457 = vmatprep.subr.mxu0 %v3425
    %3458 = vmatpush1.msra.mxu0 %v3424
    %3459 = vmatprep.subr.mxu0 %v3427
    %3460 = vmatpush1.msra.mxu0 %v3426
    %3461 = vmatprep.subr.mxu0 %v3429
    %3462 = vmatpush1.msra.mxu0 %v3428
    %3463 = vmatprep.subr.mxu0 0.0
    %3464 = vmatpush1.msra.mxu0 0.0
    %3465 = vmatprep.subr.mxu0 0.0
    %3466 = vmatpush1.msra.mxu0 0.0
    %3467 = vmatprep.subr.mxu0 0.0
    %3468 = vmatpush1.msra.mxu0 0.0
    %3469 = vmatprep.subr.mxu0 0.0
    %3470 = vmatpush1.msra.mxu0 0.0
    %3471 = vmatprep.subr.mxu0 0.0
    %3472 = vmatpush1.msra.mxu0 0.0
    %3473 = vmatprep.subr.mxu0 0.0
    %3474 = vmatpush1.msra.mxu0 0.0
    %3475 = vmatprep.subr.mxu0 0.0
    %3476 = vmatpush1.msra.mxu0 0.0
    %3477 = vmatprep.subr.mxu0 0.0
    %3478 = vmatpush1.msra.mxu0 0.0
    %3479 = vmatprep.subr.mxu0 0.0
    %3480 = vmatpush1.msra.mxu0 0.0
    %3481 = vmatprep.subr.mxu0 0.0
    %3482 = vmatpush1.msra.mxu0 0.0
    %3483 = vmatprep.subr.mxu0 0.0
    %3484 = vmatpush1.msra.mxu0 0.0
    %3485 = vmatprep.subr.mxu0 0.0
    %3486 = vmatpush1.msra.mxu0 0.0
    %3487 = vmatprep.subr.mxu0 0.0
    %3488 = vmatpush1.msra.mxu0 0.0
    %3489 = vmatprep.subr.mxu0 0.0
    %3490 = vmatpush1.msra.mxu0 0.0
    %3491 = vmatprep.subr.mxu0 0.0
    %3492 = vmatpush1.msra.mxu0 0.0
    %3493 = vmatprep.subr.mxu0 0.0
    %3494 = vmatpush1.msra.mxu0 0.0
    %3495 = vmatprep.subr.mxu0 0.0
    %3496 = vmatpush1.msra.mxu0 0.0
    %3497 = vmatprep.subr.mxu0 0.0
    %3498 = vmatpush1.msra.mxu0 0.0
    %3499 = vmatprep.subr.mxu0 0.0
    %3500 = vmatpush1.msra.mxu0 0.0
    %3501 = vmatprep.subr.mxu0 0.0
    %3502 = vmatpush1.msra.mxu0 0.0
    %3503 = vmatprep.subr.mxu0 0.0
    %3504 = vmatpush1.msra.mxu0 0.0
    %3505 = vmatprep.subr.mxu0 0.0
    %3506 = vmatpush1.msra.mxu0 0.0
    %3507 = vmatprep.subr.mxu0 0.0
    %3508 = vmatpush1.msra.mxu0 0.0
    %3509 = vmatprep.subr.mxu0 0.0
    %3510 = vmatpush1.msra.mxu0 0.0
    %3511 = vmatprep.subr.mxu0 0.0
    %3512 = vmatpush1.msra.mxu0 0.0
    %3513 = vmatprep.subr.mxu0 0.0
    %3514 = vmatpush1.msra.mxu0 0.0
    %3515 = vmatprep.subr.mxu0 0.0
    %3516 = vmatpush1.msra.mxu0 0.0
    %3517 = vmatprep.subr.mxu0 0.0
    %3518 = vmatpush1.msra.mxu0 0.0
    %3519 = vmatprep.mubr.f32.mxu0 0.0
    %3520 = vmatmul.mubr.f32.gmra.mrb[0].mxu0 %v3438
    %v3521 = vpop.f32.mrb[0].mxu0
    %v3522 = vadd.f32 0.0, %v3521
    %v3523 = vpop.f32.mrb[0].mxu0
    %v3524 = vadd.f32 0.0, %v3523
    %3525 = vmatprep.mubr.f32.mxu0 0.0
    %3526 = vmatmul.mubr.f32.gmra.mrb[0].mxu0 %v3441
    %v3527 = vpop.f32.mrb[0].mxu0
    %v3528 = vadd.f32 0.0, %v3527
    %v3529 = vpop.f32.mrb[0].mxu0
    %v3530 = vadd.f32 0.0, %v3529
    %3531 = vmatprep.mubr.f32.mxu0 0.0
    %3532 = vmatmul.mubr.f32.gmra.mrb[0].mxu0 %v3444
    %v3533 = vpop.f32.mrb[0].mxu0
    %v3534 = vadd.f32 0.0, %v3533
    %v3535 = vpop.f32.mrb[0].mxu0
    %v3536 = vadd.f32 0.0, %v3535
    %3537 = vmatprep.mubr.f32.mxu0 0.0
    %3538 = vmatmul.mubr.f32.gmra.mrb[0].mxu0 %v3447
    %v3539 = vpop.f32.mrb[0].mxu0
    %v3540 = vadd.f32 0.0, %v3539
    %v3541 = vpop.f32.mrb[0].mxu0
    %v3542 = vadd.f32 0.0, %v3541
    %3543 = vmatprep.mubr.f32.mxu0 0.0
    %3544 = vmatmul.mubr.f32.gmra.mrb[0].mxu0 %v3450
    %v3545 = vpop.f32.mrb[0].mxu0
    %v3546 = vadd.f32 0.0, %v3545
    %v3547 = vpop.f32.mrb[0].mxu0
    %v3548 = vadd.f32 0.0, %v3547
    %3549 = vmatprep.mubr.f32.mxu0 0.0
    %3550 = vmatmul.mubr.f32.gmra.mrb[0].mxu0 %v3453
    %v3551 = vpop.f32.mrb[0].mxu0
    %v3552 = vadd.f32 0.0, %v3551
    %v3553 = vpop.f32.mrb[0].mxu0
    %v3554 = vadd.f32 0.0, %v3553
    %3555 = vdwg.mxu0
    %v3556 = vld [vmem:[#allocation15] sm:$0xff]
    %v3557 = vld [vmem:[#allocation15 + $0x8] sm:$0xff]
    %v3558 = vld [vmem:[#allocation15 + $0x10] sm:$0xff]
    %v3559 = vld [vmem:[#allocation15 + $0x18] sm:$0xff]
    %v3560 = vld [vmem:[#allocation15 + $0x20] sm:$0xff]
    %v3561 = vld [vmem:[#allocation15 + $0x28] sm:$0xff]
    %v3562 = vld [vmem:[#allocation15 + $0x30] sm:$0xff]
    %v3563 = vld [vmem:[#allocation15 + $0x38] sm:$0xff]
    %v3564 = vld [vmem:[#allocation15 + $0x40] sm:$0xff]
    %v3565 = vld [vmem:[#allocation15 + $0x48] sm:$0xff]
    %v3566 = vld [vmem:[#allocation15 + $0x50] sm:$0xff]
    %v3567 = vld [vmem:[#allocation15 + $0x58] sm:$0xff]
    %v3568 = vld [vmem:[#allocation15 + $0x60] sm:$0xff]
    %v3569 = vld [vmem:[#allocation15 + $0x68] sm:$0xff]
    %v3570 = vld [vmem:[#allocation15 + $0x70] sm:$0xff]
    %v3571 = vld [vmem:[#allocation15 + $0x78] sm:$0xff]
    %v3572 = vld [vmem:[#allocation15 + $0x80] sm:$0xff]
    %v3573 = vld [vmem:[#allocation15 + $0x88] sm:$0xff]
    %v3574 = vld [vmem:[#allocation15 + $0x90] sm:$0xff]
    %v3575 = vld [vmem:[#allocation15 + $0x98] sm:$0xff]
    %v3576 = vld [vmem:[#allocation15 + $0xa0] sm:$0xff]
    %v3577 = vld [vmem:[#allocation15 + $0xa8] sm:$0xff]
    %v3578 = vld [vmem:[#allocation15 + $0xb0] sm:$0xff]
    %v3579 = vld [vmem:[#allocation15 + $0xb8] sm:$0xff]
    %v3580 = vld [vmem:[#allocation15 + $0xc0] sm:$0xff]
    %v3581 = vld [vmem:[#allocation15 + $0xc8] sm:$0xff]
    %v3582 = vld [vmem:[#allocation15 + $0xd0] sm:$0xff]
    %v3583 = vld [vmem:[#allocation15 + $0xd8] sm:$0xff]
    %v3584 = vld [vmem:[#allocation15 + $0xe0] sm:$0xff]
    %v3585 = vld [vmem:[#allocation15 + $0xe8] sm:$0xff]
    %v3586 = vld [vmem:[#allocation15 + $0xf0] sm:$0xff]
    %v3587 = vld [vmem:[#allocation15 + $0xf8] sm:$0xff]
    %v3588 = vld [vmem:[#allocation15 + $0x100] sm:$0xff]
    %v3589 = vld [vmem:[#allocation15 + $0x108] sm:$0xff]
    %v3590 = vld [vmem:[#allocation15 + $0x110] sm:$0xff]
    %v3591 = vld [vmem:[#allocation15 + $0x118] sm:$0xff]
    %v3592 = vld [vmem:[#allocation15 + $0x120] sm:$0xff]
    %v3593 = vld [vmem:[#allocation15 + $0x128] sm:$0xff]
    %v3594 = vld [vmem:[#allocation15 + $0x130] sm:$0xff]
    %v3595 = vld [vmem:[#allocation15 + $0x138] sm:$0xff]
    %v3596 = vld [vmem:[#allocation15 + $0x140] sm:$0xff]
    %v3597 = vld [vmem:[#allocation15 + $0x148] sm:$0xff]
    %v3598 = vld [vmem:[#allocation15 + $0x150] sm:$0xff]
    %v3599 = vld [vmem:[#allocation15 + $0x158] sm:$0xff]
    %v3600 = vld [vmem:[#allocation15 + $0x160] sm:$0xff]
    %v3601 = vld [vmem:[#allocation15 + $0x168] sm:$0xff]
    %v3602 = vld [vmem:[#allocation15 + $0x170] sm:$0xff]
    %v3603 = vld [vmem:[#allocation15 + $0x178] sm:$0xff]
    %v3604 = vld [vmem:[#allocation15 + $0x180] sm:$0xff]
    %v3605 = vld [vmem:[#allocation15 + $0x188] sm:$0xff]
    %v3606 = vld [vmem:[#allocation15 + $0x190] sm:$0xff]
    %v3607 = vld [vmem:[#allocation15 + $0x198] sm:$0xff]
    %v3608 = vld [vmem:[#allocation15 + $0x1a0] sm:$0xff]
    %v3609 = vld [vmem:[#allocation15 + $0x1a8] sm:$0xff]
    %v3610 = vld [vmem:[#allocation15 + $0x1b0] sm:$0xff]
    %v3611 = vld [vmem:[#allocation15 + $0x1b8] sm:$0xff]
    %v3612 = vld [vmem:[#allocation15 + $0x1c0] sm:$0xff]
    %v3613 = vld [vmem:[#allocation15 + $0x1c8] sm:$0xff]
    %v3614 = vld [vmem:[#allocation15 + $0x1d0] sm:$0xff]
    %v3615 = vld [vmem:[#allocation15 + $0x1d8] sm:$0xff]
    %v3616 = vld [vmem:[#allocation15 + $0x1e0] sm:$0xff]
    %v3617 = vld [vmem:[#allocation15 + $0x1e8] sm:$0xff]
    %v3618 = vld [vmem:[#allocation15 + $0x1f0] sm:$0xff]
    %v3619 = vld [vmem:[#allocation15 + $0x1f8] sm:$0xff]
    %s3620 = scalar_lea.vmem [#allocation15], 512
    %v3621 = vld [vmem:[%s3620] sm:$0xff]
    %v3622 = vld [vmem:[%s3620 + $0x8] sm:$0xff]
    %v3623 = vld [vmem:[%s3620 + $0x10] sm:$0xff]
    %v3624 = vld [vmem:[%s3620 + $0x18] sm:$0xff]
    %v3625 = vld [vmem:[%s3620 + $0x20] sm:$0xff]
    %v3626 = vld [vmem:[%s3620 + $0x28] sm:$0xff]
    %v3627 = vld [vmem:[%s3620 + $0x30] sm:$0xff]
    %v3628 = vld [vmem:[%s3620 + $0x38] sm:$0xff]
    %v3629 = vld [vmem:[%s3620 + $0x40] sm:$0xff]
    %v3630 = vld [vmem:[%s3620 + $0x48] sm:$0xff]
    %v3631 = vld [vmem:[%s3620 + $0x50] sm:$0xff]
    %v3632 = vld [vmem:[%s3620 + $0x58] sm:$0xff]
    %v3633 = vld [vmem:[%s3620 + $0x60] sm:$0xff]
    %v3634 = vld [vmem:[%s3620 + $0x68] sm:$0xff]
    %v3635 = vld [vmem:[%s3620 + $0x70] sm:$0xff]
    %v3636 = vld [vmem:[%s3620 + $0x78] sm:$0xff]
    %v3637 = vld [vmem:[%s3620 + $0x80] sm:$0xff]
    %v3638 = vld [vmem:[%s3620 + $0x88] sm:$0xff]
    %v3639 = vld [vmem:[%s3620 + $0x90] sm:$0xff]
    %v3640 = vld [vmem:[%s3620 + $0x98] sm:$0xff]
    %v3641 = vld [vmem:[%s3620 + $0xa0] sm:$0xff]
    %v3642 = vld [vmem:[%s3620 + $0xa8] sm:$0xff]
    %v3643 = vld [vmem:[%s3620 + $0xb0] sm:$0xff]
    %v3644 = vld [vmem:[%s3620 + $0xb8] sm:$0xff]
    %v3645 = vld [vmem:[%s3620 + $0xc0] sm:$0xff]
    %v3646 = vld [vmem:[%s3620 + $0xc8] sm:$0xff]
    %v3647 = vld [vmem:[%s3620 + $0xd0] sm:$0xff]
    %v3648 = vld [vmem:[%s3620 + $0xd8] sm:$0xff]
    %v3649 = vld [vmem:[%s3620 + $0xe0] sm:$0xff]
    %v3650 = vld [vmem:[%s3620 + $0xe8] sm:$0xff]
    %v3651 = vld [vmem:[%s3620 + $0xf0] sm:$0xff]
    %v3652 = vld [vmem:[%s3620 + $0xf8] sm:$0xff]
    %v3653 = vld [vmem:[%s3620 + $0x100] sm:$0xff]
    %v3654 = vld [vmem:[%s3620 + $0x108] sm:$0xff]
    %v3655 = vld [vmem:[%s3620 + $0x110] sm:$0xff]
    %v3656 = vld [vmem:[%s3620 + $0x118] sm:$0xff]
    %v3657 = vld [vmem:[%s3620 + $0x120] sm:$0xff]
    %v3658 = vld [vmem:[%s3620 + $0x128] sm:$0xff]
    %v3659 = vld [vmem:[%s3620 + $0x130] sm:$0xff]
    %v3660 = vld [vmem:[%s3620 + $0x138] sm:$0xff]
    %v3661 = vld [vmem:[%s3620 + $0x140] sm:$0xff]
    %v3662 = vld [vmem:[%s3620 + $0x148] sm:$0xff]
    %v3663 = vld [vmem:[%s3620 + $0x150] sm:$0xff]
    %v3664 = vld [vmem:[%s3620 + $0x158] sm:$0xff]
    %v3665 = vld [vmem:[%s3620 + $0x160] sm:$0xff]
    %v3666 = vld [vmem:[%s3620 + $0x168] sm:$0xff]
    %v3667 = vld [vmem:[%s3620 + $0x170] sm:$0xff]
    %v3668 = vld [vmem:[%s3620 + $0x178] sm:$0xff]
    %v3669 = vld [vmem:[%s3620 + $0x180] sm:$0xff]
    %v3670 = vld [vmem:[%s3620 + $0x188] sm:$0xff]
    %v3671 = vld [vmem:[%s3620 + $0x190] sm:$0xff]
    %v3672 = vld [vmem:[%s3620 + $0x198] sm:$0xff]
    %v3673 = vld [vmem:[%s3620 + $0x1a0] sm:$0xff]
    %v3674 = vld [vmem:[%s3620 + $0x1a8] sm:$0xff]
    %v3675 = vld [vmem:[%s3620 + $0x1b0] sm:$0xff]
    %v3676 = vld [vmem:[%s3620 + $0x1b8] sm:$0xff]
    %v3677 = vld [vmem:[%s3620 + $0x1c0] sm:$0xff]
    %v3678 = vld [vmem:[%s3620 + $0x1c8] sm:$0xff]
    %v3679 = vld [vmem:[%s3620 + $0x1d0] sm:$0xff]
    %v3680 = vld [vmem:[%s3620 + $0x1d8] sm:$0xff]
    %v3681 = vld [vmem:[%s3620 + $0x1e0] sm:$0xff]
    %v3682 = vld [vmem:[%s3620 + $0x1e8] sm:$0xff]
    %v3683 = vld [vmem:[%s3620 + $0x1f0] sm:$0xff]
    %v3684 = vld [vmem:[%s3620 + $0x1f8] sm:$0xff]
    %3685 = vmatprep.subr.mxu0 %v3622
    %3686 = vmatpush1.msra.mxu0 %v3621
    %3687 = vmatprep.subr.mxu0 %v3624
    %3688 = vmatpush1.msra.mxu0 %v3623
    %3689 = vmatprep.subr.mxu0 %v3626
    %3690 = vmatpush1.msra.mxu0 %v3625
    %3691 = vmatprep.subr.mxu0 %v3628
    %3692 = vmatpush1.msra.mxu0 %v3627
    %3693 = vmatprep.subr.mxu0 %v3630
    %3694 = vmatpush1.msra.mxu0 %v3629
    %3695 = vmatprep.subr.mxu0 %v3632
    %3696 = vmatpush1.msra.mxu0 %v3631
    %3697 = vmatprep.subr.mxu0 %v3634
    %3698 = vmatpush1.msra.mxu0 %v3633
    %3699 = vmatprep.subr.mxu0 %v3636
    %3700 = vmatpush1.msra.mxu0 %v3635
    %3701 = vmatprep.subr.mxu0 %v3638
    %3702 = vmatpush1.msra.mxu0 %v3637
    %3703 = vmatprep.subr.mxu0 %v3640
    %3704 = vmatpush1.msra.mxu0 %v3639
    %3705 = vmatprep.subr.mxu0 %v3642
    %3706 = vmatpush1.msra.mxu0 %v3641
    %3707 = vmatprep.subr.mxu0 %v3644
    %3708 = vmatpush1.msra.mxu0 %v3643
    %3709 = vmatprep.subr.mxu0 %v3646
    %3710 = vmatpush1.msra.mxu0 %v3645
    %3711 = vmatprep.subr.mxu0 %v3648
    %3712 = vmatpush1.msra.mxu0 %v3647
    %3713 = vmatprep.subr.mxu0 %v3650
    %3714 = vmatpush1.msra.mxu0 %v3649
    %3715 = vmatprep.subr.mxu0 %v3652
    %3716 = vmatpush1.msra.mxu0 %v3651
    %3717 = vmatprep.subr.mxu0 %v3654
    %3718 = vmatpush1.msra.mxu0 %v3653
    %3719 = vmatprep.subr.mxu0 %v3656
    %3720 = vmatpush1.msra.mxu0 %v3655
    %3721 = vmatprep.subr.mxu0 %v3658
    %3722 = vmatpush1.msra.mxu0 %v3657
    %3723 = vmatprep.subr.mxu0 %v3660
    %3724 = vmatpush1.msra.mxu0 %v3659
    %3725 = vmatprep.subr.mxu0 %v3662
    %3726 = vmatpush1.msra.mxu0 %v3661
    %3727 = vmatprep.subr.mxu0 %v3664
    %3728 = vmatpush1.msra.mxu0 %v3663
    %3729 = vmatprep.subr.mxu0 %v3666
    %3730 = vmatpush1.msra.mxu0 %v3665
    %3731 = vmatprep.subr.mxu0 %v3668
    %3732 = vmatpush1.msra.mxu0 %v3667
    %3733 = vmatprep.subr.mxu0 %v3670
    %3734 = vmatpush1.msra.mxu0 %v3669
    %3735 = vmatprep.subr.mxu0 %v3672
    %3736 = vmatpush1.msra.mxu0 %v3671
    %3737 = vmatprep.subr.mxu0 %v3674
    %3738 = vmatpush1.msra.mxu0 %v3673
    %3739 = vmatprep.subr.mxu0 %v3676
    %3740 = vmatpush1.msra.mxu0 %v3675
    %3741 = vmatprep.subr.mxu0 %v3678
    %3742 = vmatpush1.msra.mxu0 %v3677
    %3743 = vmatprep.subr.mxu0 %v3680
    %3744 = vmatpush1.msra.mxu0 %v3679
    %3745 = vmatprep.subr.mxu0 %v3682
    %3746 = vmatpush1.msra.mxu0 %v3681
    %3747 = vmatprep.subr.mxu0 %v3684
    %3748 = vmatpush1.msra.mxu0 %v3683
    %3749 = vmatprep.mubr.f32.mxu0 %v3536
    %3750 = vmatmul.mubr.f32.gmra.mrb[0].mxu0 %v3534
    %v3751 = vpop.f32.mrb[0].mxu0
    %v3752 = vadd.f32 0.0, %v3751
    %v3753 = vpop.f32.mrb[0].mxu0
    %v3754 = vadd.f32 0.0, %v3753
    %3755 = vmatprep.mubr.f32.mxu0 %v3542
    %3756 = vmatmul.mubr.f32.gmra.mrb[0].mxu0 %v3540
    %v3757 = vpop.f32.mrb[0].mxu0
    %v3758 = vadd.f32 0.0, %v3757
    %v3759 = vpop.f32.mrb[0].mxu0
    %v3760 = vadd.f32 0.0, %v3759
    %3761 = vdwg.mxu0
    %3762 = vmatprep.subr.mxu0 %v3557
    %3763 = vmatpush1.msra.mxu0 %v3556
    %3764 = vmatprep.subr.mxu0 %v3559
    %3765 = vmatpush1.msra.mxu0 %v3558
    %3766 = vmatprep.subr.mxu0 %v3561
    %3767 = vmatpush1.msra.mxu0 %v3560
    %3768 = vmatprep.subr.mxu0 %v3563
    %3769 = vmatpush1.msra.mxu0 %v3562
    %3770 = vmatprep.subr.mxu0 %v3565
    %3771 = vmatpush1.msra.mxu0 %v3564
    %3772 = vmatprep.subr.mxu0 %v3567
    %3773 = vmatpush1.msra.mxu0 %v3566
    %3774 = vmatprep.subr.mxu0 %v3569
    %3775 = vmatpush1.msra.mxu0 %v3568
    %3776 = vmatprep.subr.mxu0 %v3571
    %3777 = vmatpush1.msra.mxu0 %v3570
    %3778 = vmatprep.subr.mxu0 %v3573
    %3779 = vmatpush1.msra.mxu0 %v3572
    %3780 = vmatprep.subr.mxu0 %v3575
    %3781 = vmatpush1.msra.mxu0 %v3574
    %3782 = vmatprep.subr.mxu0 %v3577
    %3783 = vmatpush1.msra.mxu0 %v3576
    %3784 = vmatprep.subr.mxu0 %v3579
    %3785 = vmatpush1.msra.mxu0 %v3578
    %3786 = vmatprep.subr.mxu0 %v3581
    %3787 = vmatpush1.msra.mxu0 %v3580
    %3788 = vmatprep.subr.mxu0 %v3583
    %3789 = vmatpush1.msra.mxu0 %v3582
    %3790 = vmatprep.subr.mxu0 %v3585
    %3791 = vmatpush1.msra.mxu0 %v3584
    %3792 = vmatprep.subr.mxu0 %v3587
    %3793 = vmatpush1.msra.mxu0 %v3586
    %3794 = vmatprep.subr.mxu0 %v3589
    %3795 = vmatpush1.msra.mxu0 %v3588
    %3796 = vmatprep.subr.mxu0 %v3591
    %3797 = vmatpush1.msra.mxu0 %v3590
    %3798 = vmatprep.subr.mxu0 %v3593
    %3799 = vmatpush1.msra.mxu0 %v3592
    %3800 = vmatprep.subr.mxu0 %v3595
    %3801 = vmatpush1.msra.mxu0 %v3594
    %3802 = vmatprep.subr.mxu0 %v3597
    %3803 = vmatpush1.msra.mxu0 %v3596
    %3804 = vmatprep.subr.mxu0 %v3599
    %3805 = vmatpush1.msra.mxu0 %v3598
    %3806 = vmatprep.subr.mxu0 %v3601
    %3807 = vmatpush1.msra.mxu0 %v3600
    %3808 = vmatprep.subr.mxu0 %v3603
    %3809 = vmatpush1.msra.mxu0 %v3602
    %3810 = vmatprep.subr.mxu0 %v3605
    %3811 = vmatpush1.msra.mxu0 %v3604
    %3812 = vmatprep.subr.mxu0 %v3607
    %3813 = vmatpush1.msra.mxu0 %v3606
    %3814 = vmatprep.subr.mxu0 %v3609
    %3815 = vmatpush1.msra.mxu0 %v3608
    %3816 = vmatprep.subr.mxu0 %v3611
    %3817 = vmatpush1.msra.mxu0 %v3610
    %3818 = vmatprep.subr.mxu0 %v3613
    %3819 = vmatpush1.msra.mxu0 %v3612
    %3820 = vmatprep.subr.mxu0 %v3615
    %3821 = vmatpush1.msra.mxu0 %v3614
    %3822 = vmatprep.subr.mxu0 %v3617
    %3823 = vmatpush1.msra.mxu0 %v3616
    %3824 = vmatprep.subr.mxu0 %v3619
    %3825 = vmatpush1.msra.mxu0 %v3618
    %3826 = vmatprep.mubr.f32.mxu0 %v3524
    %3827 = vmatmul.mubr.f32.gmra.mrb[0].mxu0 %v3522
    %v3828 = vpop.f32.mrb[0].mxu0
    %v3829 = vadd.f32 %v3752, %v3828
    %v3830 = vpop.f32.mrb[0].mxu0
    %v3831 = vadd.f32 %v3754, %v3830
    %3832 = vmatprep.mubr.f32.mxu0 %v3530
    %3833 = vmatmul.mubr.f32.gmra.mrb[0].mxu0 %v3528
    %v3834 = vpop.f32.mrb[0].mxu0
    %v3835 = vadd.f32 %v3758, %v3834
    %v3836 = vpop.f32.mrb[0].mxu0
    %v3837 = vadd.f32 %v3760, %v3836
    %3838 = vdwg.mxu0
    %s3839 = scalar_lea.vmem [#allocation15], 1024
    %v3840 = vld [vmem:[%s3839] sm:$0xff]
    %v3841 = vld [vmem:[%s3839 + $0x8] sm:$0xff]
    %v3842 = vld [vmem:[%s3839 + $0x10] sm:$0xff]
    %v3843 = vld [vmem:[%s3839 + $0x18] sm:$0xff]
    %v3844 = vld [vmem:[%s3839 + $0x20] sm:$0xff]
    %v3845 = vld [vmem:[%s3839 + $0x28] sm:$0xff]
    %v3846 = vld [vmem:[%s3839 + $0x30] sm:$0xff]
    %v3847 = vld [vmem:[%s3839 + $0x38] sm:$0xff]
    %v3848 = vld [vmem:[%s3839 + $0x40] sm:$0xff]
    %v3849 = vld [vmem:[%s3839 + $0x48] sm:$0xff]
    %v3850 = vld [vmem:[%s3839 + $0x50] sm:$0xff]
    %v3851 = vld [vmem:[%s3839 + $0x58] sm:$0xff]
    %v3852 = vld [vmem:[%s3839 + $0x60] sm:$0xff]
    %v3853 = vld [vmem:[%s3839 + $0x68] sm:$0xff]
    %v3854 = vld [vmem:[%s3839 + $0x70] sm:$0xff]
    %v3855 = vld [vmem:[%s3839 + $0x78] sm:$0xff]
    %v3856 = vld [vmem:[%s3839 + $0x80] sm:$0xff]
    %v3857 = vld [vmem:[%s3839 + $0x88] sm:$0xff]
    %v3858 = vld [vmem:[%s3839 + $0x90] sm:$0xff]
    %v3859 = vld [vmem:[%s3839 + $0x98] sm:$0xff]
    %v3860 = vld [vmem:[%s3839 + $0xa0] sm:$0xff]
    %v3861 = vld [vmem:[%s3839 + $0xa8] sm:$0xff]
    %v3862 = vld [vmem:[%s3839 + $0xb0] sm:$0xff]
    %v3863 = vld [vmem:[%s3839 + $0xb8] sm:$0xff]
    %v3864 = vld [vmem:[%s3839 + $0xc0] sm:$0xff]
    %v3865 = vld [vmem:[%s3839 + $0xc8] sm:$0xff]
    %v3866 = vld [vmem:[%s3839 + $0xd0] sm:$0xff]
    %v3867 = vld [vmem:[%s3839 + $0xd8] sm:$0xff]
    %v3868 = vld [vmem:[%s3839 + $0xe0] sm:$0xff]
    %v3869 = vld [vmem:[%s3839 + $0xe8] sm:$0xff]
    %v3870 = vld [vmem:[%s3839 + $0xf0] sm:$0xff]
    %v3871 = vld [vmem:[%s3839 + $0xf8] sm:$0xff]
    %v3872 = vld [vmem:[%s3839 + $0x100] sm:$0xff]
    %v3873 = vld [vmem:[%s3839 + $0x108] sm:$0xff]
    %v3874 = vld [vmem:[%s3839 + $0x110] sm:$0xff]
    %v3875 = vld [vmem:[%s3839 + $0x118] sm:$0xff]
    %v3876 = vld [vmem:[%s3839 + $0x120] sm:$0xff]
    %v3877 = vld [vmem:[%s3839 + $0x128] sm:$0xff]
    %v3878 = vld [vmem:[%s3839 + $0x130] sm:$0xff]
    %v3879 = vld [vmem:[%s3839 + $0x138] sm:$0xff]
    %v3880 = vld [vmem:[%s3839 + $0x140] sm:$0xff]
    %v3881 = vld [vmem:[%s3839 + $0x148] sm:$0xff]
    %v3882 = vld [vmem:[%s3839 + $0x150] sm:$0xff]
    %v3883 = vld [vmem:[%s3839 + $0x158] sm:$0xff]
    %v3884 = vld [vmem:[%s3839 + $0x160] sm:$0xff]
    %v3885 = vld [vmem:[%s3839 + $0x168] sm:$0xff]
    %v3886 = vld [vmem:[%s3839 + $0x170] sm:$0xff]
    %v3887 = vld [vmem:[%s3839 + $0x178] sm:$0xff]
    %v3888 = vld [vmem:[%s3839 + $0x180] sm:$0xff]
    %v3889 = vld [vmem:[%s3839 + $0x188] sm:$0xff]
    %v3890 = vld [vmem:[%s3839 + $0x190] sm:$0xff]
    %v3891 = vld [vmem:[%s3839 + $0x198] sm:$0xff]
    %v3892 = vld [vmem:[%s3839 + $0x1a0] sm:$0xff]
    %v3893 = vld [vmem:[%s3839 + $0x1a8] sm:$0xff]
    %v3894 = vld [vmem:[%s3839 + $0x1b0] sm:$0xff]
    %v3895 = vld [vmem:[%s3839 + $0x1b8] sm:$0xff]
    %v3896 = vld [vmem:[%s3839 + $0x1c0] sm:$0xff]
    %v3897 = vld [vmem:[%s3839 + $0x1c8] sm:$0xff]
    %v3898 = vld [vmem:[%s3839 + $0x1d0] sm:$0xff]
    %v3899 = vld [vmem:[%s3839 + $0x1d8] sm:$0xff]
    %v3900 = vld [vmem:[%s3839 + $0x1e0] sm:$0xff]
    %v3901 = vld [vmem:[%s3839 + $0x1e8] sm:$0xff]
    %v3902 = vld [vmem:[%s3839 + $0x1f0] sm:$0xff]
    %v3903 = vld [vmem:[%s3839 + $0x1f8] sm:$0xff]
    %3904 = vmatprep.subr.mxu0 %v3841
    %3905 = vmatpush1.msra.mxu0 %v3840
    %3906 = vmatprep.subr.mxu0 %v3843
    %3907 = vmatpush1.msra.mxu0 %v3842
    %3908 = vmatprep.subr.mxu0 %v3845
    %3909 = vmatpush1.msra.mxu0 %v3844
    %3910 = vmatprep.subr.mxu0 %v3847
    %3911 = vmatpush1.msra.mxu0 %v3846
    %3912 = vmatprep.subr.mxu0 %v3849
    %3913 = vmatpush1.msra.mxu0 %v3848
    %3914 = vmatprep.subr.mxu0 %v3851
    %3915 = vmatpush1.msra.mxu0 %v3850
    %3916 = vmatprep.subr.mxu0 %v3853
    %3917 = vmatpush1.msra.mxu0 %v3852
    %3918 = vmatprep.subr.mxu0 %v3855
    %3919 = vmatpush1.msra.mxu0 %v3854
    %3920 = vmatprep.subr.mxu0 %v3857
    %3921 = vmatpush1.msra.mxu0 %v3856
    %3922 = vmatprep.subr.mxu0 %v3859
    %3923 = vmatpush1.msra.mxu0 %v3858
    %3924 = vmatprep.subr.mxu0 %v3861
    %3925 = vmatpush1.msra.mxu0 %v3860
    %3926 = vmatprep.subr.mxu0 %v3863
    %3927 = vmatpush1.msra.mxu0 %v3862
    %3928 = vmatprep.subr.mxu0 %v3865
    %3929 = vmatpush1.msra.mxu0 %v3864
    %3930 = vmatprep.subr.mxu0 %v3867
    %3931 = vmatpush1.msra.mxu0 %v3866
    %3932 = vmatprep.subr.mxu0 %v3869
    %3933 = vmatpush1.msra.mxu0 %v3868
    %3934 = vmatprep.subr.mxu0 %v3871
    %3935 = vmatpush1.msra.mxu0 %v3870
    %3936 = vmatprep.subr.mxu0 %v3873
    %3937 = vmatpush1.msra.mxu0 %v3872
    %3938 = vmatprep.subr.mxu0 %v3875
    %3939 = vmatpush1.msra.mxu0 %v3874
    %3940 = vmatprep.subr.mxu0 %v3877
    %3941 = vmatpush1.msra.mxu0 %v3876
    %3942 = vmatprep.subr.mxu0 %v3879
    %3943 = vmatpush1.msra.mxu0 %v3878
    %3944 = vmatprep.subr.mxu0 %v3881
    %3945 = vmatpush1.msra.mxu0 %v3880
    %3946 = vmatprep.subr.mxu0 %v3883
    %3947 = vmatpush1.msra.mxu0 %v3882
    %3948 = vmatprep.subr.mxu0 %v3885
    %3949 = vmatpush1.msra.mxu0 %v3884
    %3950 = vmatprep.subr.mxu0 %v3887
    %3951 = vmatpush1.msra.mxu0 %v3886
    %3952 = vmatprep.subr.mxu0 %v3889
    %3953 = vmatpush1.msra.mxu0 %v3888
    %3954 = vmatprep.subr.mxu0 %v3891
    %3955 = vmatpush1.msra.mxu0 %v3890
    %3956 = vmatprep.subr.mxu0 %v3893
    %3957 = vmatpush1.msra.mxu0 %v3892
    %3958 = vmatprep.subr.mxu0 %v3895
    %3959 = vmatpush1.msra.mxu0 %v3894
    %3960 = vmatprep.subr.mxu0 %v3897
    %3961 = vmatpush1.msra.mxu0 %v3896
    %3962 = vmatprep.subr.mxu0 %v3899
    %3963 = vmatpush1.msra.mxu0 %v3898
    %3964 = vmatprep.subr.mxu0 %v3901
    %3965 = vmatpush1.msra.mxu0 %v3900
    %3966 = vmatprep.subr.mxu0 %v3903
    %3967 = vmatpush1.msra.mxu0 %v3902
    %3968 = vmatprep.mubr.f32.mxu0 %v3548
    %3969 = vmatmul.mubr.f32.gmra.mrb[0].mxu0 %v3546
    %v3970 = vpop.f32.mrb[0].mxu0
    %v3971 = vadd.f32 0.0, %v3970
    %v3972 = vpop.f32.mrb[0].mxu0
    %v3973 = vadd.f32 0.0, %v3972
    %3974 = vmatprep.mubr.f32.mxu0 %v3554
    %3975 = vmatmul.mubr.f32.gmra.mrb[0].mxu0 %v3552
    %v3976 = vpop.f32.mrb[0].mxu0
    %v3977 = vadd.f32 0.0, %v3976
    %v3978 = vpop.f32.mrb[0].mxu0
    %v3979 = vadd.f32 0.0, %v3978
    %3980 = vdwg.mxu0
    %v3981 = vadd.f32 %v3829, %v3971
    %v3982 = vadd.f32 %v3831, %v3973
    %v3983 = vadd.f32 %v3835, %v3977
    %v3984 = vadd.f32 %v3837, %v3979
    %v3985 = vld [vmem:[#allocation16] sm:$0x3]
    %v3987 = vlaneseq
    %v3988 = vshrl.u32 %v3987, 7
    %v3989 = vsub.s32 0, %v3988
    %v3990 = vrot.slane %v3985, %v3989
    %v3991 = vlaneseq
    %v3992 = vshrl.u32 %v3991, 7
    %v3993 = vsub.s32 1, %v3992
    %v3994 = vrot.slane %v3985, %v3993
    %v3997 = vadd.f32 %v3981, %v3990
    %v3998 = vadd.f32 %v3982, %v3994
    %v3999 = vadd.f32 %v3983, %v3990
    %v4000 = vadd.f32 %v3984, %v3994
    %v4001 = vld [vmem:[%s14] sm:$0xff]
    %v4002 = vld [vmem:[%s14 + $0x8] sm:$0xff]
    %vm4003 = vcmask 130048
    %v4005 = vsel %vm4003, %v4001, 0
    %v4008 = vsel %vm4003, %v4002, 0
    %4010 = vmatprep.subr.mxu0 %v3998
    %4011 = vmatpush1.msra.mxu0 %v3997
    %4012 = vmatprep.subr.mxu0 %v4000
    %4013 = vmatpush1.msra.mxu0 %v3999
    %4014 = vmatprep.subr.mxu0 0.0
    %4015 = vmatpush1.msra.mxu0 0.0
    %4016 = vmatprep.subr.mxu0 0.0
    %4017 = vmatpush1.msra.mxu0 0.0
    %4018 = vmatprep.subr.mxu0 0.0
    %4019 = vmatpush1.msra.mxu0 0.0
    %4020 = vmatprep.subr.mxu0 0.0
    %4021 = vmatpush1.msra.mxu0 0.0
    %4022 = vmatprep.subr.mxu0 0.0
    %4023 = vmatpush1.msra.mxu0 0.0
    %4024 = vmatprep.subr.mxu0 0.0
    %4025 = vmatpush1.msra.mxu0 0.0
    %4026 = vmatprep.subr.mxu0 0.0
    %4027 = vmatpush1.msra.mxu0 0.0
    %4028 = vmatprep.subr.mxu0 0.0
    %4029 = vmatpush1.msra.mxu0 0.0
    %4030 = vmatprep.subr.mxu0 0.0
    %4031 = vmatpush1.msra.mxu0 0.0
    %4032 = vmatprep.subr.mxu0 0.0
    %4033 = vmatpush1.msra.mxu0 0.0
    %4034 = vmatprep.subr.mxu0 0.0
    %4035 = vmatpush1.msra.mxu0 0.0
    %4036 = vmatprep.subr.mxu0 0.0
    %4037 = vmatpush1.msra.mxu0 0.0
    %4038 = vmatprep.subr.mxu0 0.0
    %4039 = vmatpush1.msra.mxu0 0.0
    %4040 = vmatprep.subr.mxu0 0.0
    %4041 = vmatpush1.msra.mxu0 0.0
    %4042 = vmatprep.subr.mxu0 0.0
    %4043 = vmatpush1.msra.mxu0 0.0
    %4044 = vmatprep.subr.mxu0 0.0
    %4045 = vmatpush1.msra.mxu0 0.0
    %4046 = vmatprep.subr.mxu0 0.0
    %4047 = vmatpush1.msra.mxu0 0.0
    %4048 = vmatprep.subr.mxu0 0.0
    %4049 = vmatpush1.msra.mxu0 0.0
    %4050 = vmatprep.subr.mxu0 0.0
    %4051 = vmatpush1.msra.mxu0 0.0
    %4052 = vmatprep.subr.mxu0 0.0
    %4053 = vmatpush1.msra.mxu0 0.0
    %4054 = vmatprep.subr.mxu0 0.0
    %4055 = vmatpush1.msra.mxu0 0.0
    %4056 = vmatprep.subr.mxu0 0.0
    %4057 = vmatpush1.msra.mxu0 0.0
    %4058 = vmatprep.subr.mxu0 0.0
    %4059 = vmatpush1.msra.mxu0 0.0
    %4060 = vmatprep.subr.mxu0 0.0
    %4061 = vmatpush1.msra.mxu0 0.0
    %4062 = vmatprep.subr.mxu0 0.0
    %4063 = vmatpush1.msra.mxu0 0.0
    %4064 = vmatprep.subr.mxu0 0.0
    %4065 = vmatpush1.msra.mxu0 0.0
    %4066 = vmatprep.subr.mxu0 0.0
    %4067 = vmatpush1.msra.mxu0 0.0
    %4068 = vmatprep.subr.mxu0 0.0
    %4069 = vmatpush1.msra.mxu0 0.0
    %4070 = vmatprep.subr.mxu0 0.0
    %4071 = vmatpush1.msra.mxu0 0.0
    %4072 = vmatprep.subr.mxu0 0.0
    %4073 = vmatpush1.msra.mxu0 0.0
    %4074 = vmatprep.mubr.f32.mxu0 0.0
    %4075 = vmatmul.mubr.f32.gmra.mrb[0].mxu0 %v4005
    %v4076 = vpop.f32.mrb[0].mxu0
    %v4077 = vadd.f32 0.0, %v4076
    %v4078 = vpop.f32.mrb[0].mxu0
    %v4079 = vadd.f32 0.0, %v4078
    %4080 = vmatprep.mubr.f32.mxu0 0.0
    %4081 = vmatmul.mubr.f32.gmra.mrb[0].mxu0 %v4008
    %v4082 = vpop.f32.mrb[0].mxu0
    %v4083 = vadd.f32 0.0, %v4082
    %v4084 = vpop.f32.mrb[0].mxu0
    %v4085 = vadd.f32 0.0, %v4084
    %4086 = vdwg.mxu0
    %v4087 = vld [vmem:[#allocation18] sm:$0xff]
    %v4088 = vld [vmem:[#allocation18 + $0x8] sm:$0xff]
    %v4089 = vld [vmem:[#allocation18 + $0x10] sm:$0xff]
    %v4090 = vld [vmem:[#allocation18 + $0x18] sm:$0xff]
    %v4091 = vld [vmem:[#allocation18 + $0x20] sm:$0xff]
    %v4092 = vld [vmem:[#allocation18 + $0x28] sm:$0xff]
    %v4093 = vld [vmem:[#allocation18 + $0x30] sm:$0xff]
    %v4094 = vld [vmem:[#allocation18 + $0x38] sm:$0xff]
    %v4095 = vld [vmem:[#allocation18 + $0x40] sm:$0xff]
    %v4096 = vld [vmem:[#allocation18 + $0x48] sm:$0xff]
    %v4097 = vld [vmem:[#allocation18 + $0x50] sm:$0xff]
    %v4098 = vld [vmem:[#allocation18 + $0x58] sm:$0xff]
    %v4099 = vld [vmem:[#allocation18 + $0x60] sm:$0xff]
    %v4100 = vld [vmem:[#allocation18 + $0x68] sm:$0xff]
    %v4101 = vld [vmem:[#allocation18 + $0x70] sm:$0xff]
    %v4102 = vld [vmem:[#allocation18 + $0x78] sm:$0xff]
    %v4103 = vld [vmem:[#allocation18 + $0x80] sm:$0xff]
    %v4104 = vld [vmem:[#allocation18 + $0x88] sm:$0xff]
    %v4105 = vld [vmem:[#allocation18 + $0x90] sm:$0xff]
    %v4106 = vld [vmem:[#allocation18 + $0x98] sm:$0xff]
    %v4107 = vld [vmem:[#allocation18 + $0xa0] sm:$0xff]
    %v4108 = vld [vmem:[#allocation18 + $0xa8] sm:$0xff]
    %v4109 = vld [vmem:[#allocation18 + $0xb0] sm:$0xff]
    %v4110 = vld [vmem:[#allocation18 + $0xb8] sm:$0xff]
    %v4111 = vld [vmem:[#allocation18 + $0xc0] sm:$0xff]
    %v4112 = vld [vmem:[#allocation18 + $0xc8] sm:$0xff]
    %v4113 = vld [vmem:[#allocation18 + $0xd0] sm:$0xff]
    %v4114 = vld [vmem:[#allocation18 + $0xd8] sm:$0xff]
    %v4115 = vld [vmem:[#allocation18 + $0xe0] sm:$0xff]
    %v4116 = vld [vmem:[#allocation18 + $0xe8] sm:$0xff]
    %v4117 = vld [vmem:[#allocation18 + $0xf0] sm:$0xff]
    %v4118 = vld [vmem:[#allocation18 + $0xf8] sm:$0xff]
    %s4119 = scalar_lea.vmem [#allocation18], 256
    %v4120 = vld [vmem:[%s4119] sm:$0xff]
    %v4121 = vld [vmem:[%s4119 + $0x8] sm:$0xff]
    %v4122 = vld [vmem:[%s4119 + $0x10] sm:$0xff]
    %v4123 = vld [vmem:[%s4119 + $0x18] sm:$0xff]
    %v4124 = vld [vmem:[%s4119 + $0x20] sm:$0xff]
    %v4125 = vld [vmem:[%s4119 + $0x28] sm:$0xff]
    %v4126 = vld [vmem:[%s4119 + $0x30] sm:$0xff]
    %v4127 = vld [vmem:[%s4119 + $0x38] sm:$0xff]
    %v4128 = vld [vmem:[%s4119 + $0x40] sm:$0xff]
    %v4129 = vld [vmem:[%s4119 + $0x48] sm:$0xff]
    %v4130 = vld [vmem:[%s4119 + $0x50] sm:$0xff]
    %v4131 = vld [vmem:[%s4119 + $0x58] sm:$0xff]
    %v4132 = vld [vmem:[%s4119 + $0x60] sm:$0xff]
    %v4133 = vld [vmem:[%s4119 + $0x68] sm:$0xff]
    %v4134 = vld [vmem:[%s4119 + $0x70] sm:$0xff]
    %v4135 = vld [vmem:[%s4119 + $0x78] sm:$0xff]
    %v4136 = vld [vmem:[%s4119 + $0x80] sm:$0xff]
    %v4137 = vld [vmem:[%s4119 + $0x88] sm:$0xff]
    %v4138 = vld [vmem:[%s4119 + $0x90] sm:$0xff]
    %v4139 = vld [vmem:[%s4119 + $0x98] sm:$0xff]
    %v4140 = vld [vmem:[%s4119 + $0xa0] sm:$0xff]
    %v4141 = vld [vmem:[%s4119 + $0xa8] sm:$0xff]
    %v4142 = vld [vmem:[%s4119 + $0xb0] sm:$0xff]
    %v4143 = vld [vmem:[%s4119 + $0xb8] sm:$0xff]
    %v4144 = vld [vmem:[%s4119 + $0xc0] sm:$0xff]
    %v4145 = vld [vmem:[%s4119 + $0xc8] sm:$0xff]
    %v4146 = vld [vmem:[%s4119 + $0xd0] sm:$0xff]
    %v4147 = vld [vmem:[%s4119 + $0xd8] sm:$0xff]
    %v4148 = vld [vmem:[%s4119 + $0xe0] sm:$0xff]
    %v4149 = vld [vmem:[%s4119 + $0xe8] sm:$0xff]
    %v4150 = vld [vmem:[%s4119 + $0xf0] sm:$0xff]
    %v4151 = vld [vmem:[%s4119 + $0xf8] sm:$0xff]
    %4152 = vmatprep.subr.mxu0 0.0
    %4153 = vmatpush1.msra.mxu0 %v4120
    %4154 = vmatprep.subr.mxu0 0.0
    %4155 = vmatpush1.msra.mxu0 %v4121
    %4156 = vmatprep.subr.mxu0 0.0
    %4157 = vmatpush1.msra.mxu0 %v4122
    %4158 = vmatprep.subr.mxu0 0.0
    %4159 = vmatpush1.msra.mxu0 %v4123
    %4160 = vmatprep.subr.mxu0 0.0
    %4161 = vmatpush1.msra.mxu0 %v4124
    %4162 = vmatprep.subr.mxu0 0.0
    %4163 = vmatpush1.msra.mxu0 %v4125
    %4164 = vmatprep.subr.mxu0 0.0
    %4165 = vmatpush1.msra.mxu0 %v4126
    %4166 = vmatprep.subr.mxu0 0.0
    %4167 = vmatpush1.msra.mxu0 %v4127
    %4168 = vmatprep.subr.mxu0 0.0
    %4169 = vmatpush1.msra.mxu0 %v4128
    %4170 = vmatprep.subr.mxu0 0.0
    %4171 = vmatpush1.msra.mxu0 %v4129
    %4172 = vmatprep.subr.mxu0 0.0
    %4173 = vmatpush1.msra.mxu0 %v4130
    %4174 = vmatprep.subr.mxu0 0.0
    %4175 = vmatpush1.msra.mxu0 %v4131
    %4176 = vmatprep.subr.mxu0 0.0
    %4177 = vmatpush1.msra.mxu0 %v4132
    %4178 = vmatprep.subr.mxu0 0.0
    %4179 = vmatpush1.msra.mxu0 %v4133
    %4180 = vmatprep.subr.mxu0 0.0
    %4181 = vmatpush1.msra.mxu0 %v4134
    %4182 = vmatprep.subr.mxu0 0.0
    %4183 = vmatpush1.msra.mxu0 %v4135
    %4184 = vmatprep.subr.mxu0 0.0
    %4185 = vmatpush1.msra.mxu0 %v4136
    %4186 = vmatprep.subr.mxu0 0.0
    %4187 = vmatpush1.msra.mxu0 %v4137
    %4188 = vmatprep.subr.mxu0 0.0
    %4189 = vmatpush1.msra.mxu0 %v4138
    %4190 = vmatprep.subr.mxu0 0.0
    %4191 = vmatpush1.msra.mxu0 %v4139
    %4192 = vmatprep.subr.mxu0 0.0
    %4193 = vmatpush1.msra.mxu0 %v4140
    %4194 = vmatprep.subr.mxu0 0.0
    %4195 = vmatpush1.msra.mxu0 %v4141
    %4196 = vmatprep.subr.mxu0 0.0
    %4197 = vmatpush1.msra.mxu0 %v4142
    %4198 = vmatprep.subr.mxu0 0.0
    %4199 = vmatpush1.msra.mxu0 %v4143
    %4200 = vmatprep.subr.mxu0 0.0
    %4201 = vmatpush1.msra.mxu0 %v4144
    %4202 = vmatprep.subr.mxu0 0.0
    %4203 = vmatpush1.msra.mxu0 %v4145
    %4204 = vmatprep.subr.mxu0 0.0
    %4205 = vmatpush1.msra.mxu0 %v4146
    %4206 = vmatprep.subr.mxu0 0.0
    %4207 = vmatpush1.msra.mxu0 %v4147
    %4208 = vmatprep.subr.mxu0 0.0
    %4209 = vmatpush1.msra.mxu0 %v4148
    %4210 = vmatprep.subr.mxu0 0.0
    %4211 = vmatpush1.msra.mxu0 %v4149
    %4212 = vmatprep.subr.mxu0 0.0
    %4213 = vmatpush1.msra.mxu0 %v4150
    %4214 = vmatprep.subr.mxu0 0.0
    %4215 = vmatpush1.msra.mxu0 %v4151
    %4216 = vmatprep.mubr.f32.mxu0 %v4085
    %4217 = vmatmul.mubr.f32.gmra.mrb[0].mxu0 %v4083
    %v4218 = vpop.f32.mrb[0].mxu0
    %v4219 = vadd.f32 0.0, %v4218
    %v4220 = vpop.f32.mrb[0].mxu0
    %4221 = vdwg.mxu0
    %4222 = vmatprep.subr.mxu0 0.0
    %4223 = vmatpush1.msra.mxu0 %v4087
    %4224 = vmatprep.subr.mxu0 0.0
    %4225 = vmatpush1.msra.mxu0 %v4088
    %4226 = vmatprep.subr.mxu0 0.0
    %4227 = vmatpush1.msra.mxu0 %v4089
    %4228 = vmatprep.subr.mxu0 0.0
    %4229 = vmatpush1.msra.mxu0 %v4090
    %4230 = vmatprep.subr.mxu0 0.0
    %4231 = vmatpush1.msra.mxu0 %v4091
    %4232 = vmatprep.subr.mxu0 0.0
    %4233 = vmatpush1.msra.mxu0 %v4092
    %4234 = vmatprep.subr.mxu0 0.0
    %4235 = vmatpush1.msra.mxu0 %v4093
    %4236 = vmatprep.subr.mxu0 0.0
    %4237 = vmatpush1.msra.mxu0 %v4094
    %4238 = vmatprep.subr.mxu0 0.0
    %4239 = vmatpush1.msra.mxu0 %v4095
    %4240 = vmatprep.subr.mxu0 0.0
    %4241 = vmatpush1.msra.mxu0 %v4096
    %4242 = vmatprep.subr.mxu0 0.0
    %4243 = vmatpush1.msra.mxu0 %v4097
    %4244 = vmatprep.subr.mxu0 0.0
    %4245 = vmatpush1.msra.mxu0 %v4098
    %4246 = vmatprep.subr.mxu0 0.0
    %4247 = vmatpush1.msra.mxu0 %v4099
    %4248 = vmatprep.subr.mxu0 0.0
    %4249 = vmatpush1.msra.mxu0 %v4100
    %4250 = vmatprep.subr.mxu0 0.0
    %4251 = vmatpush1.msra.mxu0 %v4101
    %4252 = vmatprep.subr.mxu0 0.0
    %4253 = vmatpush1.msra.mxu0 %v4102
    %4254 = vmatprep.subr.mxu0 0.0
    %4255 = vmatpush1.msra.mxu0 %v4103
    %4256 = vmatprep.subr.mxu0 0.0
    %4257 = vmatpush1.msra.mxu0 %v4104
    %4258 = vmatprep.subr.mxu0 0.0
    %4259 = vmatpush1.msra.mxu0 %v4105
    %4260 = vmatprep.subr.mxu0 0.0
    %4261 = vmatpush1.msra.mxu0 %v4106
    %4262 = vmatprep.subr.mxu0 0.0
    %4263 = vmatpush1.msra.mxu0 %v4107
    %4264 = vmatprep.subr.mxu0 0.0
    %4265 = vmatpush1.msra.mxu0 %v4108
    %4266 = vmatprep.subr.mxu0 0.0
    %4267 = vmatpush1.msra.mxu0 %v4109
    %4268 = vmatprep.subr.mxu0 0.0
    %4269 = vmatpush1.msra.mxu0 %v4110
    %4270 = vmatprep.subr.mxu0 0.0
    %4271 = vmatpush1.msra.mxu0 %v4111
    %4272 = vmatprep.subr.mxu0 0.0
    %4273 = vmatpush1.msra.mxu0 %v4112
    %4274 = vmatprep.subr.mxu0 0.0
    %4275 = vmatpush1.msra.mxu0 %v4113
    %4276 = vmatprep.subr.mxu0 0.0
    %4277 = vmatpush1.msra.mxu0 %v4114
    %4278 = vmatprep.subr.mxu0 0.0
    %4279 = vmatpush1.msra.mxu0 %v4115
    %4280 = vmatprep.subr.mxu0 0.0
    %4281 = vmatpush1.msra.mxu0 %v4116
    %4282 = vmatprep.subr.mxu0 0.0
    %4283 = vmatpush1.msra.mxu0 %v4117
    %4284 = vmatprep.subr.mxu0 0.0
    %4285 = vmatpush1.msra.mxu0 %v4118
    %4286 = vmatprep.mubr.f32.mxu0 %v4079
    %4287 = vmatmul.mubr.f32.gmra.mrb[0].mxu0 %v4077
    %v4288 = vpop.f32.mrb[0].mxu0
    %v4289 = vadd.f32 %v4219, %v4288
    %v4290 = vpop.f32.mrb[0].mxu0
    %4291 = vdwg.mxu0
    %v4292 = vld [vmem:[%s16] sm:$0x1]
    %v4294 = vlaneseq
    %v4295 = vshrl.u32 %v4294, 7
    %v4296 = vsub.s32 0, %v4295
    %v4297 = vrot.slane %v4292, %v4296
    %v4299 = vadd.f32 %v4289, %v4297
    %4300 = vst [vmem:[%s17] sm:$0xff] %v4299
    // Predicated region
    $region114: #{net_simple_conv_norm_1x.1} parent=1 // pred_check
      _
    $region115: #{net_simple_conv_norm_1x.1} parent=1 // pred_check_branch
      %4302 = sbr.rel (0) target = $region117
    $region116: #{net_simple_conv_norm_1x.1} parent=1 // pred_region
      _
    $region117: #{net_simple_conv_norm_1x.1} parent=1 // pred_fallthru
      _
    // Predicated region
    $region118: #{net_simple_conv_norm_1x.1} parent=1 // pred_check
      _
    $region119: #{net_simple_conv_norm_1x.1} parent=1 // pred_check_branch
      %4304 = sbr.rel (0) target = $region121
    $region120: #{net_simple_conv_norm_1x.1} parent=1 // pred_region
      _
    $region121: #{net_simple_conv_norm_1x.1} parent=1 // pred_fallthru
      _
    %4305 = vsyncpa [#allocation3], 1
    %4306 = vsyncpa [#allocation5], 1
    %4307 = vsyncpa [#allocation8], 1
    %4308 = vsyncpa [#allocation11], 1
    %4309 = vsyncpa [#allocation14], 1
    %4310 = vsyncpa [#allocation17], 1

</llo_original>
